<compile_context>
chip_gen: v7x
topology: tpu7x:2x2x1
jax: 0.10.0
libtpu: 0.0.40
codegen_flags: <defaults>
</compile_context>

<pallas_src>
import functools
import math

import jax
import jax.numpy as jnp
from jax.experimental import pallas as pl
from jax.experimental.pallas import tpu as pltpu

LN_EPS = 1e-5


def _round_up(x, m):
    return ((x + m - 1) // m) * m


def _layer_norm(x, gamma, beta):
    mean = jnp.mean(x, axis=-1, keepdims=True)
    var = jnp.mean((x - mean) ** 2, axis=-1, keepdims=True)
    return (x - mean) * jax.lax.rsqrt(var + LN_EPS) * gamma + beta


# ----------------------------------------------------------------------------
# Pallas kernel: all transformer encoder layers fused into one pallas_call
# ----------------------------------------------------------------------------
def encoder_kernel(x_ref, wqkv_ref, wo_ref, w1_ref, w2_ref, slab_ref, o_ref,
                   *, num_heads, seq_valid, seq_pad, hidden, ffn, resident):
    """Grid = (batch tile b, layer l).

    o_ref is the layer-carried activation buffer: its block index is constant
    along the layer axis, so it stays VMEM-resident across all L layers and is
    written back to HBM exactly once per batch tile (no extra scratch buffer,
    no duplicated per-layer stores).  When `resident`, weights use a constant
    index_map with full-(L,...) blocks, so they are DMA'd to VMEM once for the
    whole kernel and indexed with the layer id here.
    """
    l = pl.program_id(1)
    S, H, F, nh = seq_pad, hidden, ffn, num_heads
    hd = H // nh
    scale = 1.0 / math.sqrt(hd)
    bf16 = jnp.bfloat16

    @pl.when(l == 0)
    def _():
        o_ref[...] = x_ref[...]            # load activations once per batch tile

    x2 = o_ref[...]                        # (R, H) f32, R = Bt * S
    R = x2.shape[0]
    Bt = R // S

    # Per-layer parameters: dynamic first-axis index into the resident slab,
    # or the single streamed per-layer block (leading dim 1) otherwise.
    wl = l if resident else 0
    wqkv = wqkv_ref[wl]                    # (H, 3H) bf16
    wo = wo_ref[wl]                        # (H, H)  bf16
    w1 = w1_ref[wl]                        # (H, F)  bf16
    w2 = w2_ref[wl]                        # (F, H)  bf16
    slab = slab_ref[wl]                    # (8, Wpad) f32 packed bias/LN vectors
    bqkv = slab[0:1, :3 * H]
    b1 = slab[1:2, :F]
    bo = slab[2:3, :H]
    g1 = slab[3:4, :H]
    be1 = slab[4:5, :H]
    b2 = slab[5:6, :H]
    g2 = slab[6:7, :H]
    be2 = slab[7:8, :H]

    # ---- fused QKV projection: one MXU pass, bf16 in, f32 accumulation ------
    qkv = jnp.dot(x2.astype(bf16), wqkv, preferred_element_type=jnp.float32) + bqkv
    qkv3 = qkv.astype(bf16).reshape(Bt, S, 3 * H)

    # TODO(synk): the per-head lane slices + concats below still materialize a
    # few small relayout copies; a 4-D 'bqhd,bkhd->bhqk' einsum would remove
    # them but multi-batch-dim dot_general does not lower on Mosaic, so the
    # proven 3-D (heads stacked on the leading axis) einsum form is kept.
    def split_heads(off):
        return jnp.concatenate(
            [qkv3[:, :, off + h * hd: off + (h + 1) * hd] for h in range(nh)],
            axis=0)                                            # (nh*Bt, S, hd)

    qh = split_heads(0)
    kh = split_heads(H)
    vh = split_heads(2 * H)

    # ---- attention: batched (head x batch) einsum pair, f32 softmax ---------
    s = jnp.einsum('nqd,nkd->nqk', qh, kh,
                   preferred_element_type=jnp.float32) * scale
    if seq_valid < S:                      # static: mask padded key columns
        key_ids = jax.lax.broadcasted_iota(jnp.int32, s.shape, 2)
        s = jnp.where(key_ids < seq_valid, s, -1e30)
    s = s - jnp.max(s, axis=-1, keepdims=True)
    p = jnp.exp(s)
    # Exact divide (not approx reciprocal): plenty of EUP/VPU slack and it
    # keeps closer parity with the f32 reference.
    p = p / jnp.sum(p, axis=-1, keepdims=True)
    oh = jnp.einsum('nqk,nkd->nqd', p.astype(bf16), vh,
                    preferred_element_type=jnp.float32)        # (nh*Bt, S, hd)

    attn = jnp.concatenate([oh[h * Bt:(h + 1) * Bt] for h in range(nh)],
                           axis=-1).reshape(R, H)
    attn = jnp.dot(attn.astype(bf16), wo, preferred_element_type=jnp.float32) + bo

    # residual + post-LayerNorm (f32)
    h1 = _layer_norm(x2 + attn, g1, be1)

    # ---- FFN -----------------------------------------------------------------
    f = jnp.dot(h1.astype(bf16), w1, preferred_element_type=jnp.float32) + b1
    f = jnp.maximum(f, 0.0)
    f = jnp.dot(f.astype(bf16), w2, preferred_element_type=jnp.float32) + b2

    # Layer carry (VMEM store).  HBM writeback happens automatically when the
    # batch-tile block index changes, i.e. once per batch tile.
    o_ref[...] = _layer_norm(h1 + f, g2, be2)


# ----------------------------------------------------------------------------
# Wrapper: parameter packing + pallas_call
# ----------------------------------------------------------------------------
def _stack_layer_params(convs):
    """Stack per-layer params on a leading L axis; fuse QKV; pack all 1-row
    bias / LayerNorm vectors of a layer into one (8, Wpad) slab so the kernel
    sees a single small vector operand per layer."""
    H = convs[0]["wq"].shape[0]
    F = convs[0]["w1"].shape[1]
    Wpad = _round_up(max(3 * H, F), 128)
    bf16 = jnp.bfloat16

    def row(v):
        return jnp.pad(v, ((0, 0), (0, Wpad - v.shape[-1])))

    wqkv = jnp.stack([jnp.concatenate([p["wq"], p["wk"], p["wv"]], axis=1)
                      for p in convs]).astype(bf16)             # (L, H, 3H)
    wo = jnp.stack([p["wo"] for p in convs]).astype(bf16)       # (L, H, H)
    w1 = jnp.stack([p["w1"] for p in convs]).astype(bf16)       # (L, H, F)
    w2 = jnp.stack([p["w2"] for p in convs]).astype(bf16)       # (L, F, H)
    slab = jnp.stack([jnp.concatenate(
        [row(jnp.concatenate([p["bq"], p["bk"], p["bv"]], axis=1)),
         row(p["b1"]), row(p["bo"]), row(p["g1"]), row(p["be1"]),
         row(p["b2"]), row(p["g2"]), row(p["be2"])], axis=0)
        for p in convs])                                        # (L, 8, Wpad) f32
    return wqkv, wo, w1, w2, slab


def tab_transformer_encoder(x, stacked, num_heads):
    """All L encoder layers in one pallas_call.  x: (B, S, H) float32."""
    B, S, H = x.shape
    wqkv, wo, w1, w2, slab = stacked
    L = wqkv.shape[0]
    F = w1.shape[-1]

    # Pad the column (sequence) axis to full sublane tiles and the batch axis
    # to the batch tile.  Bt*S_pad = 512 rows per grid step fills v6e's
    # 2x256x256 MXU M dim and amortizes the ~0.35us/step grid overhead
    # (v5e's 128x128 MXU is already full well below that).
    S_pad = _round_up(S, 8)
    block_b = min(64, _round_up(B, 8))
    B_pad = _round_up(B, block_b)
    if S_pad != S or B_pad != B:
        x = jnp.pad(x, ((0, B_pad - B), (0, S_pad - S), (0, 0)))
    nb = B_pad // block_b
    R_blk = block_b * S_pad

    # Activations live in HBM as a 2-D (rows, H) slab; each grid step owns
    # R_blk consecutive rows, so the block is also the natural compute layout
    # (no per-layer reshapes inside the kernel).
    x2d = x.reshape(B_pad * S_pad, H)

    # --- VMEM budget: keep ALL layers' weights resident when they fit --------
    weight_bytes = 2 * (wqkv.size + wo.size + w1.size + w2.size) + 4 * slab.size
    act_block_bytes = R_blk * H * 4
    resident = weight_bytes <= (40 << 20)      # leave headroom on v7x (64 MiB)

    a_map = lambda b, l: (b, 0)                # constant along the layer axis
    if resident:
        # Full-(L,...) blocks + constant index_map: one weight DMA total.
        w_specs = [
            pl.BlockSpec(wqkv.shape, lambda b, l: (0, 0, 0)),
            pl.BlockSpec(wo.shape, lambda b, l: (0, 0, 0)),
            pl.BlockSpec(w1.shape, lambda b, l: (0, 0, 0)),
            pl.BlockSpec(w2.shape, lambda b, l: (0, 0, 0)),
            pl.BlockSpec(slab.shape, lambda b, l: (0, 0, 0)),
        ]
        weight_vmem = weight_bytes
    else:
        # Stream one layer's weights per step; triple-buffer so the next
        # layer's weight DMA hides behind the short per-layer compute.
        def stream(shape):
            return pl.BlockSpec((1,) + tuple(shape[1:]), lambda b, l: (l, 0, 0),
                                pipeline_mode=pl.Buffered(3))
        w_specs = [stream(wqkv.shape), stream(wo.shape), stream(w1.shape),
                   stream(w2.shape), stream(slab.shape)]
        weight_vmem = 3 * (weight_bytes // L)

    # Explicit VMEM limit: resident weights + double-buffered in/out activation
    # blocks + headroom for in-body temporaries; clamped under v7x's 64 MiB.
    vmem_needed = weight_vmem + 4 * act_block_bytes + (8 << 20)
    vmem_limit = int(min(60 << 20, max(vmem_needed, 32 << 20)))

    out2d = pl.pallas_call(
        functools.partial(encoder_kernel, num_heads=num_heads, seq_valid=S,
                          seq_pad=S_pad, hidden=H, ffn=F, resident=resident),
        out_shape=jax.ShapeDtypeStruct((B_pad * S_pad, H), jnp.float32),
        grid=(nb, L),
        in_specs=[pl.BlockSpec((R_blk, H), a_map)] + w_specs,
        out_specs=pl.BlockSpec((R_blk, H), a_map),
        compiler_params=pltpu.CompilerParams(
            dimension_semantics=("parallel", "arbitrary"),
            vmem_limit_bytes=vmem_limit),
    )(x2d, wqkv, wo, w1, w2, slab)

    return out2d.reshape(B_pad, S_pad, H)[:B, :S, :]


# ----------------------------------------------------------------------------
# Full model: pre-encoder glue + fused Pallas encoder + plain-XLA head
# ----------------------------------------------------------------------------
@functools.partial(jax.jit, static_argnums=(3,))
def tab_transformer_forward(x_cat, x_num, params, num_heads):
    n_cat = x_cat.shape[1]
    # pre-encoder (conv[0]): categorical embedding lookup, per-column numerical linear
    cat = params["cat_emb"][jnp.arange(n_cat)[None, :], x_cat]              # (B, n_cat, H)
    num = x_num[..., None] * params["num_w"][None] + params["num_b"][None]  # (B, n_num, H)

    stacked = _stack_layer_params(params["convs"])
    cat = tab_transformer_encoder(cat, stacked, num_heads)

    x = jnp.concatenate([cat, num], axis=1)                                 # (B, n_cat+n_num, H)
    # mean-pool + final Linear kept in plain XLA (too small to justify a kernel).
    return jnp.mean(x, axis=1) @ params["fc_w"] + params["fc_b"]


# ----------------------------------------------------------------------------
# Pure-JAX f32 reference (for correctness check)
# ----------------------------------------------------------------------------
def _ref_block(x, p, num_heads):
    B, S, H = x.shape
    hd = H // num_heads
    q = x @ p["wq"] + p["bq"]
    k = x @ p["wk"] + p["bk"]
    v = x @ p["wv"] + p["bv"]
    q = q.reshape(B, S, num_heads, hd).transpose(0, 2, 1, 3)
    k = k.reshape(B, S, num_heads, hd).transpose(0, 2, 1, 3)
    v = v.reshape(B, S, num_heads, hd).transpose(0, 2, 1, 3)
    s = (q @ k.transpose(0, 1, 3, 2)) / math.sqrt(hd)
    a = jax.nn.softmax(s, axis=-1) @ v
    a = a.transpose(0, 2, 1, 3).reshape(B, S, H)
    a = a @ p["wo"] + p["bo"]
    x = _layer_norm(x + a, p["g1"], p["be1"])
    f = jnp.maximum(x @ p["w1"] + p["b1"], 0.0) @ p["w2"] + p["b2"]
    return _layer_norm(x + f, p["g2"], p["be2"])


def reference_forward(x_cat, x_num, params, num_heads):
    n_cat = x_cat.shape[1]
    cat = params["cat_emb"][jnp.arange(n_cat)[None, :], x_cat]
    num = x_num[..., None] * params["num_w"][None] + params["num_b"][None]
    for lp in params["convs"]:
        cat = _ref_block(cat, lp, num_heads)
    x = jnp.concatenate([cat, num], axis=1)
    return jnp.mean(x, axis=1) @ params["fc_w"] + params["fc_b"]


# ----------------------------------------------------------------------------
# Deterministic parameter init
# ----------------------------------------------------------------------------
def init_params(key, *, n_cat, n_num, vocab, hidden, ffn, out_dim, num_layers):
    ks = jax.random.split(key, 4 + num_layers)

    def lin(kk, i, o):
        return jax.random.normal(kk, (i, o), jnp.float32) / math.sqrt(i)

    params = {
        "cat_emb": 0.02 * jax.random.normal(ks[0], (n_cat, vocab, hidden), jnp.float32),
        "num_w": 0.02 * jax.random.normal(ks[1], (n_num, hidden), jnp.float32),
        "num_b": 0.01 * jax.random.normal(ks[2], (n_num, hidden), jnp.float32),
        "fc_w": lin(ks[3], hidden, out_dim),
        "fc_b": jnp.zeros((1, out_dim), jnp.float32),
        "convs": [],
    }
    for l in range(num_layers):
        lk = jax.random.split(ks[4 + l], 8)
        layer = {
            "wq": lin(lk[0], hidden, hidden), "bq": jnp.zeros((1, hidden), jnp.float32),
            "wk": lin(lk[1], hidden, hidden), "bk": jnp.zeros((1, hidden), jnp.float32),
            "wv": lin(lk[2], hidden, hidden), "bv": jnp.zeros((1, hidden), jnp.float32),
            "wo": lin(lk[3], hidden, hidden), "bo": 0.01 * jax.random.normal(lk[4], (1, hidden), jnp.float32),
            "g1": jnp.ones((1, hidden), jnp.float32), "be1": jnp.zeros((1, hidden), jnp.float32),
            "w1": lin(lk[5], hidden, ffn), "b1": 0.01 * jax.random.normal(lk[6], (1, ffn), jnp.float32),
            "w2": lin(lk[7], ffn, hidden), "b2": jnp.zeros((1, hidden), jnp.float32),
            "g2": jnp.ones((1, hidden), jnp.float32), "be2": jnp.zeros((1, hidden), jnp.float32),
        }
        params["convs"].append(layer)
    return params


# ----------------------------------------------------------------------------
if __name__ == "__main__":
    B, n_cat, n_num = 2, 5, 3
    vocab, hidden, ffn, out_dim = 10, 32, 64, 4
    num_layers, num_heads = 2, 4

    key = jax.random.PRNGKey(0)
    k_cat, k_num, k_par = jax.random.split(key, 3)

    x_cat = jax.random.randint(k_cat, (B, n_cat), 0, vocab, dtype=jnp.int32)
    x_num = jax.random.normal(k_num, (B, n_num), jnp.float32)
    params = init_params(k_par, n_cat=n_cat, n_num=n_num, vocab=vocab,
                         hidden=hidden, ffn=ffn, out_dim=out_dim,
                         num_layers=num_layers)

    out = tab_transformer_forward(x_cat, x_num, params, num_heads)
    out = jax.block_until_ready(out)

    ref = jax.block_until_ready(reference_forward(x_cat, x_num, params, num_heads))
    assert out.shape == (B, out_dim)
    # bf16 MXU inputs -> loosened tolerance vs the pure-f32 reference.
    assert jnp.allclose(out, ref, atol=5e-2, rtol=5e-2), (out, ref)

    print("KERNEL_OK")
</pallas_src>

<mosaic_0001>
module attributes {stable_mosaic.version = 11 : i64} {
  func.func @encoder_kernel(%arg0: i32, %arg1: i32, %arg2: memref<64x32xf32, #tpu.memory_space<vmem>>, %arg3: memref<2x32x96xbf16, #tpu.memory_space<vmem>>, %arg4: memref<2x32x32xbf16, #tpu.memory_space<vmem>>, %arg5: memref<2x32x64xbf16, #tpu.memory_space<vmem>>, %arg6: memref<2x64x32xbf16, #tpu.memory_space<vmem>>, %arg7: memref<2x8x128xf32, #tpu.memory_space<vmem>>, %arg8: memref<64x32xf32, #tpu.memory_space<vmem>>) attributes {dimension_semantics = [#tpu.dimension_semantics<parallel>, #tpu.dimension_semantics<arbitrary>], iteration_bounds = array<i64: 1, 2>, scalar_prefetch = 0 : i64, scratch_operands = 0 : i64, tpu.core_type = #tpu.core_type<tc>, window_params = [{transform_indices = @transform_0, window_bounds = array<i64: 64, 32>}, {pipeline_mode = #tpu.pipeline_mode<synchronous>, transform_indices = @transform_1, window_bounds = array<i64: 2, 32, 96>}, {pipeline_mode = #tpu.pipeline_mode<synchronous>, transform_indices = @transform_2, window_bounds = array<i64: 2, 32, 32>}, {pipeline_mode = #tpu.pipeline_mode<synchronous>, transform_indices = @transform_3, window_bounds = array<i64: 2, 32, 64>}, {pipeline_mode = #tpu.pipeline_mode<synchronous>, transform_indices = @transform_4, window_bounds = array<i64: 2, 64, 32>}, {pipeline_mode = #tpu.pipeline_mode<synchronous>, transform_indices = @transform_5, window_bounds = array<i64: 2, 8, 128>}, {transform_indices = @transform_6, window_bounds = array<i64: 64, 32>}]} {
    %c0_i32 = arith.constant 0 : i32
    %0 = arith.cmpi eq, %arg1, %c0_i32 : i32
    %1 = arith.extui %0 : i1 to i32
    %c0_i32_0 = arith.constant 0 : i32
    %2 = arith.cmpi ne, %1, %c0_i32_0 : i32
    scf.if %2 {
      %c0_34 = arith.constant 0 : index
      %c0_35 = arith.constant 0 : index
      %134 = vector.load %arg2[%c0_34, %c0_35] : memref<64x32xf32, #tpu.memory_space<vmem>>, vector<64x32xf32>
      %c0_36 = arith.constant 0 : index
      %c0_37 = arith.constant 0 : index
      %135 = vector.load %arg8[%c0_36, %c0_37] : memref<64x32xf32, #tpu.memory_space<vmem>>, vector<64x32xf32>
      tpu.vector_store %arg8[%c0_36, %c0_37], %134 {strides = array<i32>} : memref<64x32xf32, #tpu.memory_space<vmem>>, vector<64x32xf32>,
    } else {
    }
    %c0 = arith.constant 0 : index
    %c0_1 = arith.constant 0 : index
    %3 = vector.load %arg8[%c0, %c0_1] : memref<64x32xf32, #tpu.memory_space<vmem>>, vector<64x32xf32>
    %4 = arith.index_cast %arg1 : i32 to index
    %c0_2 = arith.constant 0 : index
    %c0_3 = arith.constant 0 : index
    %5 = vector.load %arg3[%4, %c0_2, %c0_3] : memref<2x32x96xbf16, #tpu.memory_space<vmem>>, vector<1x32x96xbf16>
    %6 = vector.shape_cast %5 : vector<1x32x96xbf16> to vector<32x96xbf16>
    %7 = arith.index_cast %arg1 : i32 to index
    %c0_4 = arith.constant 0 : index
    %c0_5 = arith.constant 0 : index
    %8 = vector.load %arg4[%7, %c0_4, %c0_5] : memref<2x32x32xbf16, #tpu.memory_space<vmem>>, vector<1x32x32xbf16>
    %9 = vector.shape_cast %8 : vector<1x32x32xbf16> to vector<32x32xbf16>
    %10 = arith.index_cast %arg1 : i32 to index
    %c0_6 = arith.constant 0 : index
    %c0_7 = arith.constant 0 : index
    %11 = vector.load %arg5[%10, %c0_6, %c0_7] : memref<2x32x64xbf16, #tpu.memory_space<vmem>>, vector<1x32x64xbf16>
    %12 = vector.shape_cast %11 : vector<1x32x64xbf16> to vector<32x64xbf16>
    %13 = arith.index_cast %arg1 : i32 to index
    %c0_8 = arith.constant 0 : index
    %c0_9 = arith.constant 0 : index
    %14 = vector.load %arg6[%13, %c0_8, %c0_9] : memref<2x64x32xbf16, #tpu.memory_space<vmem>>, vector<1x64x32xbf16>
    %15 = vector.shape_cast %14 : vector<1x64x32xbf16> to vector<64x32xbf16>
    %16 = arith.index_cast %arg1 : i32 to index
    %c0_10 = arith.constant 0 : index
    %c0_11 = arith.constant 0 : index
    %17 = vector.load %arg7[%16, %c0_10, %c0_11] : memref<2x8x128xf32, #tpu.memory_space<vmem>>, vector<1x8x128xf32>
    %18 = vector.shape_cast %17 : vector<1x8x128xf32> to vector<8x128xf32>
    %19 = vector.extract_strided_slice %18 {offsets = [0, 0], sizes = [1, 96], strides = [1, 1]} : vector<8x128xf32> to vector<1x96xf32>
    %20 = vector.extract_strided_slice %18 {offsets = [1, 0], sizes = [1, 64], strides = [1, 1]} : vector<8x128xf32> to vector<1x64xf32>
    %21 = vector.extract_strided_slice %18 {offsets = [2, 0], sizes = [1, 32], strides = [1, 1]} : vector<8x128xf32> to vector<1x32xf32>
    %22 = vector.extract_strided_slice %18 {offsets = [3, 0], sizes = [1, 32], strides = [1, 1]} : vector<8x128xf32> to vector<1x32xf32>
    %23 = vector.extract_strided_slice %18 {offsets = [4, 0], sizes = [1, 32], strides = [1, 1]} : vector<8x128xf32> to vector<1x32xf32>
    %24 = vector.extract_strided_slice %18 {offsets = [5, 0], sizes = [1, 32], strides = [1, 1]} : vector<8x128xf32> to vector<1x32xf32>
    %25 = vector.extract_strided_slice %18 {offsets = [6, 0], sizes = [1, 32], strides = [1, 1]} : vector<8x128xf32> to vector<1x32xf32>
    %26 = vector.extract_strided_slice %18 {offsets = [7, 0], sizes = [1, 32], strides = [1, 1]} : vector<8x128xf32> to vector<1x32xf32>
    %27 = arith.truncf %3 : vector<64x32xf32> to vector<64x32xbf16>
    %cst = arith.constant dense<0.000000e+00> : vector<64x96xf32>
    %28 = tpu.matmul %27, %6, %cst {dimension_numbers = #tpu.dot_dimension_numbers<[1], [0], [0], [1], [0, 0, 1, 1], [], []>} : vector<64x32xbf16>, vector<32x96xbf16>, vector<64x96xf32> -> vector<64x96xf32>
    %29 = vector.broadcast %19 : vector<1x96xf32> to vector<64x96xf32>
    %30 = arith.addf %28, %29 : vector<64x96xf32>
    %31 = arith.truncf %30 : vector<64x96xf32> to vector<64x96xbf16>
    %32 = vector.shape_cast %31 : vector<64x96xbf16> to vector<8x8x96xbf16>
    %33 = vector.extract_strided_slice %32 {offsets = [0, 0, 0], sizes = [8, 8, 8], strides = [1, 1, 1]} : vector<8x8x96xbf16> to vector<8x8x8xbf16>
    %34 = vector.extract_strided_slice %32 {offsets = [0, 0, 8], sizes = [8, 8, 8], strides = [1, 1, 1]} : vector<8x8x96xbf16> to vector<8x8x8xbf16>
    %35 = vector.extract_strided_slice %32 {offsets = [0, 0, 16], sizes = [8, 8, 8], strides = [1, 1, 1]} : vector<8x8x96xbf16> to vector<8x8x8xbf16>
    %36 = vector.extract_strided_slice %32 {offsets = [0, 0, 24], sizes = [8, 8, 8], strides = [1, 1, 1]} : vector<8x8x96xbf16> to vector<8x8x8xbf16>
    %37 = tpu.concatenate %33, %34, %35, %36 in 0 : vector<8x8x8xbf16>, vector<8x8x8xbf16>, vector<8x8x8xbf16>, vector<8x8x8xbf16> -> vector<32x8x8xbf16>
    %38 = vector.extract_strided_slice %32 {offsets = [0, 0, 32], sizes = [8, 8, 8], strides = [1, 1, 1]} : vector<8x8x96xbf16> to vector<8x8x8xbf16>
    %39 = vector.extract_strided_slice %32 {offsets = [0, 0, 40], sizes = [8, 8, 8], strides = [1, 1, 1]} : vector<8x8x96xbf16> to vector<8x8x8xbf16>
    %40 = vector.extract_strided_slice %32 {offsets = [0, 0, 48], sizes = [8, 8, 8], strides = [1, 1, 1]} : vector<8x8x96xbf16> to vector<8x8x8xbf16>
    %41 = vector.extract_strided_slice %32 {offsets = [0, 0, 56], sizes = [8, 8, 8], strides = [1, 1, 1]} : vector<8x8x96xbf16> to vector<8x8x8xbf16>
    %42 = tpu.concatenate %38, %39, %40, %41 in 0 : vector<8x8x8xbf16>, vector<8x8x8xbf16>, vector<8x8x8xbf16>, vector<8x8x8xbf16> -> vector<32x8x8xbf16>
    %43 = vector.extract_strided_slice %32 {offsets = [0, 0, 64], sizes = [8, 8, 8], strides = [1, 1, 1]} : vector<8x8x96xbf16> to vector<8x8x8xbf16>
    %44 = vector.extract_strided_slice %32 {offsets = [0, 0, 72], sizes = [8, 8, 8], strides = [1, 1, 1]} : vector<8x8x96xbf16> to vector<8x8x8xbf16>
    %45 = vector.extract_strided_slice %32 {offsets = [0, 0, 80], sizes = [8, 8, 8], strides = [1, 1, 1]} : vector<8x8x96xbf16> to vector<8x8x8xbf16>
    %46 = vector.extract_strided_slice %32 {offsets = [0, 0, 88], sizes = [8, 8, 8], strides = [1, 1, 1]} : vector<8x8x96xbf16> to vector<8x8x8xbf16>
    %47 = tpu.concatenate %43, %44, %45, %46 in 0 : vector<8x8x8xbf16>, vector<8x8x8xbf16>, vector<8x8x8xbf16>, vector<8x8x8xbf16> -> vector<32x8x8xbf16>
    "tpu.trace_start"() <{level = 10 : i32, message = "nqd,nkd->nqk"}> : () -> ()
    %cst_12 = arith.constant dense<0.000000e+00> : vector<32x8x8xf32>
    %48 = tpu.matmul %37, %42, %cst_12 {dimension_numbers = #tpu.dot_dimension_numbers<[2], [2], [1], [1], [0, 0, 0, 1, 1, 1], [0], [0]>} : vector<32x8x8xbf16>, vector<32x8x8xbf16>, vector<32x8x8xf32> -> vector<32x8x8xf32>
    "tpu.trace_stop"() : () -> ()
    %cst_13 = arith.constant 0.353553385 : f32
    %49 = vector.broadcast %cst_13 : f32 to vector<32x8x8xf32>
    %50 = arith.mulf %48, %49 : vector<32x8x8xf32>
    %51 = tpu.iota {dimensions = array<i32: 2>} : vector<32x8x8xi32>
    %c5_i32 = arith.constant 5 : i32
    %52 = vector.broadcast %c5_i32 : i32 to vector<32x8x8xi32>
    %53 = arith.cmpi slt, %51, %52 : vector<32x8x8xi32>
    %cst_14 = arith.constant -1.000000e+30 : f32
    %54 = vector.broadcast %cst_14 : f32 to vector<32x8x8xf32>
    %55 = arith.select %53, %50, %54 : vector<32x8x8xi1>, vector<32x8x8xf32>
    %cst_15 = arith.constant dense<0xFF800000> : vector<32x8xf32>
    %56 = vector.multi_reduction <maximumf>, %55, %cst_15 [2] : vector<32x8x8xf32> to vector<32x8xf32>
    %57 = vector.shape_cast %56 : vector<32x8xf32> to vector<32x8x1xf32>
    %58 = vector.broadcast %57 : vector<32x8x1xf32> to vector<32x8x8xf32>
    %59 = arith.subf %55, %58 : vector<32x8x8xf32>
    %60 = math.exp %59 : vector<32x8x8xf32>
    %cst_16 = arith.constant dense<0.000000e+00> : vector<32x8xf32>
    %61 = vector.multi_reduction <add>, %60, %cst_16 [2] : vector<32x8x8xf32> to vector<32x8xf32>
    %62 = vector.shape_cast %61 : vector<32x8xf32> to vector<32x8x1xf32>
    %63 = vector.broadcast %62 : vector<32x8x1xf32> to vector<32x8x8xf32>
    %64 = arith.divf %60, %63 : vector<32x8x8xf32>
    %65 = arith.truncf %64 : vector<32x8x8xf32> to vector<32x8x8xbf16>
    "tpu.trace_start"() <{level = 10 : i32, message = "nqk,nkd->nqd"}> : () -> ()
    %cst_17 = arith.constant dense<0.000000e+00> : vector<32x8x8xf32>
    %66 = tpu.matmul %65, %47, %cst_17 {dimension_numbers = #tpu.dot_dimension_numbers<[2], [1], [1], [2], [0, 0, 0, 1, 1, 2], [0], [0]>} : vector<32x8x8xbf16>, vector<32x8x8xbf16>, vector<32x8x8xf32> -> vector<32x8x8xf32>
    "tpu.trace_stop"() : () -> ()
    %67 = vector.extract_strided_slice %66 {offsets = [0, 0, 0], sizes = [8, 8, 8], strides = [1, 1, 1]} : vector<32x8x8xf32> to vector<8x8x8xf32>
    %68 = vector.extract_strided_slice %66 {offsets = [8, 0, 0], sizes = [8, 8, 8], strides = [1, 1, 1]} : vector<32x8x8xf32> to vector<8x8x8xf32>
    %69 = vector.extract_strided_slice %66 {offsets = [16, 0, 0], sizes = [8, 8, 8], strides = [1, 1, 1]} : vector<32x8x8xf32> to vector<8x8x8xf32>
    %70 = vector.extract_strided_slice %66 {offsets = [24, 0, 0], sizes = [8, 8, 8], strides = [1, 1, 1]} : vector<32x8x8xf32> to vector<8x8x8xf32>
    %71 = tpu.concatenate %67, %68, %69, %70 in 2 : vector<8x8x8xf32>, vector<8x8x8xf32>, vector<8x8x8xf32>, vector<8x8x8xf32> -> vector<8x8x32xf32>
    %72 = vector.shape_cast %71 : vector<8x8x32xf32> to vector<64x32xf32>
    %73 = arith.truncf %72 : vector<64x32xf32> to vector<64x32xbf16>
    %cst_18 = arith.constant dense<0.000000e+00> : vector<64x32xf32>
    %74 = tpu.matmul %73, %9, %cst_18 {dimension_numbers = #tpu.dot_dimension_numbers<[1], [0], [0], [1], [0, 0, 1, 1], [], []>} : vector<64x32xbf16>, vector<32x32xbf16>, vector<64x32xf32> -> vector<64x32xf32>
    %75 = vector.broadcast %21 : vector<1x32xf32> to vector<64x32xf32>
    %76 = arith.addf %74, %75 : vector<64x32xf32>
    %77 = arith.addf %3, %76 : vector<64x32xf32>
    %cst_19 = arith.constant dense<0.000000e+00> : vector<64xf32>
    %78 = vector.multi_reduction <add>, %77, %cst_19 [1] : vector<64x32xf32> to vector<64xf32>
    %79 = vector.shape_cast %78 : vector<64xf32> to vector<64x1xf32>
    %cst_20 = arith.constant 3.200000e+01 : f32
    %80 = vector.broadcast %cst_20 : f32 to vector<64x1xf32>
    %81 = arith.divf %79, %80 : vector<64x1xf32>
    %82 = vector.broadcast %81 : vector<64x1xf32> to vector<64x32xf32>
    %83 = arith.subf %77, %82 : vector<64x32xf32>
    %84 = arith.mulf %83, %83 : vector<64x32xf32>
    %cst_21 = arith.constant dense<0.000000e+00> : vector<64xf32>
    %85 = vector.multi_reduction <add>, %84, %cst_21 [1] : vector<64x32xf32> to vector<64xf32>
    %86 = vector.shape_cast %85 : vector<64xf32> to vector<64x1xf32>
    %cst_22 = arith.constant 3.200000e+01 : f32
    %87 = vector.broadcast %cst_22 : f32 to vector<64x1xf32>
    %88 = arith.divf %86, %87 : vector<64x1xf32>
    %89 = vector.broadcast %81 : vector<64x1xf32> to vector<64x32xf32>
    %90 = arith.subf %77, %89 : vector<64x32xf32>
    %cst_23 = arith.constant 9.99999974E-6 : f32
    %91 = vector.broadcast %cst_23 : f32 to vector<64x1xf32>
    %92 = arith.addf %88, %91 : vector<64x1xf32>
    %93 = math.rsqrt %92 : vector<64x1xf32>
    %94 = vector.broadcast %93 : vector<64x1xf32> to vector<64x32xf32>
    %95 = arith.mulf %90, %94 : vector<64x32xf32>
    %96 = vector.broadcast %22 : vector<1x32xf32> to vector<64x32xf32>
    %97 = arith.mulf %95, %96 : vector<64x32xf32>
    %98 = vector.broadcast %23 : vector<1x32xf32> to vector<64x32xf32>
    %99 = arith.addf %97, %98 : vector<64x32xf32>
    %100 = arith.truncf %99 : vector<64x32xf32> to vector<64x32xbf16>
    %cst_24 = arith.constant dense<0.000000e+00> : vector<64x64xf32>
    %101 = tpu.matmul %100, %12, %cst_24 {dimension_numbers = #tpu.dot_dimension_numbers<[1], [0], [0], [1], [0, 0, 1, 1], [], []>} : vector<64x32xbf16>, vector<32x64xbf16>, vector<64x64xf32> -> vector<64x64xf32>
    %102 = vector.broadcast %20 : vector<1x64xf32> to vector<64x64xf32>
    %103 = arith.addf %101, %102 : vector<64x64xf32>
    %cst_25 = arith.constant 0.000000e+00 : f32
    %104 = vector.broadcast %cst_25 : f32 to vector<64x64xf32>
    %105 = arith.maximumf %103, %104 : vector<64x64xf32>
    %106 = arith.truncf %105 : vector<64x64xf32> to vector<64x64xbf16>
    %cst_26 = arith.constant dense<0.000000e+00> : vector<64x32xf32>
    %107 = tpu.matmul %106, %15, %cst_26 {dimension_numbers = #tpu.dot_dimension_numbers<[1], [0], [0], [1], [0, 0, 1, 1], [], []>} : vector<64x64xbf16>, vector<64x32xbf16>, vector<64x32xf32> -> vector<64x32xf32>
    %108 = vector.broadcast %24 : vector<1x32xf32> to vector<64x32xf32>
    %109 = arith.addf %107, %108 : vector<64x32xf32>
    %110 = arith.addf %99, %109 : vector<64x32xf32>
    %cst_27 = arith.constant dense<0.000000e+00> : vector<64xf32>
    %111 = vector.multi_reduction <add>, %110, %cst_27 [1] : vector<64x32xf32> to vector<64xf32>
    %112 = vector.shape_cast %111 : vector<64xf32> to vector<64x1xf32>
    %cst_28 = arith.constant 3.200000e+01 : f32
    %113 = vector.broadcast %cst_28 : f32 to vector<64x1xf32>
    %114 = arith.divf %112, %113 : vector<64x1xf32>
    %115 = vector.broadcast %114 : vector<64x1xf32> to vector<64x32xf32>
    %116 = arith.subf %110, %115 : vector<64x32xf32>
    %117 = arith.mulf %116, %116 : vector<64x32xf32>
    %cst_29 = arith.constant dense<0.000000e+00> : vector<64xf32>
    %118 = vector.multi_reduction <add>, %117, %cst_29 [1] : vector<64x32xf32> to vector<64xf32>
    %119 = vector.shape_cast %118 : vector<64xf32> to vector<64x1xf32>
    %cst_30 = arith.constant 3.200000e+01 : f32
    %120 = vector.broadcast %cst_30 : f32 to vector<64x1xf32>
    %121 = arith.divf %119, %120 : vector<64x1xf32>
    %122 = vector.broadcast %114 : vector<64x1xf32> to vector<64x32xf32>
    %123 = arith.subf %110, %122 : vector<64x32xf32>
    %cst_31 = arith.constant 9.99999974E-6 : f32
    %124 = vector.broadcast %cst_31 : f32 to vector<64x1xf32>
    %125 = arith.addf %121, %124 : vector<64x1xf32>
    %126 = math.rsqrt %125 : vector<64x1xf32>
    %127 = vector.broadcast %126 : vector<64x1xf32> to vector<64x32xf32>
    %128 = arith.mulf %123, %127 : vector<64x32xf32>
    %129 = vector.broadcast %25 : vector<1x32xf32> to vector<64x32xf32>
    %130 = arith.mulf %128, %129 : vector<64x32xf32>
    %131 = vector.broadcast %26 : vector<1x32xf32> to vector<64x32xf32>
    %132 = arith.addf %130, %131 : vector<64x32xf32>
    %c0_32 = arith.constant 0 : index
    %c0_33 = arith.constant 0 : index
    %133 = vector.load %arg8[%c0_32, %c0_33] : memref<64x32xf32, #tpu.memory_space<vmem>>, vector<64x32xf32>
    tpu.vector_store %arg8[%c0_32, %c0_33], %132 {strides = array<i32>} : memref<64x32xf32, #tpu.memory_space<vmem>>, vector<64x32xf32>,
    return
  }
  func.func @transform_0(%arg0: i32, %arg1: i32) -> (i32, i32) {
    %c0_i32 = arith.constant 0 : i32
    %c0_i32_0 = arith.constant 0 : i32
    return %arg0, %c0_i32 : i32, i32
  }
  func.func @transform_1(%arg0: i32, %arg1: i32) -> (i32, i32, i32) {
    %c0_i32 = arith.constant 0 : i32
    %c0_i32_0 = arith.constant 0 : i32
    %c0_i32_1 = arith.constant 0 : i32
    %c0_i32_2 = arith.constant 0 : i32
    return %c0_i32, %c0_i32_0, %c0_i32_1 : i32, i32, i32
  }
  func.func @transform_2(%arg0: i32, %arg1: i32) -> (i32, i32, i32) {
    %c0_i32 = arith.constant 0 : i32
    %c0_i32_0 = arith.constant 0 : i32
    %c0_i32_1 = arith.constant 0 : i32
    %c0_i32_2 = arith.constant 0 : i32
    return %c0_i32, %c0_i32_0, %c0_i32_1 : i32, i32, i32
  }
  func.func @transform_3(%arg0: i32, %arg1: i32) -> (i32, i32, i32) {
    %c0_i32 = arith.constant 0 : i32
    %c0_i32_0 = arith.constant 0 : i32
    %c0_i32_1 = arith.constant 0 : i32
    %c0_i32_2 = arith.constant 0 : i32
    return %c0_i32, %c0_i32_0, %c0_i32_1 : i32, i32, i32
  }
  func.func @transform_4(%arg0: i32, %arg1: i32) -> (i32, i32, i32) {
    %c0_i32 = arith.constant 0 : i32
    %c0_i32_0 = arith.constant 0 : i32
    %c0_i32_1 = arith.constant 0 : i32
    %c0_i32_2 = arith.constant 0 : i32
    return %c0_i32, %c0_i32_0, %c0_i32_1 : i32, i32, i32
  }
  func.func @transform_5(%arg0: i32, %arg1: i32) -> (i32, i32, i32) {
    %c0_i32 = arith.constant 0 : i32
    %c0_i32_0 = arith.constant 0 : i32
    %c0_i32_1 = arith.constant 0 : i32
    %c0_i32_2 = arith.constant 0 : i32
    return %c0_i32, %c0_i32_0, %c0_i32_1 : i32, i32, i32
  }
  func.func @transform_6(%arg0: i32, %arg1: i32) -> (i32, i32) {
    %c0_i32 = arith.constant 0 : i32
    %c0_i32_0 = arith.constant 0 : i32
    return %arg0, %c0_i32 : i32, i32
  }
}

</mosaic_0001>

<llo_original>
// kernel: tab_transformer_forward.1
$region0: #{tab_transformer_forward.1}
  #allocation0 [shape = 'u32[]', space=smem, size = 0x4, offset = 0x4, fixed_abs, tag = 'smem constant byte address 0x4 - core index']
  #allocation1 [shape = 'u32[144,128]{1,0:T(1,128)}', space=vmem, size = 0x12000, scoped, tag = 'internal scratch']
  %s0 = inlined_call_operand.vmem [shape: f32[64,32], index: 0, kind: input, shape index: {}]
  %s1 = inlined_call_operand.vmem [shape: bf16[2,32,96], index: 1, kind: input, shape index: {}]
  %s2 = inlined_call_operand.vmem [shape: bf16[2,32,32], index: 2, kind: input, shape index: {}]
  %s3 = inlined_call_operand.vmem [shape: bf16[2,32,64], index: 3, kind: input, shape index: {}]
  %s4 = inlined_call_operand.vmem [shape: bf16[2,64,32], index: 4, kind: input, shape index: {}]
  %s5 = inlined_call_operand.vmem [shape: f32[2,8,128], index: 5, kind: input, shape index: {}]
  %s6 = inlined_call_operand.vmem [shape: f32[64,32], index: 6, kind: output, shape index: {}]
  %s7 = sld [smem:[#allocation0]]
  $region61: #{tab_transformer_forward.1} parent=0
    _
  %s9 = ssub.s32 1, %s7
  %s10 = scalar_select 0, %s9, %s7
  loop: start=0, step=1, limit=4
  $region2: #{tab_transformer_forward.1} parent=0 // loop_pre_header
    _
  $region3: #{tab_transformer_forward.1} parent=0 // loop_header
    %s12 = sphi 0, %s16
    %p13 = scmp.ge.s32.totalorder %s12, 4
    %s19 = sphi 0, %s31
    %s20 = sphi 0, %s27
    %s21 = sphi 0, %s19
    %s22 = sphi 0, %s20
    %s23 = sphi 0, %s21
    %s24 = sphi 0, %s22
    %s34 = sphi 0, %s36
    %s37 = sphi 0, %s34
    %s38 = sphi 0, %s37
    %s54 = sphi 0, %s38
    %s58 = sphi 0, %s58
    %s60 = sphi 0, %s58
    %s61 = sphi 0, %s60
    %s75 = sphi 0, %s61
    %s79 = sphi 0, %s79
    %s81 = sphi 0, %s79
    %s82 = sphi 0, %s81
    %s96 = sphi 0, %s82
    %s100 = sphi 0, %s100
    %s102 = sphi 0, %s100
    %s103 = sphi 0, %s102
    %s117 = sphi 0, %s103
    %s121 = sphi 0, %s121
    %s123 = sphi 0, %s121
    %s124 = sphi 0, %s123
    %s138 = sphi 0, %s124
    %s142 = sphi 0, %s142
    %s144 = sphi 0, %s142
    %s145 = sphi 0, %s144
    %s159 = sphi 0, %s145
    %s165 = sphi 0, %s167
    %s168 = sphi 0, %s165
    %s169 = sphi 0, %s168
    %s185 = sphi 0, %s169
  $region4: #{tab_transformer_forward.1} parent=0 // loop_header_branch
    %15 = sbr.rel (%p13) target = $region8
  $region5: #{tab_transformer_forward.1} parent=0 // loop_body
    %s17 = ssub.s32 %s12, 1
    %s18 = ssub.s32 %s12, 2
    %s25 = sadd.s32 1, %s20
    %p26 = scmp.ge.s32.totalorder %s25, 2
    %s27 = scalar_select %p26, 0, %s25
    %s28 = sadd.s32 1, %s19
    %s29 = scalar_select %p26, %s28, %s19
    %p30 = scmp.ge.s32.totalorder %s29, 1
    %s31 = scalar_select %p30, 0, %s29
    %s32 = ssub.s32 %s19, %s31
    %p33 = scmp.eq.s32.totalorder %s32, 0
    %s35 = sadd.s32 %s34, 1
    %s36 = scalar_select %p33, %s34, %s35
    %p39 = pneg %p33
    %p40 = scmp.eq.s32.totalorder %s12, 1
    %p41 = por %p39, %p40
    %p42 = scmp.ne.s32.totalorder %s34, %s37
    %p43 = scmp.eq.s32.totalorder %s12, 0
    %p44 = por %p42, %p43
    %p45 = scmp.ne.s32.totalorder %s34, %s37
    %p46 = scmp.eq.s32.totalorder %s17, 1
    %p47 = por %p45, %p46
    %p48 = scmp.ne.s32.totalorder %s37, %s38
    %p49 = scmp.eq.s32.totalorder %s17, 0
    %p50 = por %p48, %p49
    %p51 = scmp.ne.s32.totalorder %s37, %s38
    %p52 = scmp.eq.s32.totalorder %s18, 1
    %p53 = por %p51, %p52
    %p55 = scmp.ne.s32.totalorder %s38, %s54
    %p56 = scmp.eq.s32.totalorder %s18, 0
    %p57 = por %p55, %p56
    %s59 = sadd.s32 %s58, 1
    %p62 = scmp.eq.s32.totalorder %s12, 1
    %p63 = scmp.ne.s32.totalorder %s58, %s60
    %p64 = scmp.eq.s32.totalorder %s12, 0
    %p65 = por %p63, %p64
    %p66 = scmp.ne.s32.totalorder %s58, %s60
    %p67 = scmp.eq.s32.totalorder %s17, 1
    %p68 = por %p66, %p67
    %p69 = scmp.ne.s32.totalorder %s60, %s61
    %p70 = scmp.eq.s32.totalorder %s17, 0
    %p71 = por %p69, %p70
    %p72 = scmp.ne.s32.totalorder %s60, %s61
    %p73 = scmp.eq.s32.totalorder %s18, 1
    %p74 = por %p72, %p73
    %p76 = scmp.ne.s32.totalorder %s61, %s75
    %p77 = scmp.eq.s32.totalorder %s18, 0
    %p78 = por %p76, %p77
    %s80 = sadd.s32 %s79, 1
    %p83 = scmp.eq.s32.totalorder %s12, 1
    %p84 = scmp.ne.s32.totalorder %s79, %s81
    %p85 = scmp.eq.s32.totalorder %s12, 0
    %p86 = por %p84, %p85
    %p87 = scmp.ne.s32.totalorder %s79, %s81
    %p88 = scmp.eq.s32.totalorder %s17, 1
    %p89 = por %p87, %p88
    %p90 = scmp.ne.s32.totalorder %s81, %s82
    %p91 = scmp.eq.s32.totalorder %s17, 0
    %p92 = por %p90, %p91
    %p93 = scmp.ne.s32.totalorder %s81, %s82
    %p94 = scmp.eq.s32.totalorder %s18, 1
    %p95 = por %p93, %p94
    %p97 = scmp.ne.s32.totalorder %s82, %s96
    %p98 = scmp.eq.s32.totalorder %s18, 0
    %p99 = por %p97, %p98
    %s101 = sadd.s32 %s100, 1
    %p104 = scmp.eq.s32.totalorder %s12, 1
    %p105 = scmp.ne.s32.totalorder %s100, %s102
    %p106 = scmp.eq.s32.totalorder %s12, 0
    %p107 = por %p105, %p106
    %p108 = scmp.ne.s32.totalorder %s100, %s102
    %p109 = scmp.eq.s32.totalorder %s17, 1
    %p110 = por %p108, %p109
    %p111 = scmp.ne.s32.totalorder %s102, %s103
    %p112 = scmp.eq.s32.totalorder %s17, 0
    %p113 = por %p111, %p112
    %p114 = scmp.ne.s32.totalorder %s102, %s103
    %p115 = scmp.eq.s32.totalorder %s18, 1
    %p116 = por %p114, %p115
    %p118 = scmp.ne.s32.totalorder %s103, %s117
    %p119 = scmp.eq.s32.totalorder %s18, 0
    %p120 = por %p118, %p119
    %s122 = sadd.s32 %s121, 1
    %p125 = scmp.eq.s32.totalorder %s12, 1
    %p126 = scmp.ne.s32.totalorder %s121, %s123
    %p127 = scmp.eq.s32.totalorder %s12, 0
    %p128 = por %p126, %p127
    %p129 = scmp.ne.s32.totalorder %s121, %s123
    %p130 = scmp.eq.s32.totalorder %s17, 1
    %p131 = por %p129, %p130
    %p132 = scmp.ne.s32.totalorder %s123, %s124
    %p133 = scmp.eq.s32.totalorder %s17, 0
    %p134 = por %p132, %p133
    %p135 = scmp.ne.s32.totalorder %s123, %s124
    %p136 = scmp.eq.s32.totalorder %s18, 1
    %p137 = por %p135, %p136
    %p139 = scmp.ne.s32.totalorder %s124, %s138
    %p140 = scmp.eq.s32.totalorder %s18, 0
    %p141 = por %p139, %p140
    %s143 = sadd.s32 %s142, 1
    %p146 = scmp.eq.s32.totalorder %s12, 1
    %p147 = scmp.ne.s32.totalorder %s142, %s144
    %p148 = scmp.eq.s32.totalorder %s12, 0
    %p149 = por %p147, %p148
    %p150 = scmp.ne.s32.totalorder %s142, %s144
    %p151 = scmp.eq.s32.totalorder %s17, 1
    %p152 = por %p150, %p151
    %p153 = scmp.ne.s32.totalorder %s144, %s145
    %p154 = scmp.eq.s32.totalorder %s17, 0
    %p155 = por %p153, %p154
    %p156 = scmp.ne.s32.totalorder %s144, %s145
    %p157 = scmp.eq.s32.totalorder %s18, 1
    %p158 = por %p156, %p157
    %p160 = scmp.ne.s32.totalorder %s145, %s159
    %p161 = scmp.eq.s32.totalorder %s18, 0
    %p162 = por %p160, %p161
    %s163 = ssub.s32 %s19, %s31
    %p164 = scmp.eq.s32.totalorder %s163, 0
    %s166 = sadd.s32 %s165, 1
    %s167 = scalar_select %p164, %s165, %s166
    %p170 = pneg %p164
    %p171 = scmp.eq.s32.totalorder %s12, 1
    %p172 = por %p170, %p171
    %p173 = scmp.ne.s32.totalorder %s165, %s168
    %p174 = scmp.eq.s32.totalorder %s12, 0
    %p175 = por %p173, %p174
    %p176 = scmp.ne.s32.totalorder %s165, %s168
    %p177 = scmp.eq.s32.totalorder %s17, 1
    %p178 = por %p176, %p177
    %p179 = scmp.ne.s32.totalorder %s168, %s169
    %p180 = scmp.eq.s32.totalorder %s17, 0
    %p181 = por %p179, %p180
    %p182 = scmp.ne.s32.totalorder %s168, %s169
    %p183 = scmp.eq.s32.totalorder %s18, 1
    %p184 = por %p182, %p183
    %p186 = scmp.ne.s32.totalorder %s169, %s185
    %p187 = scmp.eq.s32.totalorder %s18, 0
    %p188 = por %p186, %p187
    %p189 = scmp.le.s32.totalorder 1, %s12
    %p190 = scmp.lt.s32.totalorder %s12, 3
    %p191 = pnand %p189, %p190
    %p192 = pneg %p191
    // Predicated region
    $region9: #{tab_transformer_forward.1} parent=5 // pred_check
      _
    $region10: #{tab_transformer_forward.1} parent=5 // pred_check_branch
      %194 = sbr.rel (%p191) target = $region12
    $region11: #{tab_transformer_forward.1} parent=5 // pred_region
      %s195 = ssub.s32 %s12, 1
      // Predicated region
      $region13: #{tab_transformer_forward.1} parent=11 // pred_check
        %p196 = pneg %p50
      $region14: #{tab_transformer_forward.1} parent=11 // pred_check_branch
        %198 = sbr.rel (%p196) target = $region16
      $region15: #{tab_transformer_forward.1} parent=11 // pred_region
        %s199 = smul.u32 8, %s21
        %p200 = scmp.lt.s32.totalorder %s199, 7
        %s201 = scalar_select %p200, %s199, 7
        %s202 = smul.addr %s201, 8
        %s203 = scalar_lea.vmem %s0, %s202
        %s204 = smul.u32 8, %s21
      $region16: #{tab_transformer_forward.1} parent=11 // pred_fallthru
        _
      // Predicated region
      $region17: #{tab_transformer_forward.1} parent=11 // pred_check
        %p205 = pneg %p71
      $region18: #{tab_transformer_forward.1} parent=11 // pred_check_branch
        %207 = sbr.rel (%p205) target = $region20
      $region19: #{tab_transformer_forward.1} parent=11 // pred_region
        _
      $region20: #{tab_transformer_forward.1} parent=11 // pred_fallthru
        _
      // Predicated region
      $region21: #{tab_transformer_forward.1} parent=11 // pred_check
        %p208 = pneg %p92
      $region22: #{tab_transformer_forward.1} parent=11 // pred_check_branch
        %210 = sbr.rel (%p208) target = $region24
      $region23: #{tab_transformer_forward.1} parent=11 // pred_region
        _
      $region24: #{tab_transformer_forward.1} parent=11 // pred_fallthru
        _
      // Predicated region
      $region25: #{tab_transformer_forward.1} parent=11 // pred_check
        %p211 = pneg %p113
      $region26: #{tab_transformer_forward.1} parent=11 // pred_check_branch
        %213 = sbr.rel (%p211) target = $region28
      $region27: #{tab_transformer_forward.1} parent=11 // pred_region
        _
      $region28: #{tab_transformer_forward.1} parent=11 // pred_fallthru
        _
      // Predicated region
      $region29: #{tab_transformer_forward.1} parent=11 // pred_check
        %p214 = pneg %p134
      $region30: #{tab_transformer_forward.1} parent=11 // pred_check_branch
        %216 = sbr.rel (%p214) target = $region32
      $region31: #{tab_transformer_forward.1} parent=11 // pred_region
        _
      $region32: #{tab_transformer_forward.1} parent=11 // pred_fallthru
        _
      // Predicated region
      $region33: #{tab_transformer_forward.1} parent=11 // pred_check
        %p217 = pneg %p155
      $region34: #{tab_transformer_forward.1} parent=11 // pred_check_branch
        %219 = sbr.rel (%p217) target = $region36
      $region35: #{tab_transformer_forward.1} parent=11 // pred_region
        _
      $region36: #{tab_transformer_forward.1} parent=11 // pred_fallthru
        _
    $region12: #{tab_transformer_forward.1} parent=5 // pred_fallthru
      _
    %p220 = scmp.lt.s32.totalorder %s12, 2
    // Predicated region
    $region37: #{tab_transformer_forward.1} parent=5 // pred_check
      %p221 = pneg %p220
    $region38: #{tab_transformer_forward.1} parent=5 // pred_check_branch
      %223 = sbr.rel (%p221) target = $region40
    $region39: #{tab_transformer_forward.1} parent=5 // pred_region
      _
    $region40: #{tab_transformer_forward.1} parent=5 // pred_fallthru
      _
    %p224 = scmp.le.s32.totalorder 1, %s12
    %p225 = scmp.lt.s32.totalorder %s12, 3
    %p226 = pnand %p224, %p225
    %p227 = pneg %p226
    // Predicated region
    $region41: #{tab_transformer_forward.1} parent=5 // pred_check
      _
    $region42: #{tab_transformer_forward.1} parent=5 // pred_check_branch
      %229 = sbr.rel (%p226) target = $region44
    $region43: #{tab_transformer_forward.1} parent=5 // pred_region
      %s230 = ssub.s32 %s12, 1
      %s231 = smul.u32 8, %s21
      %p232 = scmp.lt.s32.totalorder %s231, 7
      %s233 = scalar_select %p232, %s231, 7
      %s234 = smul.addr %s233, 8
      %s235 = scalar_lea.vmem %s0, %s234
      %p236 = pneg %p50
      %p237 = pneg %p47
      %p238 = pneg %p71
      %p239 = pneg %p68
      %p240 = pneg %p92
      %p241 = pneg %p89
      %p242 = pneg %p113
      %p243 = pneg %p110
      %p244 = pneg %p134
      %p245 = pneg %p131
      %p246 = pneg %p155
      %p247 = pneg %p152
      %p248 = pneg %p181
      %p249 = pneg %p178
      %s250 = smul.u32 8, %s21
      %p251 = scmp.lt.s32.totalorder %s250, 7
      %s252 = scalar_select %p251, %s250, 7
      %s253 = smul.addr %s252, 8
      %s254 = scalar_lea.vmem %s6, %s253
      %s255 = smul.u32 8, %s21
      %p256 = scmp.lt.s32.totalorder %s255, 7
      %s257 = scalar_select %p256, %s255, 7
      %s258 = smul.addr %s257, 8
      %s259 = scalar_lea.vmem %s0, %s258
      %s260 = smul.u32 8, %s21
      %s261 = smul.u32 8, %s21
      %p262 = scmp.lt.s32.totalorder %s261, 7
      %s263 = scalar_select %p262, %s261, 7
      %s264 = smul.addr %s263, 8
      %s265 = scalar_lea.vmem %s6, %s264
      %s266 = smul.u32 8, %s21
      %p268 = scmp.eq.s32.totalorder %s22, 0
      // Predicated region
      $region45: #{tab_transformer_forward.1} parent=43 // pred_check
        %p269 = pneg %p268
      $region46: #{tab_transformer_forward.1} parent=43 // pred_check_branch
        %271 = sbr.rel (%p269) target = $region48
      $region47: #{tab_transformer_forward.1} parent=43 // pred_region
        %v272 = vld [vmem:[%s259] sm:$0xff]
        %v273 = vld [vmem:[%s259 + $0x8] sm:$0xff]
        %v274 = vld [vmem:[%s259 + $0x10] sm:$0xff]
        %v275 = vld [vmem:[%s259 + $0x18] sm:$0xff]
        %v276 = vld [vmem:[%s259 + $0x20] sm:$0xff]
        %v277 = vld [vmem:[%s259 + $0x28] sm:$0xff]
        %v278 = vld [vmem:[%s259 + $0x30] sm:$0xff]
        %v279 = vld [vmem:[%s259 + $0x38] sm:$0xff]
        %vm280 = vcmask 261120
        %281 = vst.msk [vmem:[%s265] sm:$0xff] %vm280, %v272
        %282 = vst.msk [vmem:[%s265 + $0x8] sm:$0xff] %vm280, %v273
        %283 = vst.msk [vmem:[%s265 + $0x10] sm:$0xff] %vm280, %v274
        %284 = vst.msk [vmem:[%s265 + $0x18] sm:$0xff] %vm280, %v275
        %285 = vst.msk [vmem:[%s265 + $0x20] sm:$0xff] %vm280, %v276
        %286 = vst.msk [vmem:[%s265 + $0x28] sm:$0xff] %vm280, %v277
        %287 = vst.msk [vmem:[%s265 + $0x30] sm:$0xff] %vm280, %v278
        %288 = vst.msk [vmem:[%s265 + $0x38] sm:$0xff] %vm280, %v279
      $region48: #{tab_transformer_forward.1} parent=43 // pred_fallthru
        _
      %v289 = vld [vmem:[%s265] sm:$0xff]
      %v290 = vld [vmem:[%s265 + $0x8] sm:$0xff]
      %v291 = vld [vmem:[%s265 + $0x10] sm:$0xff]
      %v292 = vld [vmem:[%s265 + $0x18] sm:$0xff]
      %v293 = vld [vmem:[%s265 + $0x20] sm:$0xff]
      %v294 = vld [vmem:[%s265 + $0x28] sm:$0xff]
      %v295 = vld [vmem:[%s265 + $0x30] sm:$0xff]
      %v296 = vld [vmem:[%s265 + $0x38] sm:$0xff]
      %s297 = smul.u32 %s22, 4
      %s298 = smul.addr %s297, 4
      %s299 = scalar_lea.vmem %s1, %s298
      %v300 = vld [vmem:[%s299] sm:$0xf]
      %v301 = vld [vmem:[%s299 + $0x4] sm:$0xf]
      %v302 = vld [vmem:[%s299 + $0x8] sm:$0xf]
      %v303 = vld [vmem:[%s299 + $0xc] sm:$0xf]
      %s304 = smul.addr %s297, 4
      %s305 = scalar_lea.vmem %s2, %s304
      %v306 = vld [vmem:[%s305] sm:$0xf]
      %v307 = vld [vmem:[%s305 + $0x4] sm:$0xf]
      %v308 = vld [vmem:[%s305 + $0x8] sm:$0xf]
      %v309 = vld [vmem:[%s305 + $0xc] sm:$0xf]
      %s310 = smul.addr %s297, 4
      %s311 = scalar_lea.vmem %s3, %s310
      %v312 = vld [vmem:[%s311] sm:$0xf]
      %v313 = vld [vmem:[%s311 + $0x4] sm:$0xf]
      %v314 = vld [vmem:[%s311 + $0x8] sm:$0xf]
      %v315 = vld [vmem:[%s311 + $0xc] sm:$0xf]
      %s316 = smul.u32 %s22, 8
      %s317 = smul.addr %s316, 4
      %s318 = scalar_lea.vmem %s4, %s317
      %v319 = vld [vmem:[%s318] sm:$0xf]
      %v320 = vld [vmem:[%s318 + $0x4] sm:$0xf]
      %v321 = vld [vmem:[%s318 + $0x8] sm:$0xf]
      %v322 = vld [vmem:[%s318 + $0xc] sm:$0xf]
      %v323 = vld [vmem:[%s318 + $0x10] sm:$0xf]
      %v324 = vld [vmem:[%s318 + $0x14] sm:$0xf]
      %v325 = vld [vmem:[%s318 + $0x18] sm:$0xf]
      %v326 = vld [vmem:[%s318 + $0x1c] sm:$0xf]
      %s327 = scalar_lea.vmem %s5, %s316
      %v328 = vld [vmem:[%s327] sm:$0xff]
      %v329 = vpack.c.bf16 %v290, %v289
      %v330 = vpack.c.bf16 %v292, %v291
      %v331 = vpack.c.bf16 %v294, %v293
      %v332 = vpack.c.bf16 %v296, %v295
      %v333 = vlaneseq
      %v334 = vshrl.u32 %v333, 7
      %v335 = vsub.s32 0, %v334
      %v336 = vrot.slane %v328, %v335
      %v341 = vunpack.c.l.b16 %v300
      %v342 = vunpack.c.l.b16 %v301
      %v343 = vunpack.c.l.b16 %v302
      %v344 = vunpack.c.l.b16 %v303
      %v345 = vpack.c.b16 %v342, %v341
      %v346 = vpack.c.b16 %v344, %v343
      %vm349 = vcmask 261120
      %v351 = vsel %vm349, %v329, 0
      %v354 = vsel %vm349, %v330, 0
      %v357 = vsel %vm349, %v331, 0
      %v360 = vsel %vm349, %v332, 0
      %362 = vmatprep.subr.bf16.mxu0 0
      %363 = vmatpush1.bf16.msra.mxu0 %v345
      %364 = vmatprep.subr.bf16.mxu0 0
      %365 = vmatpush1.bf16.msra.mxu0 %v346
      %366 = vmatprep.subr.bf16.mxu0 0
      %367 = vmatpush1.bf16.msra.mxu0 0
      %368 = vmatprep.subr.bf16.mxu0 0
      %369 = vmatpush1.bf16.msra.mxu0 0
      %370 = vmatprep.subr.bf16.mxu0 0
      %371 = vmatpush1.bf16.msra.mxu0 0
      %372 = vmatprep.subr.bf16.mxu0 0
      %373 = vmatpush1.bf16.msra.mxu0 0
      %374 = vmatprep.subr.bf16.mxu0 0
      %375 = vmatpush1.bf16.msra.mxu0 0
      %376 = vmatprep.subr.bf16.mxu0 0
      %377 = vmatpush1.bf16.msra.mxu0 0
      %378 = vmatprep.subr.bf16.mxu0 0
      %379 = vmatpush1.bf16.msra.mxu0 0
      %380 = vmatprep.subr.bf16.mxu0 0
      %381 = vmatpush1.bf16.msra.mxu0 0
      %382 = vmatprep.subr.bf16.mxu0 0
      %383 = vmatpush1.bf16.msra.mxu0 0
      %384 = vmatprep.subr.bf16.mxu0 0
      %385 = vmatpush1.bf16.msra.mxu0 0
      %386 = vmatprep.subr.bf16.mxu0 0
      %387 = vmatpush1.bf16.msra.mxu0 0
      %388 = vmatprep.subr.bf16.mxu0 0
      %389 = vmatpush1.bf16.msra.mxu0 0
      %390 = vmatprep.subr.bf16.mxu0 0
      %391 = vmatpush1.bf16.msra.mxu0 0
      %392 = vmatprep.subr.bf16.mxu0 0
      %393 = vmatpush1.bf16.msra.mxu0 0
      %394 = vmatprep.mubr.bf16.mxu0 0
      %395 = vmatmul.mubr.bf16.gmra.mrb[0].mxu0 %v351
      %v396 = vpop.f32.mrb[0].mxu0
      %v397 = vadd.f32 %v336, %v396
      %v398 = vpop.f32.mrb[0].mxu0
      %v399 = vpop.f32.mrb[0].mxu0
      %v400 = vadd.f32 %v336, %v399
      %v401 = vpop.f32.mrb[0].mxu0
      %402 = vmatprep.mubr.bf16.mxu0 0
      %403 = vmatmul.mubr.bf16.gmra.mrb[0].mxu0 %v354
      %v404 = vpop.f32.mrb[0].mxu0
      %v405 = vadd.f32 %v336, %v404
      %v406 = vpop.f32.mrb[0].mxu0
      %v407 = vpop.f32.mrb[0].mxu0
      %v408 = vadd.f32 %v336, %v407
      %v409 = vpop.f32.mrb[0].mxu0
      %410 = vmatprep.mubr.bf16.mxu0 0
      %411 = vmatmul.mubr.bf16.gmra.mrb[0].mxu0 %v357
      %v412 = vpop.f32.mrb[0].mxu0
      %v413 = vadd.f32 %v336, %v412
      %v414 = vpop.f32.mrb[0].mxu0
      %v415 = vpop.f32.mrb[0].mxu0
      %v416 = vadd.f32 %v336, %v415
      %v417 = vpop.f32.mrb[0].mxu0
      %418 = vmatprep.mubr.bf16.mxu0 0
      %419 = vmatmul.mubr.bf16.gmra.mrb[0].mxu0 %v360
      %v420 = vpop.f32.mrb[0].mxu0
      %v421 = vadd.f32 %v336, %v420
      %v422 = vpop.f32.mrb[0].mxu0
      %v423 = vpop.f32.mrb[0].mxu0
      %v424 = vadd.f32 %v336, %v423
      %v425 = vpop.f32.mrb[0].mxu0
      %426 = vdwg.mxu0
      %v427 = vpack.c.bf16 %v400, %v397
      %v428 = vpack.c.bf16 %v408, %v405
      %v429 = vpack.c.bf16 %v416, %v413
      %v430 = vpack.c.bf16 %v424, %v421
      %v435 = vunpack.c.l.b16 %v427
      %v436 = vunpack.c.h.b16 %v427
      %v437 = vunpack.c.l.b16 %v428
      %v438 = vunpack.c.h.b16 %v428
      %v439 = vunpack.c.l.b16 %v429
      %v440 = vunpack.c.h.b16 %v429
      %v441 = vunpack.c.l.b16 %v430
      %v442 = vunpack.c.h.b16 %v430
      %v443 = vpack.c.b16 %v435, %v435
      %v444 = vpack.c.b16 %v436, %v436
      %v445 = vpack.c.b16 %v437, %v437
      %v446 = vpack.c.b16 %v438, %v438
      %v447 = vpack.c.b16 %v439, %v439
      %v448 = vpack.c.b16 %v440, %v440
      %v449 = vpack.c.b16 %v441, %v441
      %v450 = vpack.c.b16 %v442, %v442
      %451 = vrot.lane.b32.xlu0 %v443, 120
      %v452 = vpop.permute.xlu0 %451
      %453 = vrot.lane.b32.xlu0 %v444, 120
      %v454 = vpop.permute.xlu0 %453
      %455 = vrot.lane.b32.xlu0 %v445, 120
      %v456 = vpop.permute.xlu0 %455
      %457 = vrot.lane.b32.xlu0 %v446, 120
      %v458 = vpop.permute.xlu0 %457
      %459 = vrot.lane.b32.xlu0 %v447, 120
      %v460 = vpop.permute.xlu0 %459
      %461 = vrot.lane.b32.xlu0 %v448, 120
      %v462 = vpop.permute.xlu0 %461
      %463 = vrot.lane.b32.xlu0 %v449, 120
      %v464 = vpop.permute.xlu0 %463
      %465 = vrot.lane.b32.xlu0 %v450, 120
      %v466 = vpop.permute.xlu0 %465
      %467 = vrot.lane.b32.xlu0 %v443, 112
      %v468 = vpop.permute.xlu0 %467
      %469 = vrot.lane.b32.xlu0 %v444, 112
      %v470 = vpop.permute.xlu0 %469
      %471 = vrot.lane.b32.xlu0 %v445, 112
      %v472 = vpop.permute.xlu0 %471
      %473 = vrot.lane.b32.xlu0 %v446, 112
      %v474 = vpop.permute.xlu0 %473
      %475 = vrot.lane.b32.xlu0 %v447, 112
      %v476 = vpop.permute.xlu0 %475
      %477 = vrot.lane.b32.xlu0 %v448, 112
      %v478 = vpop.permute.xlu0 %477
      %479 = vrot.lane.b32.xlu0 %v449, 112
      %v480 = vpop.permute.xlu0 %479
      %481 = vrot.lane.b32.xlu0 %v450, 112
      %v482 = vpop.permute.xlu0 %481
      %483 = vrot.lane.b32.xlu0 %v443, 104
      %v484 = vpop.permute.xlu0 %483
      %485 = vrot.lane.b32.xlu0 %v444, 104
      %v486 = vpop.permute.xlu0 %485
      %487 = vrot.lane.b32.xlu0 %v445, 104
      %v488 = vpop.permute.xlu0 %487
      %489 = vrot.lane.b32.xlu0 %v446, 104
      %v490 = vpop.permute.xlu0 %489
      %491 = vrot.lane.b32.xlu0 %v447, 104
      %v492 = vpop.permute.xlu0 %491
      %493 = vrot.lane.b32.xlu0 %v448, 104
      %v494 = vpop.permute.xlu0 %493
      %495 = vrot.lane.b32.xlu0 %v449, 104
      %v496 = vpop.permute.xlu0 %495
      %497 = vrot.lane.b32.xlu0 %v450, 104
      %v498 = vpop.permute.xlu0 %497
      %499 = vrot.lane.b32.xlu0 %v443, 96
      %v500 = vpop.permute.xlu0 %499
      %vm501 = vcmask 64512
      %v503 = vsel %vm501, %v443, 0
      %v506 = vsel %vm501, %v500, 0
      %508 = vmatprep.subr.bf16.mxu0 0
      %509 = vmatpush1.bf16.xpose.msra.mxu0 %v506
      %510 = vmatprep.subr.bf16.mxu0 0
      %511 = vmatpush1.bf16.xpose.msra.mxu0 0
      %512 = vmatprep.subr.bf16.mxu0 0
      %513 = vmatpush1.bf16.xpose.msra.mxu0 0
      %514 = vmatprep.subr.bf16.mxu0 0
      %515 = vmatpush1.bf16.xpose.msra.mxu0 0
      %516 = vmatprep.subr.bf16.mxu0 0
      %517 = vmatpush1.bf16.xpose.msra.mxu0 0
      %518 = vmatprep.subr.bf16.mxu0 0
      %519 = vmatpush1.bf16.xpose.msra.mxu0 0
      %520 = vmatprep.subr.bf16.mxu0 0
      %521 = vmatpush1.bf16.xpose.msra.mxu0 0
      %522 = vmatprep.subr.bf16.mxu0 0
      %523 = vmatpush1.bf16.xpose.msra.mxu0 0
      %524 = vmatprep.subr.bf16.mxu0 0
      %525 = vmatpush1.bf16.xpose.msra.mxu0 0
      %526 = vmatprep.subr.bf16.mxu0 0
      %527 = vmatpush1.bf16.xpose.msra.mxu0 0
      %528 = vmatprep.subr.bf16.mxu0 0
      %529 = vmatpush1.bf16.xpose.msra.mxu0 0
      %530 = vmatprep.subr.bf16.mxu0 0
      %531 = vmatpush1.bf16.xpose.msra.mxu0 0
      %532 = vmatprep.subr.bf16.mxu0 0
      %533 = vmatpush1.bf16.xpose.msra.mxu0 0
      %534 = vmatprep.subr.bf16.mxu0 0
      %535 = vmatpush1.bf16.xpose.msra.mxu0 0
      %536 = vmatprep.subr.bf16.mxu0 0
      %537 = vmatpush1.bf16.xpose.msra.mxu0 0
      %538 = vmatprep.subr.bf16.mxu0 0
      %539 = vmatpush1.bf16.xpose.msra.mxu0 0
      %540 = vmatprep.mubr.bf16.mxu0 0
      %541 = vmatmul.mubr.bf16.gmra.mrb[0].mxu0 %v503
      %v542 = vpop.f32.mrb[0].mxu0
      %v543 = vadd.f32 0.0, %v542
      %v544 = vpop.f32.mrb[0].mxu0
      %v545 = vpop.f32.mrb[0].mxu0
      %v546 = vpop.f32.mrb[0].mxu0
      %547 = vdwg.mxu0
      %548 = vrot.lane.b32.xlu0 %v444, 96
      %v549 = vpop.permute.xlu0 %548
      %v551 = vsel %vm501, %v444, 0
      %v554 = vsel %vm501, %v549, 0
      %556 = vmatprep.subr.bf16.mxu0 0
      %557 = vmatpush1.bf16.xpose.msra.mxu0 %v554
      %558 = vmatprep.subr.bf16.mxu0 0
      %559 = vmatpush1.bf16.xpose.msra.mxu0 0
      %560 = vmatprep.subr.bf16.mxu0 0
      %561 = vmatpush1.bf16.xpose.msra.mxu0 0
      %562 = vmatprep.subr.bf16.mxu0 0
      %563 = vmatpush1.bf16.xpose.msra.mxu0 0
      %564 = vmatprep.subr.bf16.mxu0 0
      %565 = vmatpush1.bf16.xpose.msra.mxu0 0
      %566 = vmatprep.subr.bf16.mxu0 0
      %567 = vmatpush1.bf16.xpose.msra.mxu0 0
      %568 = vmatprep.subr.bf16.mxu0 0
      %569 = vmatpush1.bf16.xpose.msra.mxu0 0
      %570 = vmatprep.subr.bf16.mxu0 0
      %571 = vmatpush1.bf16.xpose.msra.mxu0 0
      %572 = vmatprep.subr.bf16.mxu0 0
      %573 = vmatpush1.bf16.xpose.msra.mxu0 0
      %574 = vmatprep.subr.bf16.mxu0 0
      %575 = vmatpush1.bf16.xpose.msra.mxu0 0
      %576 = vmatprep.subr.bf16.mxu0 0
      %577 = vmatpush1.bf16.xpose.msra.mxu0 0
      %578 = vmatprep.subr.bf16.mxu0 0
      %579 = vmatpush1.bf16.xpose.msra.mxu0 0
      %580 = vmatprep.subr.bf16.mxu0 0
      %581 = vmatpush1.bf16.xpose.msra.mxu0 0
      %582 = vmatprep.subr.bf16.mxu0 0
      %583 = vmatpush1.bf16.xpose.msra.mxu0 0
      %584 = vmatprep.subr.bf16.mxu0 0
      %585 = vmatpush1.bf16.xpose.msra.mxu0 0
      %586 = vmatprep.subr.bf16.mxu0 0
      %587 = vmatpush1.bf16.xpose.msra.mxu0 0
      %588 = vmatprep.mubr.bf16.mxu0 0
      %589 = vmatmul.mubr.bf16.gmra.mrb[0].mxu0 %v551
      %v590 = vpop.f32.mrb[0].mxu0
      %v591 = vadd.f32 0.0, %v590
      %v592 = vpop.f32.mrb[0].mxu0
      %v593 = vpop.f32.mrb[0].mxu0
      %v594 = vpop.f32.mrb[0].mxu0
      %595 = vdwg.mxu0
      %596 = vrot.lane.b32.xlu0 %v445, 96
      %v597 = vpop.permute.xlu0 %596
      %v599 = vsel %vm501, %v445, 0
      %v602 = vsel %vm501, %v597, 0
      %604 = vmatprep.subr.bf16.mxu0 0
      %605 = vmatpush1.bf16.xpose.msra.mxu0 %v602
      %606 = vmatprep.subr.bf16.mxu0 0
      %607 = vmatpush1.bf16.xpose.msra.mxu0 0
      %608 = vmatprep.subr.bf16.mxu0 0
      %609 = vmatpush1.bf16.xpose.msra.mxu0 0
      %610 = vmatprep.subr.bf16.mxu0 0
      %611 = vmatpush1.bf16.xpose.msra.mxu0 0
      %612 = vmatprep.subr.bf16.mxu0 0
      %613 = vmatpush1.bf16.xpose.msra.mxu0 0
      %614 = vmatprep.subr.bf16.mxu0 0
      %615 = vmatpush1.bf16.xpose.msra.mxu0 0
      %616 = vmatprep.subr.bf16.mxu0 0
      %617 = vmatpush1.bf16.xpose.msra.mxu0 0
      %618 = vmatprep.subr.bf16.mxu0 0
      %619 = vmatpush1.bf16.xpose.msra.mxu0 0
      %620 = vmatprep.subr.bf16.mxu0 0
      %621 = vmatpush1.bf16.xpose.msra.mxu0 0
      %622 = vmatprep.subr.bf16.mxu0 0
      %623 = vmatpush1.bf16.xpose.msra.mxu0 0
      %624 = vmatprep.subr.bf16.mxu0 0
      %625 = vmatpush1.bf16.xpose.msra.mxu0 0
      %626 = vmatprep.subr.bf16.mxu0 0
      %627 = vmatpush1.bf16.xpose.msra.mxu0 0
      %628 = vmatprep.subr.bf16.mxu0 0
      %629 = vmatpush1.bf16.xpose.msra.mxu0 0
      %630 = vmatprep.subr.bf16.mxu0 0
      %631 = vmatpush1.bf16.xpose.msra.mxu0 0
      %632 = vmatprep.subr.bf16.mxu0 0
      %633 = vmatpush1.bf16.xpose.msra.mxu0 0
      %634 = vmatprep.subr.bf16.mxu0 0
      %635 = vmatpush1.bf16.xpose.msra.mxu0 0
      %636 = vmatprep.mubr.bf16.mxu0 0
      %637 = vmatmul.mubr.bf16.gmra.mrb[0].mxu0 %v599
      %v638 = vpop.f32.mrb[0].mxu0
      %v639 = vadd.f32 0.0, %v638
      %v640 = vpop.f32.mrb[0].mxu0
      %v641 = vpop.f32.mrb[0].mxu0
      %v642 = vpop.f32.mrb[0].mxu0
      %643 = vdwg.mxu0
      %644 = vrot.lane.b32.xlu0 %v446, 96
      %v645 = vpop.permute.xlu0 %644
      %v647 = vsel %vm501, %v446, 0
      %v650 = vsel %vm501, %v645, 0
      %652 = vmatprep.subr.bf16.mxu0 0
      %653 = vmatpush1.bf16.xpose.msra.mxu0 %v650
      %654 = vmatprep.subr.bf16.mxu0 0
      %655 = vmatpush1.bf16.xpose.msra.mxu0 0
      %656 = vmatprep.subr.bf16.mxu0 0
      %657 = vmatpush1.bf16.xpose.msra.mxu0 0
      %658 = vmatprep.subr.bf16.mxu0 0
      %659 = vmatpush1.bf16.xpose.msra.mxu0 0
      %660 = vmatprep.subr.bf16.mxu0 0
      %661 = vmatpush1.bf16.xpose.msra.mxu0 0
      %662 = vmatprep.subr.bf16.mxu0 0
      %663 = vmatpush1.bf16.xpose.msra.mxu0 0
      %664 = vmatprep.subr.bf16.mxu0 0
      %665 = vmatpush1.bf16.xpose.msra.mxu0 0
      %666 = vmatprep.subr.bf16.mxu0 0
      %667 = vmatpush1.bf16.xpose.msra.mxu0 0
      %668 = vmatprep.subr.bf16.mxu0 0
      %669 = vmatpush1.bf16.xpose.msra.mxu0 0
      %670 = vmatprep.subr.bf16.mxu0 0
      %671 = vmatpush1.bf16.xpose.msra.mxu0 0
      %672 = vmatprep.subr.bf16.mxu0 0
      %673 = vmatpush1.bf16.xpose.msra.mxu0 0
      %674 = vmatprep.subr.bf16.mxu0 0
      %675 = vmatpush1.bf16.xpose.msra.mxu0 0
      %676 = vmatprep.subr.bf16.mxu0 0
      %677 = vmatpush1.bf16.xpose.msra.mxu0 0
      %678 = vmatprep.subr.bf16.mxu0 0
      %679 = vmatpush1.bf16.xpose.msra.mxu0 0
      %680 = vmatprep.subr.bf16.mxu0 0
      %681 = vmatpush1.bf16.xpose.msra.mxu0 0
      %682 = vmatprep.subr.bf16.mxu0 0
      %683 = vmatpush1.bf16.xpose.msra.mxu0 0
      %684 = vmatprep.mubr.bf16.mxu0 0
      %685 = vmatmul.mubr.bf16.gmra.mrb[0].mxu0 %v647
      %v686 = vpop.f32.mrb[0].mxu0
      %v687 = vadd.f32 0.0, %v686
      %v688 = vpop.f32.mrb[0].mxu0
      %v689 = vpop.f32.mrb[0].mxu0
      %v690 = vpop.f32.mrb[0].mxu0
      %691 = vdwg.mxu0
      %692 = vrot.lane.b32.xlu0 %v447, 96
      %v693 = vpop.permute.xlu0 %692
      %v695 = vsel %vm501, %v447, 0
      %v698 = vsel %vm501, %v693, 0
      %700 = vmatprep.subr.bf16.mxu0 0
      %701 = vmatpush1.bf16.xpose.msra.mxu0 %v698
      %702 = vmatprep.subr.bf16.mxu0 0
      %703 = vmatpush1.bf16.xpose.msra.mxu0 0
      %704 = vmatprep.subr.bf16.mxu0 0
      %705 = vmatpush1.bf16.xpose.msra.mxu0 0
      %706 = vmatprep.subr.bf16.mxu0 0
      %707 = vmatpush1.bf16.xpose.msra.mxu0 0
      %708 = vmatprep.subr.bf16.mxu0 0
      %709 = vmatpush1.bf16.xpose.msra.mxu0 0
      %710 = vmatprep.subr.bf16.mxu0 0
      %711 = vmatpush1.bf16.xpose.msra.mxu0 0
      %712 = vmatprep.subr.bf16.mxu0 0
      %713 = vmatpush1.bf16.xpose.msra.mxu0 0
      %714 = vmatprep.subr.bf16.mxu0 0
      %715 = vmatpush1.bf16.xpose.msra.mxu0 0
      %716 = vmatprep.subr.bf16.mxu0 0
      %717 = vmatpush1.bf16.xpose.msra.mxu0 0
      %718 = vmatprep.subr.bf16.mxu0 0
      %719 = vmatpush1.bf16.xpose.msra.mxu0 0
      %720 = vmatprep.subr.bf16.mxu0 0
      %721 = vmatpush1.bf16.xpose.msra.mxu0 0
      %722 = vmatprep.subr.bf16.mxu0 0
      %723 = vmatpush1.bf16.xpose.msra.mxu0 0
      %724 = vmatprep.subr.bf16.mxu0 0
      %725 = vmatpush1.bf16.xpose.msra.mxu0 0
      %726 = vmatprep.subr.bf16.mxu0 0
      %727 = vmatpush1.bf16.xpose.msra.mxu0 0
      %728 = vmatprep.subr.bf16.mxu0 0
      %729 = vmatpush1.bf16.xpose.msra.mxu0 0
      %730 = vmatprep.subr.bf16.mxu0 0
      %731 = vmatpush1.bf16.xpose.msra.mxu0 0
      %732 = vmatprep.mubr.bf16.mxu0 0
      %733 = vmatmul.mubr.bf16.gmra.mrb[0].mxu0 %v695
      %v734 = vpop.f32.mrb[0].mxu0
      %v735 = vadd.f32 0.0, %v734
      %v736 = vpop.f32.mrb[0].mxu0
      %v737 = vpop.f32.mrb[0].mxu0
      %v738 = vpop.f32.mrb[0].mxu0
      %739 = vdwg.mxu0
      %740 = vrot.lane.b32.xlu0 %v448, 96
      %v741 = vpop.permute.xlu0 %740
      %v743 = vsel %vm501, %v448, 0
      %v746 = vsel %vm501, %v741, 0
      %748 = vmatprep.subr.bf16.mxu0 0
      %749 = vmatpush1.bf16.xpose.msra.mxu0 %v746
      %750 = vmatprep.subr.bf16.mxu0 0
      %751 = vmatpush1.bf16.xpose.msra.mxu0 0
      %752 = vmatprep.subr.bf16.mxu0 0
      %753 = vmatpush1.bf16.xpose.msra.mxu0 0
      %754 = vmatprep.subr.bf16.mxu0 0
      %755 = vmatpush1.bf16.xpose.msra.mxu0 0
      %756 = vmatprep.subr.bf16.mxu0 0
      %757 = vmatpush1.bf16.xpose.msra.mxu0 0
      %758 = vmatprep.subr.bf16.mxu0 0
      %759 = vmatpush1.bf16.xpose.msra.mxu0 0
      %760 = vmatprep.subr.bf16.mxu0 0
      %761 = vmatpush1.bf16.xpose.msra.mxu0 0
      %762 = vmatprep.subr.bf16.mxu0 0
      %763 = vmatpush1.bf16.xpose.msra.mxu0 0
      %764 = vmatprep.subr.bf16.mxu0 0
      %765 = vmatpush1.bf16.xpose.msra.mxu0 0
      %766 = vmatprep.subr.bf16.mxu0 0
      %767 = vmatpush1.bf16.xpose.msra.mxu0 0
      %768 = vmatprep.subr.bf16.mxu0 0
      %769 = vmatpush1.bf16.xpose.msra.mxu0 0
      %770 = vmatprep.subr.bf16.mxu0 0
      %771 = vmatpush1.bf16.xpose.msra.mxu0 0
      %772 = vmatprep.subr.bf16.mxu0 0
      %773 = vmatpush1.bf16.xpose.msra.mxu0 0
      %774 = vmatprep.subr.bf16.mxu0 0
      %775 = vmatpush1.bf16.xpose.msra.mxu0 0
      %776 = vmatprep.subr.bf16.mxu0 0
      %777 = vmatpush1.bf16.xpose.msra.mxu0 0
      %778 = vmatprep.subr.bf16.mxu0 0
      %779 = vmatpush1.bf16.xpose.msra.mxu0 0
      %780 = vmatprep.mubr.bf16.mxu0 0
      %781 = vmatmul.mubr.bf16.gmra.mrb[0].mxu0 %v743
      %v782 = vpop.f32.mrb[0].mxu0
      %v783 = vadd.f32 0.0, %v782
      %v784 = vpop.f32.mrb[0].mxu0
      %v785 = vpop.f32.mrb[0].mxu0
      %v786 = vpop.f32.mrb[0].mxu0
      %787 = vdwg.mxu0
      %788 = vrot.lane.b32.xlu0 %v449, 96
      %v789 = vpop.permute.xlu0 %788
      %v791 = vsel %vm501, %v449, 0
      %v794 = vsel %vm501, %v789, 0
      %796 = vmatprep.subr.bf16.mxu0 0
      %797 = vmatpush1.bf16.xpose.msra.mxu0 %v794
      %798 = vmatprep.subr.bf16.mxu0 0
      %799 = vmatpush1.bf16.xpose.msra.mxu0 0
      %800 = vmatprep.subr.bf16.mxu0 0
      %801 = vmatpush1.bf16.xpose.msra.mxu0 0
      %802 = vmatprep.subr.bf16.mxu0 0
      %803 = vmatpush1.bf16.xpose.msra.mxu0 0
      %804 = vmatprep.subr.bf16.mxu0 0
      %805 = vmatpush1.bf16.xpose.msra.mxu0 0
      %806 = vmatprep.subr.bf16.mxu0 0
      %807 = vmatpush1.bf16.xpose.msra.mxu0 0
      %808 = vmatprep.subr.bf16.mxu0 0
      %809 = vmatpush1.bf16.xpose.msra.mxu0 0
      %810 = vmatprep.subr.bf16.mxu0 0
      %811 = vmatpush1.bf16.xpose.msra.mxu0 0
      %812 = vmatprep.subr.bf16.mxu0 0
      %813 = vmatpush1.bf16.xpose.msra.mxu0 0
      %814 = vmatprep.subr.bf16.mxu0 0
      %815 = vmatpush1.bf16.xpose.msra.mxu0 0
      %816 = vmatprep.subr.bf16.mxu0 0
      %817 = vmatpush1.bf16.xpose.msra.mxu0 0
      %818 = vmatprep.subr.bf16.mxu0 0
      %819 = vmatpush1.bf16.xpose.msra.mxu0 0
      %820 = vmatprep.subr.bf16.mxu0 0
      %821 = vmatpush1.bf16.xpose.msra.mxu0 0
      %822 = vmatprep.subr.bf16.mxu0 0
      %823 = vmatpush1.bf16.xpose.msra.mxu0 0
      %824 = vmatprep.subr.bf16.mxu0 0
      %825 = vmatpush1.bf16.xpose.msra.mxu0 0
      %826 = vmatprep.subr.bf16.mxu0 0
      %827 = vmatpush1.bf16.xpose.msra.mxu0 0
      %828 = vmatprep.mubr.bf16.mxu0 0
      %829 = vmatmul.mubr.bf16.gmra.mrb[0].mxu0 %v791
      %v830 = vpop.f32.mrb[0].mxu0
      %v831 = vadd.f32 0.0, %v830
      %v832 = vpop.f32.mrb[0].mxu0
      %v833 = vpop.f32.mrb[0].mxu0
      %v834 = vpop.f32.mrb[0].mxu0
      %835 = vdwg.mxu0
      %836 = vrot.lane.b32.xlu0 %v450, 96
      %v837 = vpop.permute.xlu0 %836
      %v839 = vsel %vm501, %v450, 0
      %v842 = vsel %vm501, %v837, 0
      %844 = vmatprep.subr.bf16.mxu0 0
      %845 = vmatpush1.bf16.xpose.msra.mxu0 %v842
      %846 = vmatprep.subr.bf16.mxu0 0
      %847 = vmatpush1.bf16.xpose.msra.mxu0 0
      %848 = vmatprep.subr.bf16.mxu0 0
      %849 = vmatpush1.bf16.xpose.msra.mxu0 0
      %850 = vmatprep.subr.bf16.mxu0 0
      %851 = vmatpush1.bf16.xpose.msra.mxu0 0
      %852 = vmatprep.subr.bf16.mxu0 0
      %853 = vmatpush1.bf16.xpose.msra.mxu0 0
      %854 = vmatprep.subr.bf16.mxu0 0
      %855 = vmatpush1.bf16.xpose.msra.mxu0 0
      %856 = vmatprep.subr.bf16.mxu0 0
      %857 = vmatpush1.bf16.xpose.msra.mxu0 0
      %858 = vmatprep.subr.bf16.mxu0 0
      %859 = vmatpush1.bf16.xpose.msra.mxu0 0
      %860 = vmatprep.subr.bf16.mxu0 0
      %861 = vmatpush1.bf16.xpose.msra.mxu0 0
      %862 = vmatprep.subr.bf16.mxu0 0
      %863 = vmatpush1.bf16.xpose.msra.mxu0 0
      %864 = vmatprep.subr.bf16.mxu0 0
      %865 = vmatpush1.bf16.xpose.msra.mxu0 0
      %866 = vmatprep.subr.bf16.mxu0 0
      %867 = vmatpush1.bf16.xpose.msra.mxu0 0
      %868 = vmatprep.subr.bf16.mxu0 0
      %869 = vmatpush1.bf16.xpose.msra.mxu0 0
      %870 = vmatprep.subr.bf16.mxu0 0
      %871 = vmatpush1.bf16.xpose.msra.mxu0 0
      %872 = vmatprep.subr.bf16.mxu0 0
      %873 = vmatpush1.bf16.xpose.msra.mxu0 0
      %874 = vmatprep.subr.bf16.mxu0 0
      %875 = vmatpush1.bf16.xpose.msra.mxu0 0
      %876 = vmatprep.mubr.bf16.mxu0 0
      %877 = vmatmul.mubr.bf16.gmra.mrb[0].mxu0 %v839
      %v878 = vpop.f32.mrb[0].mxu0
      %v879 = vadd.f32 0.0, %v878
      %v880 = vpop.f32.mrb[0].mxu0
      %v881 = vpop.f32.mrb[0].mxu0
      %v882 = vpop.f32.mrb[0].mxu0
      %883 = vdwg.mxu0
      %v884 = vunpack.c.l.b16 %v452
      %v885 = vpack.c.b16 %v884, %v884
      %886 = vrot.lane.b32.xlu0 %v885, 96
      %v887 = vpop.permute.xlu0 %886
      %v889 = vsel %vm501, %v452, 0
      %v892 = vsel %vm501, %v887, 0
      %894 = vmatprep.subr.bf16.mxu0 0
      %895 = vmatpush1.bf16.xpose.msra.mxu0 %v892
      %896 = vmatprep.subr.bf16.mxu0 0
      %897 = vmatpush1.bf16.xpose.msra.mxu0 0
      %898 = vmatprep.subr.bf16.mxu0 0
      %899 = vmatpush1.bf16.xpose.msra.mxu0 0
      %900 = vmatprep.subr.bf16.mxu0 0
      %901 = vmatpush1.bf16.xpose.msra.mxu0 0
      %902 = vmatprep.subr.bf16.mxu0 0
      %903 = vmatpush1.bf16.xpose.msra.mxu0 0
      %904 = vmatprep.subr.bf16.mxu0 0
      %905 = vmatpush1.bf16.xpose.msra.mxu0 0
      %906 = vmatprep.subr.bf16.mxu0 0
      %907 = vmatpush1.bf16.xpose.msra.mxu0 0
      %908 = vmatprep.subr.bf16.mxu0 0
      %909 = vmatpush1.bf16.xpose.msra.mxu0 0
      %910 = vmatprep.subr.bf16.mxu0 0
      %911 = vmatpush1.bf16.xpose.msra.mxu0 0
      %912 = vmatprep.subr.bf16.mxu0 0
      %913 = vmatpush1.bf16.xpose.msra.mxu0 0
      %914 = vmatprep.subr.bf16.mxu0 0
      %915 = vmatpush1.bf16.xpose.msra.mxu0 0
      %916 = vmatprep.subr.bf16.mxu0 0
      %917 = vmatpush1.bf16.xpose.msra.mxu0 0
      %918 = vmatprep.subr.bf16.mxu0 0
      %919 = vmatpush1.bf16.xpose.msra.mxu0 0
      %920 = vmatprep.subr.bf16.mxu0 0
      %921 = vmatpush1.bf16.xpose.msra.mxu0 0
      %922 = vmatprep.subr.bf16.mxu0 0
      %923 = vmatpush1.bf16.xpose.msra.mxu0 0
      %924 = vmatprep.subr.bf16.mxu0 0
      %925 = vmatpush1.bf16.xpose.msra.mxu0 0
      %926 = vmatprep.mubr.bf16.mxu0 0
      %927 = vmatmul.mubr.bf16.gmra.mrb[0].mxu0 %v889
      %v928 = vpop.f32.mrb[0].mxu0
      %v929 = vadd.f32 0.0, %v928
      %v930 = vpop.f32.mrb[0].mxu0
      %v931 = vpop.f32.mrb[0].mxu0
      %v932 = vpop.f32.mrb[0].mxu0
      %933 = vdwg.mxu0
      %v934 = vunpack.c.l.b16 %v454
      %v935 = vpack.c.b16 %v934, %v934
      %936 = vrot.lane.b32.xlu0 %v935, 96
      %v937 = vpop.permute.xlu0 %936
      %v939 = vsel %vm501, %v454, 0
      %v942 = vsel %vm501, %v937, 0
      %944 = vmatprep.subr.bf16.mxu0 0
      %945 = vmatpush1.bf16.xpose.msra.mxu0 %v942
      %946 = vmatprep.subr.bf16.mxu0 0
      %947 = vmatpush1.bf16.xpose.msra.mxu0 0
      %948 = vmatprep.subr.bf16.mxu0 0
      %949 = vmatpush1.bf16.xpose.msra.mxu0 0
      %950 = vmatprep.subr.bf16.mxu0 0
      %951 = vmatpush1.bf16.xpose.msra.mxu0 0
      %952 = vmatprep.subr.bf16.mxu0 0
      %953 = vmatpush1.bf16.xpose.msra.mxu0 0
      %954 = vmatprep.subr.bf16.mxu0 0
      %955 = vmatpush1.bf16.xpose.msra.mxu0 0
      %956 = vmatprep.subr.bf16.mxu0 0
      %957 = vmatpush1.bf16.xpose.msra.mxu0 0
      %958 = vmatprep.subr.bf16.mxu0 0
      %959 = vmatpush1.bf16.xpose.msra.mxu0 0
      %960 = vmatprep.subr.bf16.mxu0 0
      %961 = vmatpush1.bf16.xpose.msra.mxu0 0
      %962 = vmatprep.subr.bf16.mxu0 0
      %963 = vmatpush1.bf16.xpose.msra.mxu0 0
      %964 = vmatprep.subr.bf16.mxu0 0
      %965 = vmatpush1.bf16.xpose.msra.mxu0 0
      %966 = vmatprep.subr.bf16.mxu0 0
      %967 = vmatpush1.bf16.xpose.msra.mxu0 0
      %968 = vmatprep.subr.bf16.mxu0 0
      %969 = vmatpush1.bf16.xpose.msra.mxu0 0
      %970 = vmatprep.subr.bf16.mxu0 0
      %971 = vmatpush1.bf16.xpose.msra.mxu0 0
      %972 = vmatprep.subr.bf16.mxu0 0
      %973 = vmatpush1.bf16.xpose.msra.mxu0 0
      %974 = vmatprep.subr.bf16.mxu0 0
      %975 = vmatpush1.bf16.xpose.msra.mxu0 0
      %976 = vmatprep.mubr.bf16.mxu0 0
      %977 = vmatmul.mubr.bf16.gmra.mrb[0].mxu0 %v939
      %v978 = vpop.f32.mrb[0].mxu0
      %v979 = vadd.f32 0.0, %v978
      %v980 = vpop.f32.mrb[0].mxu0
      %v981 = vpop.f32.mrb[0].mxu0
      %v982 = vpop.f32.mrb[0].mxu0
      %983 = vdwg.mxu0
      %v984 = vunpack.c.l.b16 %v456
      %v985 = vpack.c.b16 %v984, %v984
      %986 = vrot.lane.b32.xlu0 %v985, 96
      %v987 = vpop.permute.xlu0 %986
      %v989 = vsel %vm501, %v456, 0
      %v992 = vsel %vm501, %v987, 0
      %994 = vmatprep.subr.bf16.mxu0 0
      %995 = vmatpush1.bf16.xpose.msra.mxu0 %v992
      %996 = vmatprep.subr.bf16.mxu0 0
      %997 = vmatpush1.bf16.xpose.msra.mxu0 0
      %998 = vmatprep.subr.bf16.mxu0 0
      %999 = vmatpush1.bf16.xpose.msra.mxu0 0
      %1000 = vmatprep.subr.bf16.mxu0 0
      %1001 = vmatpush1.bf16.xpose.msra.mxu0 0
      %1002 = vmatprep.subr.bf16.mxu0 0
      %1003 = vmatpush1.bf16.xpose.msra.mxu0 0
      %1004 = vmatprep.subr.bf16.mxu0 0
      %1005 = vmatpush1.bf16.xpose.msra.mxu0 0
      %1006 = vmatprep.subr.bf16.mxu0 0
      %1007 = vmatpush1.bf16.xpose.msra.mxu0 0
      %1008 = vmatprep.subr.bf16.mxu0 0
      %1009 = vmatpush1.bf16.xpose.msra.mxu0 0
      %1010 = vmatprep.subr.bf16.mxu0 0
      %1011 = vmatpush1.bf16.xpose.msra.mxu0 0
      %1012 = vmatprep.subr.bf16.mxu0 0
      %1013 = vmatpush1.bf16.xpose.msra.mxu0 0
      %1014 = vmatprep.subr.bf16.mxu0 0
      %1015 = vmatpush1.bf16.xpose.msra.mxu0 0
      %1016 = vmatprep.subr.bf16.mxu0 0
      %1017 = vmatpush1.bf16.xpose.msra.mxu0 0
      %1018 = vmatprep.subr.bf16.mxu0 0
      %1019 = vmatpush1.bf16.xpose.msra.mxu0 0
      %1020 = vmatprep.subr.bf16.mxu0 0
      %1021 = vmatpush1.bf16.xpose.msra.mxu0 0
      %1022 = vmatprep.subr.bf16.mxu0 0
      %1023 = vmatpush1.bf16.xpose.msra.mxu0 0
      %1024 = vmatprep.subr.bf16.mxu0 0
      %1025 = vmatpush1.bf16.xpose.msra.mxu0 0
      %1026 = vmatprep.mubr.bf16.mxu0 0
      %1027 = vmatmul.mubr.bf16.gmra.mrb[0].mxu0 %v989
      %v1028 = vpop.f32.mrb[0].mxu0
      %v1029 = vadd.f32 0.0, %v1028
      %v1030 = vpop.f32.mrb[0].mxu0
      %v1031 = vpop.f32.mrb[0].mxu0
      %v1032 = vpop.f32.mrb[0].mxu0
      %1033 = vdwg.mxu0
      %v1034 = vunpack.c.l.b16 %v458
      %v1035 = vpack.c.b16 %v1034, %v1034
      %1036 = vrot.lane.b32.xlu0 %v1035, 96
      %v1037 = vpop.permute.xlu0 %1036
      %v1039 = vsel %vm501, %v458, 0
      %v1042 = vsel %vm501, %v1037, 0
      %1044 = vmatprep.subr.bf16.mxu0 0
      %1045 = vmatpush1.bf16.xpose.msra.mxu0 %v1042
      %1046 = vmatprep.subr.bf16.mxu0 0
      %1047 = vmatpush1.bf16.xpose.msra.mxu0 0
      %1048 = vmatprep.subr.bf16.mxu0 0
      %1049 = vmatpush1.bf16.xpose.msra.mxu0 0
      %1050 = vmatprep.subr.bf16.mxu0 0
      %1051 = vmatpush1.bf16.xpose.msra.mxu0 0
      %1052 = vmatprep.subr.bf16.mxu0 0
      %1053 = vmatpush1.bf16.xpose.msra.mxu0 0
      %1054 = vmatprep.subr.bf16.mxu0 0
      %1055 = vmatpush1.bf16.xpose.msra.mxu0 0
      %1056 = vmatprep.subr.bf16.mxu0 0
      %1057 = vmatpush1.bf16.xpose.msra.mxu0 0
      %1058 = vmatprep.subr.bf16.mxu0 0
      %1059 = vmatpush1.bf16.xpose.msra.mxu0 0
      %1060 = vmatprep.subr.bf16.mxu0 0
      %1061 = vmatpush1.bf16.xpose.msra.mxu0 0
      %1062 = vmatprep.subr.bf16.mxu0 0
      %1063 = vmatpush1.bf16.xpose.msra.mxu0 0
      %1064 = vmatprep.subr.bf16.mxu0 0
      %1065 = vmatpush1.bf16.xpose.msra.mxu0 0
      %1066 = vmatprep.subr.bf16.mxu0 0
      %1067 = vmatpush1.bf16.xpose.msra.mxu0 0
      %1068 = vmatprep.subr.bf16.mxu0 0
      %1069 = vmatpush1.bf16.xpose.msra.mxu0 0
      %1070 = vmatprep.subr.bf16.mxu0 0
      %1071 = vmatpush1.bf16.xpose.msra.mxu0 0
      %1072 = vmatprep.subr.bf16.mxu0 0
      %1073 = vmatpush1.bf16.xpose.msra.mxu0 0
      %1074 = vmatprep.subr.bf16.mxu0 0
      %1075 = vmatpush1.bf16.xpose.msra.mxu0 0
      %1076 = vmatprep.mubr.bf16.mxu0 0
      %1077 = vmatmul.mubr.bf16.gmra.mrb[0].mxu0 %v1039
      %v1078 = vpop.f32.mrb[0].mxu0
      %v1079 = vadd.f32 0.0, %v1078
      %v1080 = vpop.f32.mrb[0].mxu0
      %v1081 = vpop.f32.mrb[0].mxu0
      %v1082 = vpop.f32.mrb[0].mxu0
      %1083 = vdwg.mxu0
      %v1084 = vunpack.c.l.b16 %v460
      %v1085 = vpack.c.b16 %v1084, %v1084
      %1086 = vrot.lane.b32.xlu0 %v1085, 96
      %v1087 = vpop.permute.xlu0 %1086
      %v1089 = vsel %vm501, %v460, 0
      %v1092 = vsel %vm501, %v1087, 0
      %1094 = vmatprep.subr.bf16.mxu0 0
      %1095 = vmatpush1.bf16.xpose.msra.mxu0 %v1092
      %1096 = vmatprep.subr.bf16.mxu0 0
      %1097 = vmatpush1.bf16.xpose.msra.mxu0 0
      %1098 = vmatprep.subr.bf16.mxu0 0
      %1099 = vmatpush1.bf16.xpose.msra.mxu0 0
      %1100 = vmatprep.subr.bf16.mxu0 0
      %1101 = vmatpush1.bf16.xpose.msra.mxu0 0
      %1102 = vmatprep.subr.bf16.mxu0 0
      %1103 = vmatpush1.bf16.xpose.msra.mxu0 0
      %1104 = vmatprep.subr.bf16.mxu0 0
      %1105 = vmatpush1.bf16.xpose.msra.mxu0 0
      %1106 = vmatprep.subr.bf16.mxu0 0
      %1107 = vmatpush1.bf16.xpose.msra.mxu0 0
      %1108 = vmatprep.subr.bf16.mxu0 0
      %1109 = vmatpush1.bf16.xpose.msra.mxu0 0
      %1110 = vmatprep.subr.bf16.mxu0 0
      %1111 = vmatpush1.bf16.xpose.msra.mxu0 0
      %1112 = vmatprep.subr.bf16.mxu0 0
      %1113 = vmatpush1.bf16.xpose.msra.mxu0 0
      %1114 = vmatprep.subr.bf16.mxu0 0
      %1115 = vmatpush1.bf16.xpose.msra.mxu0 0
      %1116 = vmatprep.subr.bf16.mxu0 0
      %1117 = vmatpush1.bf16.xpose.msra.mxu0 0
      %1118 = vmatprep.subr.bf16.mxu0 0
      %1119 = vmatpush1.bf16.xpose.msra.mxu0 0
      %1120 = vmatprep.subr.bf16.mxu0 0
      %1121 = vmatpush1.bf16.xpose.msra.mxu0 0
      %1122 = vmatprep.subr.bf16.mxu0 0
      %1123 = vmatpush1.bf16.xpose.msra.mxu0 0
      %1124 = vmatprep.subr.bf16.mxu0 0
      %1125 = vmatpush1.bf16.xpose.msra.mxu0 0
      %1126 = vmatprep.mubr.bf16.mxu0 0
      %1127 = vmatmul.mubr.bf16.gmra.mrb[0].mxu0 %v1089
      %v1128 = vpop.f32.mrb[0].mxu0
      %v1129 = vadd.f32 0.0, %v1128
      %v1130 = vpop.f32.mrb[0].mxu0
      %v1131 = vpop.f32.mrb[0].mxu0
      %v1132 = vpop.f32.mrb[0].mxu0
      %1133 = vdwg.mxu0
      %v1134 = vunpack.c.l.b16 %v462
      %v1135 = vpack.c.b16 %v1134, %v1134
      %1136 = vrot.lane.b32.xlu0 %v1135, 96
      %v1137 = vpop.permute.xlu0 %1136
      %v1139 = vsel %vm501, %v462, 0
      %v1142 = vsel %vm501, %v1137, 0
      %1144 = vmatprep.subr.bf16.mxu0 0
      %1145 = vmatpush1.bf16.xpose.msra.mxu0 %v1142
      %1146 = vmatprep.subr.bf16.mxu0 0
      %1147 = vmatpush1.bf16.xpose.msra.mxu0 0
      %1148 = vmatprep.subr.bf16.mxu0 0
      %1149 = vmatpush1.bf16.xpose.msra.mxu0 0
      %1150 = vmatprep.subr.bf16.mxu0 0
      %1151 = vmatpush1.bf16.xpose.msra.mxu0 0
      %1152 = vmatprep.subr.bf16.mxu0 0
      %1153 = vmatpush1.bf16.xpose.msra.mxu0 0
      %1154 = vmatprep.subr.bf16.mxu0 0
      %1155 = vmatpush1.bf16.xpose.msra.mxu0 0
      %1156 = vmatprep.subr.bf16.mxu0 0
      %1157 = vmatpush1.bf16.xpose.msra.mxu0 0
      %1158 = vmatprep.subr.bf16.mxu0 0
      %1159 = vmatpush1.bf16.xpose.msra.mxu0 0
      %1160 = vmatprep.subr.bf16.mxu0 0
      %1161 = vmatpush1.bf16.xpose.msra.mxu0 0
      %1162 = vmatprep.subr.bf16.mxu0 0
      %1163 = vmatpush1.bf16.xpose.msra.mxu0 0
      %1164 = vmatprep.subr.bf16.mxu0 0
      %1165 = vmatpush1.bf16.xpose.msra.mxu0 0
      %1166 = vmatprep.subr.bf16.mxu0 0
      %1167 = vmatpush1.bf16.xpose.msra.mxu0 0
      %1168 = vmatprep.subr.bf16.mxu0 0
      %1169 = vmatpush1.bf16.xpose.msra.mxu0 0
      %1170 = vmatprep.subr.bf16.mxu0 0
      %1171 = vmatpush1.bf16.xpose.msra.mxu0 0
      %1172 = vmatprep.subr.bf16.mxu0 0
      %1173 = vmatpush1.bf16.xpose.msra.mxu0 0
      %1174 = vmatprep.subr.bf16.mxu0 0
      %1175 = vmatpush1.bf16.xpose.msra.mxu0 0
      %1176 = vmatprep.mubr.bf16.mxu0 0
      %1177 = vmatmul.mubr.bf16.gmra.mrb[0].mxu0 %v1139
      %v1178 = vpop.f32.mrb[0].mxu0
      %v1179 = vadd.f32 0.0, %v1178
      %v1180 = vpop.f32.mrb[0].mxu0
      %v1181 = vpop.f32.mrb[0].mxu0
      %v1182 = vpop.f32.mrb[0].mxu0
      %1183 = vdwg.mxu0
      %v1184 = vunpack.c.l.b16 %v464
      %v1185 = vpack.c.b16 %v1184, %v1184
      %1186 = vrot.lane.b32.xlu0 %v1185, 96
      %v1187 = vpop.permute.xlu0 %1186
      %v1189 = vsel %vm501, %v464, 0
      %v1192 = vsel %vm501, %v1187, 0
      %1194 = vmatprep.subr.bf16.mxu0 0
      %1195 = vmatpush1.bf16.xpose.msra.mxu0 %v1192
      %1196 = vmatprep.subr.bf16.mxu0 0
      %1197 = vmatpush1.bf16.xpose.msra.mxu0 0
      %1198 = vmatprep.subr.bf16.mxu0 0
      %1199 = vmatpush1.bf16.xpose.msra.mxu0 0
      %1200 = vmatprep.subr.bf16.mxu0 0
      %1201 = vmatpush1.bf16.xpose.msra.mxu0 0
      %1202 = vmatprep.subr.bf16.mxu0 0
      %1203 = vmatpush1.bf16.xpose.msra.mxu0 0
      %1204 = vmatprep.subr.bf16.mxu0 0
      %1205 = vmatpush1.bf16.xpose.msra.mxu0 0
      %1206 = vmatprep.subr.bf16.mxu0 0
      %1207 = vmatpush1.bf16.xpose.msra.mxu0 0
      %1208 = vmatprep.subr.bf16.mxu0 0
      %1209 = vmatpush1.bf16.xpose.msra.mxu0 0
      %1210 = vmatprep.subr.bf16.mxu0 0
      %1211 = vmatpush1.bf16.xpose.msra.mxu0 0
      %1212 = vmatprep.subr.bf16.mxu0 0
      %1213 = vmatpush1.bf16.xpose.msra.mxu0 0
      %1214 = vmatprep.subr.bf16.mxu0 0
      %1215 = vmatpush1.bf16.xpose.msra.mxu0 0
      %1216 = vmatprep.subr.bf16.mxu0 0
      %1217 = vmatpush1.bf16.xpose.msra.mxu0 0
      %1218 = vmatprep.subr.bf16.mxu0 0
      %1219 = vmatpush1.bf16.xpose.msra.mxu0 0
      %1220 = vmatprep.subr.bf16.mxu0 0
      %1221 = vmatpush1.bf16.xpose.msra.mxu0 0
      %1222 = vmatprep.subr.bf16.mxu0 0
      %1223 = vmatpush1.bf16.xpose.msra.mxu0 0
      %1224 = vmatprep.subr.bf16.mxu0 0
      %1225 = vmatpush1.bf16.xpose.msra.mxu0 0
      %1226 = vmatprep.mubr.bf16.mxu0 0
      %1227 = vmatmul.mubr.bf16.gmra.mrb[0].mxu0 %v1189
      %v1228 = vpop.f32.mrb[0].mxu0
      %v1229 = vadd.f32 0.0, %v1228
      %v1230 = vpop.f32.mrb[0].mxu0
      %v1231 = vpop.f32.mrb[0].mxu0
      %v1232 = vpop.f32.mrb[0].mxu0
      %1233 = vdwg.mxu0
      %v1234 = vunpack.c.l.b16 %v466
      %v1235 = vpack.c.b16 %v1234, %v1234
      %1236 = vrot.lane.b32.xlu0 %v1235, 96
      %v1237 = vpop.permute.xlu0 %1236
      %v1239 = vsel %vm501, %v466, 0
      %v1242 = vsel %vm501, %v1237, 0
      %1244 = vmatprep.subr.bf16.mxu0 0
      %1245 = vmatpush1.bf16.xpose.msra.mxu0 %v1242
      %1246 = vmatprep.subr.bf16.mxu0 0
      %1247 = vmatpush1.bf16.xpose.msra.mxu0 0
      %1248 = vmatprep.subr.bf16.mxu0 0
      %1249 = vmatpush1.bf16.xpose.msra.mxu0 0
      %1250 = vmatprep.subr.bf16.mxu0 0
      %1251 = vmatpush1.bf16.xpose.msra.mxu0 0
      %1252 = vmatprep.subr.bf16.mxu0 0
      %1253 = vmatpush1.bf16.xpose.msra.mxu0 0
      %1254 = vmatprep.subr.bf16.mxu0 0
      %1255 = vmatpush1.bf16.xpose.msra.mxu0 0
      %1256 = vmatprep.subr.bf16.mxu0 0
      %1257 = vmatpush1.bf16.xpose.msra.mxu0 0
      %1258 = vmatprep.subr.bf16.mxu0 0
      %1259 = vmatpush1.bf16.xpose.msra.mxu0 0
      %1260 = vmatprep.subr.bf16.mxu0 0
      %1261 = vmatpush1.bf16.xpose.msra.mxu0 0
      %1262 = vmatprep.subr.bf16.mxu0 0
      %1263 = vmatpush1.bf16.xpose.msra.mxu0 0
      %1264 = vmatprep.subr.bf16.mxu0 0
      %1265 = vmatpush1.bf16.xpose.msra.mxu0 0
      %1266 = vmatprep.subr.bf16.mxu0 0
      %1267 = vmatpush1.bf16.xpose.msra.mxu0 0
      %1268 = vmatprep.subr.bf16.mxu0 0
      %1269 = vmatpush1.bf16.xpose.msra.mxu0 0
      %1270 = vmatprep.subr.bf16.mxu0 0
      %1271 = vmatpush1.bf16.xpose.msra.mxu0 0
      %1272 = vmatprep.subr.bf16.mxu0 0
      %1273 = vmatpush1.bf16.xpose.msra.mxu0 0
      %1274 = vmatprep.subr.bf16.mxu0 0
      %1275 = vmatpush1.bf16.xpose.msra.mxu0 0
      %1276 = vmatprep.mubr.bf16.mxu0 0
      %1277 = vmatmul.mubr.bf16.gmra.mrb[0].mxu0 %v1239
      %v1278 = vpop.f32.mrb[0].mxu0
      %v1279 = vadd.f32 0.0, %v1278
      %v1280 = vpop.f32.mrb[0].mxu0
      %v1281 = vpop.f32.mrb[0].mxu0
      %v1282 = vpop.f32.mrb[0].mxu0
      %1283 = vdwg.mxu0
      %v1284 = vunpack.c.l.b16 %v468
      %v1285 = vpack.c.b16 %v1284, %v1284
      %1286 = vrot.lane.b32.xlu0 %v1285, 96
      %v1287 = vpop.permute.xlu0 %1286
      %v1289 = vsel %vm501, %v468, 0
      %v1292 = vsel %vm501, %v1287, 0
      %1294 = vmatprep.subr.bf16.mxu0 0
      %1295 = vmatpush1.bf16.xpose.msra.mxu0 %v1292
      %1296 = vmatprep.subr.bf16.mxu0 0
      %1297 = vmatpush1.bf16.xpose.msra.mxu0 0
      %1298 = vmatprep.subr.bf16.mxu0 0
      %1299 = vmatpush1.bf16.xpose.msra.mxu0 0
      %1300 = vmatprep.subr.bf16.mxu0 0
      %1301 = vmatpush1.bf16.xpose.msra.mxu0 0
      %1302 = vmatprep.subr.bf16.mxu0 0
      %1303 = vmatpush1.bf16.xpose.msra.mxu0 0
      %1304 = vmatprep.subr.bf16.mxu0 0
      %1305 = vmatpush1.bf16.xpose.msra.mxu0 0
      %1306 = vmatprep.subr.bf16.mxu0 0
      %1307 = vmatpush1.bf16.xpose.msra.mxu0 0
      %1308 = vmatprep.subr.bf16.mxu0 0
      %1309 = vmatpush1.bf16.xpose.msra.mxu0 0
      %1310 = vmatprep.subr.bf16.mxu0 0
      %1311 = vmatpush1.bf16.xpose.msra.mxu0 0
      %1312 = vmatprep.subr.bf16.mxu0 0
      %1313 = vmatpush1.bf16.xpose.msra.mxu0 0
      %1314 = vmatprep.subr.bf16.mxu0 0
      %1315 = vmatpush1.bf16.xpose.msra.mxu0 0
      %1316 = vmatprep.subr.bf16.mxu0 0
      %1317 = vmatpush1.bf16.xpose.msra.mxu0 0
      %1318 = vmatprep.subr.bf16.mxu0 0
      %1319 = vmatpush1.bf16.xpose.msra.mxu0 0
      %1320 = vmatprep.subr.bf16.mxu0 0
      %1321 = vmatpush1.bf16.xpose.msra.mxu0 0
      %1322 = vmatprep.subr.bf16.mxu0 0
      %1323 = vmatpush1.bf16.xpose.msra.mxu0 0
      %1324 = vmatprep.subr.bf16.mxu0 0
      %1325 = vmatpush1.bf16.xpose.msra.mxu0 0
      %1326 = vmatprep.mubr.bf16.mxu0 0
      %1327 = vmatmul.mubr.bf16.gmra.mrb[0].mxu0 %v1289
      %v1328 = vpop.f32.mrb[0].mxu0
      %v1329 = vadd.f32 0.0, %v1328
      %v1330 = vpop.f32.mrb[0].mxu0
      %v1331 = vpop.f32.mrb[0].mxu0
      %v1332 = vpop.f32.mrb[0].mxu0
      %1333 = vdwg.mxu0
      %v1334 = vunpack.c.l.b16 %v470
      %v1335 = vpack.c.b16 %v1334, %v1334
      %1336 = vrot.lane.b32.xlu0 %v1335, 96
      %v1337 = vpop.permute.xlu0 %1336
      %v1339 = vsel %vm501, %v470, 0
      %v1342 = vsel %vm501, %v1337, 0
      %1344 = vmatprep.subr.bf16.mxu0 0
      %1345 = vmatpush1.bf16.xpose.msra.mxu0 %v1342
      %1346 = vmatprep.subr.bf16.mxu0 0
      %1347 = vmatpush1.bf16.xpose.msra.mxu0 0
      %1348 = vmatprep.subr.bf16.mxu0 0
      %1349 = vmatpush1.bf16.xpose.msra.mxu0 0
      %1350 = vmatprep.subr.bf16.mxu0 0
      %1351 = vmatpush1.bf16.xpose.msra.mxu0 0
      %1352 = vmatprep.subr.bf16.mxu0 0
      %1353 = vmatpush1.bf16.xpose.msra.mxu0 0
      %1354 = vmatprep.subr.bf16.mxu0 0
      %1355 = vmatpush1.bf16.xpose.msra.mxu0 0
      %1356 = vmatprep.subr.bf16.mxu0 0
      %1357 = vmatpush1.bf16.xpose.msra.mxu0 0
      %1358 = vmatprep.subr.bf16.mxu0 0
      %1359 = vmatpush1.bf16.xpose.msra.mxu0 0
      %1360 = vmatprep.subr.bf16.mxu0 0
      %1361 = vmatpush1.bf16.xpose.msra.mxu0 0
      %1362 = vmatprep.subr.bf16.mxu0 0
      %1363 = vmatpush1.bf16.xpose.msra.mxu0 0
      %1364 = vmatprep.subr.bf16.mxu0 0
      %1365 = vmatpush1.bf16.xpose.msra.mxu0 0
      %1366 = vmatprep.subr.bf16.mxu0 0
      %1367 = vmatpush1.bf16.xpose.msra.mxu0 0
      %1368 = vmatprep.subr.bf16.mxu0 0
      %1369 = vmatpush1.bf16.xpose.msra.mxu0 0
      %1370 = vmatprep.subr.bf16.mxu0 0
      %1371 = vmatpush1.bf16.xpose.msra.mxu0 0
      %1372 = vmatprep.subr.bf16.mxu0 0
      %1373 = vmatpush1.bf16.xpose.msra.mxu0 0
      %1374 = vmatprep.subr.bf16.mxu0 0
      %1375 = vmatpush1.bf16.xpose.msra.mxu0 0
      %1376 = vmatprep.mubr.bf16.mxu0 0
      %1377 = vmatmul.mubr.bf16.gmra.mrb[0].mxu0 %v1339
      %v1378 = vpop.f32.mrb[0].mxu0
      %v1379 = vadd.f32 0.0, %v1378
      %v1380 = vpop.f32.mrb[0].mxu0
      %v1381 = vpop.f32.mrb[0].mxu0
      %v1382 = vpop.f32.mrb[0].mxu0
      %1383 = vdwg.mxu0
      %v1384 = vunpack.c.l.b16 %v472
      %v1385 = vpack.c.b16 %v1384, %v1384
      %1386 = vrot.lane.b32.xlu0 %v1385, 96
      %v1387 = vpop.permute.xlu0 %1386
      %v1389 = vsel %vm501, %v472, 0
      %v1392 = vsel %vm501, %v1387, 0
      %1394 = vmatprep.subr.bf16.mxu0 0
      %1395 = vmatpush1.bf16.xpose.msra.mxu0 %v1392
      %1396 = vmatprep.subr.bf16.mxu0 0
      %1397 = vmatpush1.bf16.xpose.msra.mxu0 0
      %1398 = vmatprep.subr.bf16.mxu0 0
      %1399 = vmatpush1.bf16.xpose.msra.mxu0 0
      %1400 = vmatprep.subr.bf16.mxu0 0
      %1401 = vmatpush1.bf16.xpose.msra.mxu0 0
      %1402 = vmatprep.subr.bf16.mxu0 0
      %1403 = vmatpush1.bf16.xpose.msra.mxu0 0
      %1404 = vmatprep.subr.bf16.mxu0 0
      %1405 = vmatpush1.bf16.xpose.msra.mxu0 0
      %1406 = vmatprep.subr.bf16.mxu0 0
      %1407 = vmatpush1.bf16.xpose.msra.mxu0 0
      %1408 = vmatprep.subr.bf16.mxu0 0
      %1409 = vmatpush1.bf16.xpose.msra.mxu0 0
      %1410 = vmatprep.subr.bf16.mxu0 0
      %1411 = vmatpush1.bf16.xpose.msra.mxu0 0
      %1412 = vmatprep.subr.bf16.mxu0 0
      %1413 = vmatpush1.bf16.xpose.msra.mxu0 0
      %1414 = vmatprep.subr.bf16.mxu0 0
      %1415 = vmatpush1.bf16.xpose.msra.mxu0 0
      %1416 = vmatprep.subr.bf16.mxu0 0
      %1417 = vmatpush1.bf16.xpose.msra.mxu0 0
      %1418 = vmatprep.subr.bf16.mxu0 0
      %1419 = vmatpush1.bf16.xpose.msra.mxu0 0
      %1420 = vmatprep.subr.bf16.mxu0 0
      %1421 = vmatpush1.bf16.xpose.msra.mxu0 0
      %1422 = vmatprep.subr.bf16.mxu0 0
      %1423 = vmatpush1.bf16.xpose.msra.mxu0 0
      %1424 = vmatprep.subr.bf16.mxu0 0
      %1425 = vmatpush1.bf16.xpose.msra.mxu0 0
      %1426 = vmatprep.mubr.bf16.mxu0 0
      %1427 = vmatmul.mubr.bf16.gmra.mrb[0].mxu0 %v1389
      %v1428 = vpop.f32.mrb[0].mxu0
      %v1429 = vadd.f32 0.0, %v1428
      %v1430 = vpop.f32.mrb[0].mxu0
      %v1431 = vpop.f32.mrb[0].mxu0
      %v1432 = vpop.f32.mrb[0].mxu0
      %1433 = vdwg.mxu0
      %v1434 = vunpack.c.l.b16 %v474
      %v1435 = vpack.c.b16 %v1434, %v1434
      %1436 = vrot.lane.b32.xlu0 %v1435, 96
      %v1437 = vpop.permute.xlu0 %1436
      %v1439 = vsel %vm501, %v474, 0
      %v1442 = vsel %vm501, %v1437, 0
      %1444 = vmatprep.subr.bf16.mxu0 0
      %1445 = vmatpush1.bf16.xpose.msra.mxu0 %v1442
      %1446 = vmatprep.subr.bf16.mxu0 0
      %1447 = vmatpush1.bf16.xpose.msra.mxu0 0
      %1448 = vmatprep.subr.bf16.mxu0 0
      %1449 = vmatpush1.bf16.xpose.msra.mxu0 0
      %1450 = vmatprep.subr.bf16.mxu0 0
      %1451 = vmatpush1.bf16.xpose.msra.mxu0 0
      %1452 = vmatprep.subr.bf16.mxu0 0
      %1453 = vmatpush1.bf16.xpose.msra.mxu0 0
      %1454 = vmatprep.subr.bf16.mxu0 0
      %1455 = vmatpush1.bf16.xpose.msra.mxu0 0
      %1456 = vmatprep.subr.bf16.mxu0 0
      %1457 = vmatpush1.bf16.xpose.msra.mxu0 0
      %1458 = vmatprep.subr.bf16.mxu0 0
      %1459 = vmatpush1.bf16.xpose.msra.mxu0 0
      %1460 = vmatprep.subr.bf16.mxu0 0
      %1461 = vmatpush1.bf16.xpose.msra.mxu0 0
      %1462 = vmatprep.subr.bf16.mxu0 0
      %1463 = vmatpush1.bf16.xpose.msra.mxu0 0
      %1464 = vmatprep.subr.bf16.mxu0 0
      %1465 = vmatpush1.bf16.xpose.msra.mxu0 0
      %1466 = vmatprep.subr.bf16.mxu0 0
      %1467 = vmatpush1.bf16.xpose.msra.mxu0 0
      %1468 = vmatprep.subr.bf16.mxu0 0
      %1469 = vmatpush1.bf16.xpose.msra.mxu0 0
      %1470 = vmatprep.subr.bf16.mxu0 0
      %1471 = vmatpush1.bf16.xpose.msra.mxu0 0
      %1472 = vmatprep.subr.bf16.mxu0 0
      %1473 = vmatpush1.bf16.xpose.msra.mxu0 0
      %1474 = vmatprep.subr.bf16.mxu0 0
      %1475 = vmatpush1.bf16.xpose.msra.mxu0 0
      %1476 = vmatprep.mubr.bf16.mxu0 0
      %1477 = vmatmul.mubr.bf16.gmra.mrb[0].mxu0 %v1439
      %v1478 = vpop.f32.mrb[0].mxu0
      %v1479 = vadd.f32 0.0, %v1478
      %v1480 = vpop.f32.mrb[0].mxu0
      %v1481 = vpop.f32.mrb[0].mxu0
      %v1482 = vpop.f32.mrb[0].mxu0
      %1483 = vdwg.mxu0
      %v1484 = vunpack.c.l.b16 %v476
      %v1485 = vpack.c.b16 %v1484, %v1484
      %1486 = vrot.lane.b32.xlu0 %v1485, 96
      %v1487 = vpop.permute.xlu0 %1486
      %v1489 = vsel %vm501, %v476, 0
      %v1492 = vsel %vm501, %v1487, 0
      %1494 = vmatprep.subr.bf16.mxu0 0
      %1495 = vmatpush1.bf16.xpose.msra.mxu0 %v1492
      %1496 = vmatprep.subr.bf16.mxu0 0
      %1497 = vmatpush1.bf16.xpose.msra.mxu0 0
      %1498 = vmatprep.subr.bf16.mxu0 0
      %1499 = vmatpush1.bf16.xpose.msra.mxu0 0
      %1500 = vmatprep.subr.bf16.mxu0 0
      %1501 = vmatpush1.bf16.xpose.msra.mxu0 0
      %1502 = vmatprep.subr.bf16.mxu0 0
      %1503 = vmatpush1.bf16.xpose.msra.mxu0 0
      %1504 = vmatprep.subr.bf16.mxu0 0
      %1505 = vmatpush1.bf16.xpose.msra.mxu0 0
      %1506 = vmatprep.subr.bf16.mxu0 0
      %1507 = vmatpush1.bf16.xpose.msra.mxu0 0
      %1508 = vmatprep.subr.bf16.mxu0 0
      %1509 = vmatpush1.bf16.xpose.msra.mxu0 0
      %1510 = vmatprep.subr.bf16.mxu0 0
      %1511 = vmatpush1.bf16.xpose.msra.mxu0 0
      %1512 = vmatprep.subr.bf16.mxu0 0
      %1513 = vmatpush1.bf16.xpose.msra.mxu0 0
      %1514 = vmatprep.subr.bf16.mxu0 0
      %1515 = vmatpush1.bf16.xpose.msra.mxu0 0
      %1516 = vmatprep.subr.bf16.mxu0 0
      %1517 = vmatpush1.bf16.xpose.msra.mxu0 0
      %1518 = vmatprep.subr.bf16.mxu0 0
      %1519 = vmatpush1.bf16.xpose.msra.mxu0 0
      %1520 = vmatprep.subr.bf16.mxu0 0
      %1521 = vmatpush1.bf16.xpose.msra.mxu0 0
      %1522 = vmatprep.subr.bf16.mxu0 0
      %1523 = vmatpush1.bf16.xpose.msra.mxu0 0
      %1524 = vmatprep.subr.bf16.mxu0 0
      %1525 = vmatpush1.bf16.xpose.msra.mxu0 0
      %1526 = vmatprep.mubr.bf16.mxu0 0
      %1527 = vmatmul.mubr.bf16.gmra.mrb[0].mxu0 %v1489
      %v1528 = vpop.f32.mrb[0].mxu0
      %v1529 = vadd.f32 0.0, %v1528
      %v1530 = vpop.f32.mrb[0].mxu0
      %v1531 = vpop.f32.mrb[0].mxu0
      %v1532 = vpop.f32.mrb[0].mxu0
      %1533 = vdwg.mxu0
      %v1534 = vunpack.c.l.b16 %v478
      %v1535 = vpack.c.b16 %v1534, %v1534
      %1536 = vrot.lane.b32.xlu0 %v1535, 96
      %v1537 = vpop.permute.xlu0 %1536
      %v1539 = vsel %vm501, %v478, 0
      %v1542 = vsel %vm501, %v1537, 0
      %1544 = vmatprep.subr.bf16.mxu0 0
      %1545 = vmatpush1.bf16.xpose.msra.mxu0 %v1542
      %1546 = vmatprep.subr.bf16.mxu0 0
      %1547 = vmatpush1.bf16.xpose.msra.mxu0 0
      %1548 = vmatprep.subr.bf16.mxu0 0
      %1549 = vmatpush1.bf16.xpose.msra.mxu0 0
      %1550 = vmatprep.subr.bf16.mxu0 0
      %1551 = vmatpush1.bf16.xpose.msra.mxu0 0
      %1552 = vmatprep.subr.bf16.mxu0 0
      %1553 = vmatpush1.bf16.xpose.msra.mxu0 0
      %1554 = vmatprep.subr.bf16.mxu0 0
      %1555 = vmatpush1.bf16.xpose.msra.mxu0 0
      %1556 = vmatprep.subr.bf16.mxu0 0
      %1557 = vmatpush1.bf16.xpose.msra.mxu0 0
      %1558 = vmatprep.subr.bf16.mxu0 0
      %1559 = vmatpush1.bf16.xpose.msra.mxu0 0
      %1560 = vmatprep.subr.bf16.mxu0 0
      %1561 = vmatpush1.bf16.xpose.msra.mxu0 0
      %1562 = vmatprep.subr.bf16.mxu0 0
      %1563 = vmatpush1.bf16.xpose.msra.mxu0 0
      %1564 = vmatprep.subr.bf16.mxu0 0
      %1565 = vmatpush1.bf16.xpose.msra.mxu0 0
      %1566 = vmatprep.subr.bf16.mxu0 0
      %1567 = vmatpush1.bf16.xpose.msra.mxu0 0
      %1568 = vmatprep.subr.bf16.mxu0 0
      %1569 = vmatpush1.bf16.xpose.msra.mxu0 0
      %1570 = vmatprep.subr.bf16.mxu0 0
      %1571 = vmatpush1.bf16.xpose.msra.mxu0 0
      %1572 = vmatprep.subr.bf16.mxu0 0
      %1573 = vmatpush1.bf16.xpose.msra.mxu0 0
      %1574 = vmatprep.subr.bf16.mxu0 0
      %1575 = vmatpush1.bf16.xpose.msra.mxu0 0
      %1576 = vmatprep.mubr.bf16.mxu0 0
      %1577 = vmatmul.mubr.bf16.gmra.mrb[0].mxu0 %v1539
      %v1578 = vpop.f32.mrb[0].mxu0
      %v1579 = vadd.f32 0.0, %v1578
      %v1580 = vpop.f32.mrb[0].mxu0
      %v1581 = vpop.f32.mrb[0].mxu0
      %v1582 = vpop.f32.mrb[0].mxu0
      %1583 = vdwg.mxu0
      %v1584 = vunpack.c.l.b16 %v480
      %v1585 = vpack.c.b16 %v1584, %v1584
      %1586 = vrot.lane.b32.xlu0 %v1585, 96
      %v1587 = vpop.permute.xlu0 %1586
      %v1589 = vsel %vm501, %v480, 0
      %v1592 = vsel %vm501, %v1587, 0
      %1594 = vmatprep.subr.bf16.mxu0 0
      %1595 = vmatpush1.bf16.xpose.msra.mxu0 %v1592
      %1596 = vmatprep.subr.bf16.mxu0 0
      %1597 = vmatpush1.bf16.xpose.msra.mxu0 0
      %1598 = vmatprep.subr.bf16.mxu0 0
      %1599 = vmatpush1.bf16.xpose.msra.mxu0 0
      %1600 = vmatprep.subr.bf16.mxu0 0
      %1601 = vmatpush1.bf16.xpose.msra.mxu0 0
      %1602 = vmatprep.subr.bf16.mxu0 0
      %1603 = vmatpush1.bf16.xpose.msra.mxu0 0
      %1604 = vmatprep.subr.bf16.mxu0 0
      %1605 = vmatpush1.bf16.xpose.msra.mxu0 0
      %1606 = vmatprep.subr.bf16.mxu0 0
      %1607 = vmatpush1.bf16.xpose.msra.mxu0 0
      %1608 = vmatprep.subr.bf16.mxu0 0
      %1609 = vmatpush1.bf16.xpose.msra.mxu0 0
      %1610 = vmatprep.subr.bf16.mxu0 0
      %1611 = vmatpush1.bf16.xpose.msra.mxu0 0
      %1612 = vmatprep.subr.bf16.mxu0 0
      %1613 = vmatpush1.bf16.xpose.msra.mxu0 0
      %1614 = vmatprep.subr.bf16.mxu0 0
      %1615 = vmatpush1.bf16.xpose.msra.mxu0 0
      %1616 = vmatprep.subr.bf16.mxu0 0
      %1617 = vmatpush1.bf16.xpose.msra.mxu0 0
      %1618 = vmatprep.subr.bf16.mxu0 0
      %1619 = vmatpush1.bf16.xpose.msra.mxu0 0
      %1620 = vmatprep.subr.bf16.mxu0 0
      %1621 = vmatpush1.bf16.xpose.msra.mxu0 0
      %1622 = vmatprep.subr.bf16.mxu0 0
      %1623 = vmatpush1.bf16.xpose.msra.mxu0 0
      %1624 = vmatprep.subr.bf16.mxu0 0
      %1625 = vmatpush1.bf16.xpose.msra.mxu0 0
      %1626 = vmatprep.mubr.bf16.mxu0 0
      %1627 = vmatmul.mubr.bf16.gmra.mrb[0].mxu0 %v1589
      %v1628 = vpop.f32.mrb[0].mxu0
      %v1629 = vadd.f32 0.0, %v1628
      %v1630 = vpop.f32.mrb[0].mxu0
      %v1631 = vpop.f32.mrb[0].mxu0
      %v1632 = vpop.f32.mrb[0].mxu0
      %1633 = vdwg.mxu0
      %v1634 = vunpack.c.l.b16 %v482
      %v1635 = vpack.c.b16 %v1634, %v1634
      %1636 = vrot.lane.b32.xlu0 %v1635, 96
      %v1637 = vpop.permute.xlu0 %1636
      %v1639 = vsel %vm501, %v482, 0
      %v1642 = vsel %vm501, %v1637, 0
      %1644 = vmatprep.subr.bf16.mxu0 0
      %1645 = vmatpush1.bf16.xpose.msra.mxu0 %v1642
      %1646 = vmatprep.subr.bf16.mxu0 0
      %1647 = vmatpush1.bf16.xpose.msra.mxu0 0
      %1648 = vmatprep.subr.bf16.mxu0 0
      %1649 = vmatpush1.bf16.xpose.msra.mxu0 0
      %1650 = vmatprep.subr.bf16.mxu0 0
      %1651 = vmatpush1.bf16.xpose.msra.mxu0 0
      %1652 = vmatprep.subr.bf16.mxu0 0
      %1653 = vmatpush1.bf16.xpose.msra.mxu0 0
      %1654 = vmatprep.subr.bf16.mxu0 0
      %1655 = vmatpush1.bf16.xpose.msra.mxu0 0
      %1656 = vmatprep.subr.bf16.mxu0 0
      %1657 = vmatpush1.bf16.xpose.msra.mxu0 0
      %1658 = vmatprep.subr.bf16.mxu0 0
      %1659 = vmatpush1.bf16.xpose.msra.mxu0 0
      %1660 = vmatprep.subr.bf16.mxu0 0
      %1661 = vmatpush1.bf16.xpose.msra.mxu0 0
      %1662 = vmatprep.subr.bf16.mxu0 0
      %1663 = vmatpush1.bf16.xpose.msra.mxu0 0
      %1664 = vmatprep.subr.bf16.mxu0 0
      %1665 = vmatpush1.bf16.xpose.msra.mxu0 0
      %1666 = vmatprep.subr.bf16.mxu0 0
      %1667 = vmatpush1.bf16.xpose.msra.mxu0 0
      %1668 = vmatprep.subr.bf16.mxu0 0
      %1669 = vmatpush1.bf16.xpose.msra.mxu0 0
      %1670 = vmatprep.subr.bf16.mxu0 0
      %1671 = vmatpush1.bf16.xpose.msra.mxu0 0
      %1672 = vmatprep.subr.bf16.mxu0 0
      %1673 = vmatpush1.bf16.xpose.msra.mxu0 0
      %1674 = vmatprep.subr.bf16.mxu0 0
      %1675 = vmatpush1.bf16.xpose.msra.mxu0 0
      %1676 = vmatprep.mubr.bf16.mxu0 0
      %1677 = vmatmul.mubr.bf16.gmra.mrb[0].mxu0 %v1639
      %v1678 = vpop.f32.mrb[0].mxu0
      %v1679 = vadd.f32 0.0, %v1678
      %v1680 = vpop.f32.mrb[0].mxu0
      %v1681 = vpop.f32.mrb[0].mxu0
      %v1682 = vpop.f32.mrb[0].mxu0
      %1683 = vdwg.mxu0
      %v1684 = vunpack.c.l.b16 %v484
      %v1685 = vpack.c.b16 %v1684, %v1684
      %1686 = vrot.lane.b32.xlu0 %v1685, 96
      %v1687 = vpop.permute.xlu0 %1686
      %v1689 = vsel %vm501, %v484, 0
      %v1692 = vsel %vm501, %v1687, 0
      %1694 = vmatprep.subr.bf16.mxu0 0
      %1695 = vmatpush1.bf16.xpose.msra.mxu0 %v1692
      %1696 = vmatprep.subr.bf16.mxu0 0
      %1697 = vmatpush1.bf16.xpose.msra.mxu0 0
      %1698 = vmatprep.subr.bf16.mxu0 0
      %1699 = vmatpush1.bf16.xpose.msra.mxu0 0
      %1700 = vmatprep.subr.bf16.mxu0 0
      %1701 = vmatpush1.bf16.xpose.msra.mxu0 0
      %1702 = vmatprep.subr.bf16.mxu0 0
      %1703 = vmatpush1.bf16.xpose.msra.mxu0 0
      %1704 = vmatprep.subr.bf16.mxu0 0
      %1705 = vmatpush1.bf16.xpose.msra.mxu0 0
      %1706 = vmatprep.subr.bf16.mxu0 0
      %1707 = vmatpush1.bf16.xpose.msra.mxu0 0
      %1708 = vmatprep.subr.bf16.mxu0 0
      %1709 = vmatpush1.bf16.xpose.msra.mxu0 0
      %1710 = vmatprep.subr.bf16.mxu0 0
      %1711 = vmatpush1.bf16.xpose.msra.mxu0 0
      %1712 = vmatprep.subr.bf16.mxu0 0
      %1713 = vmatpush1.bf16.xpose.msra.mxu0 0
      %1714 = vmatprep.subr.bf16.mxu0 0
      %1715 = vmatpush1.bf16.xpose.msra.mxu0 0
      %1716 = vmatprep.subr.bf16.mxu0 0
      %1717 = vmatpush1.bf16.xpose.msra.mxu0 0
      %1718 = vmatprep.subr.bf16.mxu0 0
      %1719 = vmatpush1.bf16.xpose.msra.mxu0 0
      %1720 = vmatprep.subr.bf16.mxu0 0
      %1721 = vmatpush1.bf16.xpose.msra.mxu0 0
      %1722 = vmatprep.subr.bf16.mxu0 0
      %1723 = vmatpush1.bf16.xpose.msra.mxu0 0
      %1724 = vmatprep.subr.bf16.mxu0 0
      %1725 = vmatpush1.bf16.xpose.msra.mxu0 0
      %1726 = vmatprep.mubr.bf16.mxu0 0
      %1727 = vmatmul.mubr.bf16.gmra.mrb[0].mxu0 %v1689
      %v1728 = vpop.f32.mrb[0].mxu0
      %v1729 = vadd.f32 0.0, %v1728
      %v1730 = vpop.f32.mrb[0].mxu0
      %v1731 = vpop.f32.mrb[0].mxu0
      %v1732 = vpop.f32.mrb[0].mxu0
      %1733 = vdwg.mxu0
      %v1734 = vunpack.c.l.b16 %v486
      %v1735 = vpack.c.b16 %v1734, %v1734
      %1736 = vrot.lane.b32.xlu0 %v1735, 96
      %v1737 = vpop.permute.xlu0 %1736
      %v1739 = vsel %vm501, %v486, 0
      %v1742 = vsel %vm501, %v1737, 0
      %1744 = vmatprep.subr.bf16.mxu0 0
      %1745 = vmatpush1.bf16.xpose.msra.mxu0 %v1742
      %1746 = vmatprep.subr.bf16.mxu0 0
      %1747 = vmatpush1.bf16.xpose.msra.mxu0 0
      %1748 = vmatprep.subr.bf16.mxu0 0
      %1749 = vmatpush1.bf16.xpose.msra.mxu0 0
      %1750 = vmatprep.subr.bf16.mxu0 0
      %1751 = vmatpush1.bf16.xpose.msra.mxu0 0
      %1752 = vmatprep.subr.bf16.mxu0 0
      %1753 = vmatpush1.bf16.xpose.msra.mxu0 0
      %1754 = vmatprep.subr.bf16.mxu0 0
      %1755 = vmatpush1.bf16.xpose.msra.mxu0 0
      %1756 = vmatprep.subr.bf16.mxu0 0
      %1757 = vmatpush1.bf16.xpose.msra.mxu0 0
      %1758 = vmatprep.subr.bf16.mxu0 0
      %1759 = vmatpush1.bf16.xpose.msra.mxu0 0
      %1760 = vmatprep.subr.bf16.mxu0 0
      %1761 = vmatpush1.bf16.xpose.msra.mxu0 0
      %1762 = vmatprep.subr.bf16.mxu0 0
      %1763 = vmatpush1.bf16.xpose.msra.mxu0 0
      %1764 = vmatprep.subr.bf16.mxu0 0
      %1765 = vmatpush1.bf16.xpose.msra.mxu0 0
      %1766 = vmatprep.subr.bf16.mxu0 0
      %1767 = vmatpush1.bf16.xpose.msra.mxu0 0
      %1768 = vmatprep.subr.bf16.mxu0 0
      %1769 = vmatpush1.bf16.xpose.msra.mxu0 0
      %1770 = vmatprep.subr.bf16.mxu0 0
      %1771 = vmatpush1.bf16.xpose.msra.mxu0 0
      %1772 = vmatprep.subr.bf16.mxu0 0
      %1773 = vmatpush1.bf16.xpose.msra.mxu0 0
      %1774 = vmatprep.subr.bf16.mxu0 0
      %1775 = vmatpush1.bf16.xpose.msra.mxu0 0
      %1776 = vmatprep.mubr.bf16.mxu0 0
      %1777 = vmatmul.mubr.bf16.gmra.mrb[0].mxu0 %v1739
      %v1778 = vpop.f32.mrb[0].mxu0
      %v1779 = vadd.f32 0.0, %v1778
      %v1780 = vpop.f32.mrb[0].mxu0
      %v1781 = vpop.f32.mrb[0].mxu0
      %v1782 = vpop.f32.mrb[0].mxu0
      %1783 = vdwg.mxu0
      %v1784 = vunpack.c.l.b16 %v488
      %v1785 = vpack.c.b16 %v1784, %v1784
      %1786 = vrot.lane.b32.xlu0 %v1785, 96
      %v1787 = vpop.permute.xlu0 %1786
      %v1789 = vsel %vm501, %v488, 0
      %v1792 = vsel %vm501, %v1787, 0
      %1794 = vmatprep.subr.bf16.mxu0 0
      %1795 = vmatpush1.bf16.xpose.msra.mxu0 %v1792
      %1796 = vmatprep.subr.bf16.mxu0 0
      %1797 = vmatpush1.bf16.xpose.msra.mxu0 0
      %1798 = vmatprep.subr.bf16.mxu0 0
      %1799 = vmatpush1.bf16.xpose.msra.mxu0 0
      %1800 = vmatprep.subr.bf16.mxu0 0
      %1801 = vmatpush1.bf16.xpose.msra.mxu0 0
      %1802 = vmatprep.subr.bf16.mxu0 0
      %1803 = vmatpush1.bf16.xpose.msra.mxu0 0
      %1804 = vmatprep.subr.bf16.mxu0 0
      %1805 = vmatpush1.bf16.xpose.msra.mxu0 0
      %1806 = vmatprep.subr.bf16.mxu0 0
      %1807 = vmatpush1.bf16.xpose.msra.mxu0 0
      %1808 = vmatprep.subr.bf16.mxu0 0
      %1809 = vmatpush1.bf16.xpose.msra.mxu0 0
      %1810 = vmatprep.subr.bf16.mxu0 0
      %1811 = vmatpush1.bf16.xpose.msra.mxu0 0
      %1812 = vmatprep.subr.bf16.mxu0 0
      %1813 = vmatpush1.bf16.xpose.msra.mxu0 0
      %1814 = vmatprep.subr.bf16.mxu0 0
      %1815 = vmatpush1.bf16.xpose.msra.mxu0 0
      %1816 = vmatprep.subr.bf16.mxu0 0
      %1817 = vmatpush1.bf16.xpose.msra.mxu0 0
      %1818 = vmatprep.subr.bf16.mxu0 0
      %1819 = vmatpush1.bf16.xpose.msra.mxu0 0
      %1820 = vmatprep.subr.bf16.mxu0 0
      %1821 = vmatpush1.bf16.xpose.msra.mxu0 0
      %1822 = vmatprep.subr.bf16.mxu0 0
      %1823 = vmatpush1.bf16.xpose.msra.mxu0 0
      %1824 = vmatprep.subr.bf16.mxu0 0
      %1825 = vmatpush1.bf16.xpose.msra.mxu0 0
      %1826 = vmatprep.mubr.bf16.mxu0 0
      %1827 = vmatmul.mubr.bf16.gmra.mrb[0].mxu0 %v1789
      %v1828 = vpop.f32.mrb[0].mxu0
      %v1829 = vadd.f32 0.0, %v1828
      %v1830 = vpop.f32.mrb[0].mxu0
      %v1831 = vpop.f32.mrb[0].mxu0
      %v1832 = vpop.f32.mrb[0].mxu0
      %1833 = vdwg.mxu0
      %v1834 = vunpack.c.l.b16 %v490
      %v1835 = vpack.c.b16 %v1834, %v1834
      %1836 = vrot.lane.b32.xlu0 %v1835, 96
      %v1837 = vpop.permute.xlu0 %1836
      %v1839 = vsel %vm501, %v490, 0
      %v1842 = vsel %vm501, %v1837, 0
      %1844 = vmatprep.subr.bf16.mxu0 0
      %1845 = vmatpush1.bf16.xpose.msra.mxu0 %v1842
      %1846 = vmatprep.subr.bf16.mxu0 0
      %1847 = vmatpush1.bf16.xpose.msra.mxu0 0
      %1848 = vmatprep.subr.bf16.mxu0 0
      %1849 = vmatpush1.bf16.xpose.msra.mxu0 0
      %1850 = vmatprep.subr.bf16.mxu0 0
      %1851 = vmatpush1.bf16.xpose.msra.mxu0 0
      %1852 = vmatprep.subr.bf16.mxu0 0
      %1853 = vmatpush1.bf16.xpose.msra.mxu0 0
      %1854 = vmatprep.subr.bf16.mxu0 0
      %1855 = vmatpush1.bf16.xpose.msra.mxu0 0
      %1856 = vmatprep.subr.bf16.mxu0 0
      %1857 = vmatpush1.bf16.xpose.msra.mxu0 0
      %1858 = vmatprep.subr.bf16.mxu0 0
      %1859 = vmatpush1.bf16.xpose.msra.mxu0 0
      %1860 = vmatprep.subr.bf16.mxu0 0
      %1861 = vmatpush1.bf16.xpose.msra.mxu0 0
      %1862 = vmatprep.subr.bf16.mxu0 0
      %1863 = vmatpush1.bf16.xpose.msra.mxu0 0
      %1864 = vmatprep.subr.bf16.mxu0 0
      %1865 = vmatpush1.bf16.xpose.msra.mxu0 0
      %1866 = vmatprep.subr.bf16.mxu0 0
      %1867 = vmatpush1.bf16.xpose.msra.mxu0 0
      %1868 = vmatprep.subr.bf16.mxu0 0
      %1869 = vmatpush1.bf16.xpose.msra.mxu0 0
      %1870 = vmatprep.subr.bf16.mxu0 0
      %1871 = vmatpush1.bf16.xpose.msra.mxu0 0
      %1872 = vmatprep.subr.bf16.mxu0 0
      %1873 = vmatpush1.bf16.xpose.msra.mxu0 0
      %1874 = vmatprep.subr.bf16.mxu0 0
      %1875 = vmatpush1.bf16.xpose.msra.mxu0 0
      %1876 = vmatprep.mubr.bf16.mxu0 0
      %1877 = vmatmul.mubr.bf16.gmra.mrb[0].mxu0 %v1839
      %v1878 = vpop.f32.mrb[0].mxu0
      %v1879 = vadd.f32 0.0, %v1878
      %v1880 = vpop.f32.mrb[0].mxu0
      %v1881 = vpop.f32.mrb[0].mxu0
      %v1882 = vpop.f32.mrb[0].mxu0
      %1883 = vdwg.mxu0
      %v1884 = vunpack.c.l.b16 %v492
      %v1885 = vpack.c.b16 %v1884, %v1884
      %1886 = vrot.lane.b32.xlu0 %v1885, 96
      %v1887 = vpop.permute.xlu0 %1886
      %v1889 = vsel %vm501, %v492, 0
      %v1892 = vsel %vm501, %v1887, 0
      %1894 = vmatprep.subr.bf16.mxu0 0
      %1895 = vmatpush1.bf16.xpose.msra.mxu0 %v1892
      %1896 = vmatprep.subr.bf16.mxu0 0
      %1897 = vmatpush1.bf16.xpose.msra.mxu0 0
      %1898 = vmatprep.subr.bf16.mxu0 0
      %1899 = vmatpush1.bf16.xpose.msra.mxu0 0
      %1900 = vmatprep.subr.bf16.mxu0 0
      %1901 = vmatpush1.bf16.xpose.msra.mxu0 0
      %1902 = vmatprep.subr.bf16.mxu0 0
      %1903 = vmatpush1.bf16.xpose.msra.mxu0 0
      %1904 = vmatprep.subr.bf16.mxu0 0
      %1905 = vmatpush1.bf16.xpose.msra.mxu0 0
      %1906 = vmatprep.subr.bf16.mxu0 0
      %1907 = vmatpush1.bf16.xpose.msra.mxu0 0
      %1908 = vmatprep.subr.bf16.mxu0 0
      %1909 = vmatpush1.bf16.xpose.msra.mxu0 0
      %1910 = vmatprep.subr.bf16.mxu0 0
      %1911 = vmatpush1.bf16.xpose.msra.mxu0 0
      %1912 = vmatprep.subr.bf16.mxu0 0
      %1913 = vmatpush1.bf16.xpose.msra.mxu0 0
      %1914 = vmatprep.subr.bf16.mxu0 0
      %1915 = vmatpush1.bf16.xpose.msra.mxu0 0
      %1916 = vmatprep.subr.bf16.mxu0 0
      %1917 = vmatpush1.bf16.xpose.msra.mxu0 0
      %1918 = vmatprep.subr.bf16.mxu0 0
      %1919 = vmatpush1.bf16.xpose.msra.mxu0 0
      %1920 = vmatprep.subr.bf16.mxu0 0
      %1921 = vmatpush1.bf16.xpose.msra.mxu0 0
      %1922 = vmatprep.subr.bf16.mxu0 0
      %1923 = vmatpush1.bf16.xpose.msra.mxu0 0
      %1924 = vmatprep.subr.bf16.mxu0 0
      %1925 = vmatpush1.bf16.xpose.msra.mxu0 0
      %1926 = vmatprep.mubr.bf16.mxu0 0
      %1927 = vmatmul.mubr.bf16.gmra.mrb[0].mxu0 %v1889
      %v1928 = vpop.f32.mrb[0].mxu0
      %v1929 = vadd.f32 0.0, %v1928
      %v1930 = vpop.f32.mrb[0].mxu0
      %v1931 = vpop.f32.mrb[0].mxu0
      %v1932 = vpop.f32.mrb[0].mxu0
      %1933 = vdwg.mxu0
      %v1934 = vunpack.c.l.b16 %v494
      %v1935 = vpack.c.b16 %v1934, %v1934
      %1936 = vrot.lane.b32.xlu0 %v1935, 96
      %v1937 = vpop.permute.xlu0 %1936
      %v1939 = vsel %vm501, %v494, 0
      %v1942 = vsel %vm501, %v1937, 0
      %1944 = vmatprep.subr.bf16.mxu0 0
      %1945 = vmatpush1.bf16.xpose.msra.mxu0 %v1942
      %1946 = vmatprep.subr.bf16.mxu0 0
      %1947 = vmatpush1.bf16.xpose.msra.mxu0 0
      %1948 = vmatprep.subr.bf16.mxu0 0
      %1949 = vmatpush1.bf16.xpose.msra.mxu0 0
      %1950 = vmatprep.subr.bf16.mxu0 0
      %1951 = vmatpush1.bf16.xpose.msra.mxu0 0
      %1952 = vmatprep.subr.bf16.mxu0 0
      %1953 = vmatpush1.bf16.xpose.msra.mxu0 0
      %1954 = vmatprep.subr.bf16.mxu0 0
      %1955 = vmatpush1.bf16.xpose.msra.mxu0 0
      %1956 = vmatprep.subr.bf16.mxu0 0
      %1957 = vmatpush1.bf16.xpose.msra.mxu0 0
      %1958 = vmatprep.subr.bf16.mxu0 0
      %1959 = vmatpush1.bf16.xpose.msra.mxu0 0
      %1960 = vmatprep.subr.bf16.mxu0 0
      %1961 = vmatpush1.bf16.xpose.msra.mxu0 0
      %1962 = vmatprep.subr.bf16.mxu0 0
      %1963 = vmatpush1.bf16.xpose.msra.mxu0 0
      %1964 = vmatprep.subr.bf16.mxu0 0
      %1965 = vmatpush1.bf16.xpose.msra.mxu0 0
      %1966 = vmatprep.subr.bf16.mxu0 0
      %1967 = vmatpush1.bf16.xpose.msra.mxu0 0
      %1968 = vmatprep.subr.bf16.mxu0 0
      %1969 = vmatpush1.bf16.xpose.msra.mxu0 0
      %1970 = vmatprep.subr.bf16.mxu0 0
      %1971 = vmatpush1.bf16.xpose.msra.mxu0 0
      %1972 = vmatprep.subr.bf16.mxu0 0
      %1973 = vmatpush1.bf16.xpose.msra.mxu0 0
      %1974 = vmatprep.subr.bf16.mxu0 0
      %1975 = vmatpush1.bf16.xpose.msra.mxu0 0
      %1976 = vmatprep.mubr.bf16.mxu0 0
      %1977 = vmatmul.mubr.bf16.gmra.mrb[0].mxu0 %v1939
      %v1978 = vpop.f32.mrb[0].mxu0
      %v1979 = vadd.f32 0.0, %v1978
      %v1980 = vpop.f32.mrb[0].mxu0
      %v1981 = vpop.f32.mrb[0].mxu0
      %v1982 = vpop.f32.mrb[0].mxu0
      %1983 = vdwg.mxu0
      %v1984 = vunpack.c.l.b16 %v496
      %v1985 = vpack.c.b16 %v1984, %v1984
      %1986 = vrot.lane.b32.xlu0 %v1985, 96
      %v1987 = vpop.permute.xlu0 %1986
      %v1989 = vsel %vm501, %v496, 0
      %v1992 = vsel %vm501, %v1987, 0
      %1994 = vmatprep.subr.bf16.mxu0 0
      %1995 = vmatpush1.bf16.xpose.msra.mxu0 %v1992
      %1996 = vmatprep.subr.bf16.mxu0 0
      %1997 = vmatpush1.bf16.xpose.msra.mxu0 0
      %1998 = vmatprep.subr.bf16.mxu0 0
      %1999 = vmatpush1.bf16.xpose.msra.mxu0 0
      %2000 = vmatprep.subr.bf16.mxu0 0
      %2001 = vmatpush1.bf16.xpose.msra.mxu0 0
      %2002 = vmatprep.subr.bf16.mxu0 0
      %2003 = vmatpush1.bf16.xpose.msra.mxu0 0
      %2004 = vmatprep.subr.bf16.mxu0 0
      %2005 = vmatpush1.bf16.xpose.msra.mxu0 0
      %2006 = vmatprep.subr.bf16.mxu0 0
      %2007 = vmatpush1.bf16.xpose.msra.mxu0 0
      %2008 = vmatprep.subr.bf16.mxu0 0
      %2009 = vmatpush1.bf16.xpose.msra.mxu0 0
      %2010 = vmatprep.subr.bf16.mxu0 0
      %2011 = vmatpush1.bf16.xpose.msra.mxu0 0
      %2012 = vmatprep.subr.bf16.mxu0 0
      %2013 = vmatpush1.bf16.xpose.msra.mxu0 0
      %2014 = vmatprep.subr.bf16.mxu0 0
      %2015 = vmatpush1.bf16.xpose.msra.mxu0 0
      %2016 = vmatprep.subr.bf16.mxu0 0
      %2017 = vmatpush1.bf16.xpose.msra.mxu0 0
      %2018 = vmatprep.subr.bf16.mxu0 0
      %2019 = vmatpush1.bf16.xpose.msra.mxu0 0
      %2020 = vmatprep.subr.bf16.mxu0 0
      %2021 = vmatpush1.bf16.xpose.msra.mxu0 0
      %2022 = vmatprep.subr.bf16.mxu0 0
      %2023 = vmatpush1.bf16.xpose.msra.mxu0 0
      %2024 = vmatprep.subr.bf16.mxu0 0
      %2025 = vmatpush1.bf16.xpose.msra.mxu0 0
      %2026 = vmatprep.mubr.bf16.mxu0 0
      %2027 = vmatmul.mubr.bf16.gmra.mrb[0].mxu0 %v1989
      %v2028 = vpop.f32.mrb[0].mxu0
      %v2029 = vadd.f32 0.0, %v2028
      %v2030 = vpop.f32.mrb[0].mxu0
      %v2031 = vpop.f32.mrb[0].mxu0
      %v2032 = vpop.f32.mrb[0].mxu0
      %2033 = vdwg.mxu0
      %v2034 = vunpack.c.l.b16 %v498
      %v2035 = vpack.c.b16 %v2034, %v2034
      %2036 = vrot.lane.b32.xlu0 %v2035, 96
      %v2037 = vpop.permute.xlu0 %2036
      %v2039 = vsel %vm501, %v498, 0
      %v2042 = vsel %vm501, %v2037, 0
      %2044 = vmatprep.subr.bf16.mxu0 0
      %2045 = vmatpush1.bf16.xpose.msra.mxu0 %v2042
      %2046 = vmatprep.subr.bf16.mxu0 0
      %2047 = vmatpush1.bf16.xpose.msra.mxu0 0
      %2048 = vmatprep.subr.bf16.mxu0 0
      %2049 = vmatpush1.bf16.xpose.msra.mxu0 0
      %2050 = vmatprep.subr.bf16.mxu0 0
      %2051 = vmatpush1.bf16.xpose.msra.mxu0 0
      %2052 = vmatprep.subr.bf16.mxu0 0
      %2053 = vmatpush1.bf16.xpose.msra.mxu0 0
      %2054 = vmatprep.subr.bf16.mxu0 0
      %2055 = vmatpush1.bf16.xpose.msra.mxu0 0
      %2056 = vmatprep.subr.bf16.mxu0 0
      %2057 = vmatpush1.bf16.xpose.msra.mxu0 0
      %2058 = vmatprep.subr.bf16.mxu0 0
      %2059 = vmatpush1.bf16.xpose.msra.mxu0 0
      %2060 = vmatprep.subr.bf16.mxu0 0
      %2061 = vmatpush1.bf16.xpose.msra.mxu0 0
      %2062 = vmatprep.subr.bf16.mxu0 0
      %2063 = vmatpush1.bf16.xpose.msra.mxu0 0
      %2064 = vmatprep.subr.bf16.mxu0 0
      %2065 = vmatpush1.bf16.xpose.msra.mxu0 0
      %2066 = vmatprep.subr.bf16.mxu0 0
      %2067 = vmatpush1.bf16.xpose.msra.mxu0 0
      %2068 = vmatprep.subr.bf16.mxu0 0
      %2069 = vmatpush1.bf16.xpose.msra.mxu0 0
      %2070 = vmatprep.subr.bf16.mxu0 0
      %2071 = vmatpush1.bf16.xpose.msra.mxu0 0
      %2072 = vmatprep.subr.bf16.mxu0 0
      %2073 = vmatpush1.bf16.xpose.msra.mxu0 0
      %2074 = vmatprep.subr.bf16.mxu0 0
      %2075 = vmatpush1.bf16.xpose.msra.mxu0 0
      %2076 = vmatprep.mubr.bf16.mxu0 0
      %2077 = vmatmul.mubr.bf16.gmra.mrb[0].mxu0 %v2039
      %v2078 = vpop.f32.mrb[0].mxu0
      %v2079 = vadd.f32 0.0, %v2078
      %v2080 = vpop.f32.mrb[0].mxu0
      %v2081 = vpop.f32.mrb[0].mxu0
      %v2082 = vpop.f32.mrb[0].mxu0
      %2083 = vdwg.mxu0
      %v2084 = vmul.f32 %v543, 0.35355338
      %v2085 = vmul.f32 %v591, 0.35355338
      %v2086 = vmul.f32 %v639, 0.35355338
      %v2087 = vmul.f32 %v687, 0.35355338
      %v2088 = vmul.f32 %v735, 0.35355338
      %v2089 = vmul.f32 %v783, 0.35355338
      %v2090 = vmul.f32 %v831, 0.35355338
      %v2091 = vmul.f32 %v879, 0.35355338
      %v2092 = vmul.f32 %v929, 0.35355338
      %v2093 = vmul.f32 %v979, 0.35355338
      %v2094 = vmul.f32 %v1029, 0.35355338
      %v2095 = vmul.f32 %v1079, 0.35355338
      %v2096 = vmul.f32 %v1129, 0.35355338
      %v2097 = vmul.f32 %v1179, 0.35355338
      %v2098 = vmul.f32 %v1229, 0.35355338
      %v2099 = vmul.f32 %v1279, 0.35355338
      %v2100 = vmul.f32 %v1329, 0.35355338
      %v2101 = vmul.f32 %v1379, 0.35355338
      %v2102 = vmul.f32 %v1429, 0.35355338
      %v2103 = vmul.f32 %v1479, 0.35355338
      %v2104 = vmul.f32 %v1529, 0.35355338
      %v2105 = vmul.f32 %v1579, 0.35355338
      %v2106 = vmul.f32 %v1629, 0.35355338
      %v2107 = vmul.f32 %v1679, 0.35355338
      %v2108 = vmul.f32 %v1729, 0.35355338
      %v2109 = vmul.f32 %v1779, 0.35355338
      %v2110 = vmul.f32 %v1829, 0.35355338
      %v2111 = vmul.f32 %v1879, 0.35355338
      %v2112 = vmul.f32 %v1929, 0.35355338
      %v2113 = vmul.f32 %v1979, 0.35355338
      %v2114 = vmul.f32 %v2029, 0.35355338
      %v2115 = vmul.f32 %v2079, 0.35355338
      %v2116 = vlaneseq
      %v2117 = vand.u32 %v2116, 127
      %vm2118 = vcmp.lt.s32.totalorder %v2117, 5
      %v2119 = vsel %vm2118, %v2084, -1e+30
      %v2120 = vsel %vm2118, %v2085, -1e+30
      %v2121 = vsel %vm2118, %v2086, -1e+30
      %v2122 = vsel %vm2118, %v2087, -1e+30
      %v2123 = vsel %vm2118, %v2088, -1e+30
      %v2124 = vsel %vm2118, %v2089, -1e+30
      %v2125 = vsel %vm2118, %v2090, -1e+30
      %v2126 = vsel %vm2118, %v2091, -1e+30
      %v2127 = vsel %vm2118, %v2092, -1e+30
      %v2128 = vsel %vm2118, %v2093, -1e+30
      %v2129 = vsel %vm2118, %v2094, -1e+30
      %v2130 = vsel %vm2118, %v2095, -1e+30
      %v2131 = vsel %vm2118, %v2096, -1e+30
      %v2132 = vsel %vm2118, %v2097, -1e+30
      %v2133 = vsel %vm2118, %v2098, -1e+30
      %v2134 = vsel %vm2118, %v2099, -1e+30
      %v2135 = vsel %vm2118, %v2100, -1e+30
      %v2136 = vsel %vm2118, %v2101, -1e+30
      %v2137 = vsel %vm2118, %v2102, -1e+30
      %v2138 = vsel %vm2118, %v2103, -1e+30
      %v2139 = vsel %vm2118, %v2104, -1e+30
      %v2140 = vsel %vm2118, %v2105, -1e+30
      %v2141 = vsel %vm2118, %v2106, -1e+30
      %v2142 = vsel %vm2118, %v2107, -1e+30
      %v2143 = vsel %vm2118, %v2108, -1e+30
      %v2144 = vsel %vm2118, %v2109, -1e+30
      %v2145 = vsel %vm2118, %v2110, -1e+30
      %v2146 = vsel %vm2118, %v2111, -1e+30
      %v2147 = vsel %vm2118, %v2112, -1e+30
      %v2148 = vsel %vm2118, %v2113, -1e+30
      %v2149 = vsel %vm2118, %v2114, -1e+30
      %v2150 = vsel %vm2118, %v2115, -1e+30
      %v2151 = vsel %vm501, %v2119, -inf
      %2152 = vmax.xlane.f32.xlu0 %v2151
      %v2153 = vpop.xlane.xlu0 %2152
      %v2154 = vsel %vm501, %v2120, -inf
      %2155 = vmax.xlane.f32.xlu0 %v2154
      %v2156 = vpop.xlane.xlu0 %2155
      %v2157 = vsel %vm501, %v2121, -inf
      %2158 = vmax.xlane.f32.xlu0 %v2157
      %v2159 = vpop.xlane.xlu0 %2158
      %v2160 = vsel %vm501, %v2122, -inf
      %2161 = vmax.xlane.f32.xlu0 %v2160
      %v2162 = vpop.xlane.xlu0 %2161
      %v2163 = vsel %vm501, %v2123, -inf
      %2164 = vmax.xlane.f32.xlu0 %v2163
      %v2165 = vpop.xlane.xlu0 %2164
      %v2166 = vsel %vm501, %v2124, -inf
      %2167 = vmax.xlane.f32.xlu0 %v2166
      %v2168 = vpop.xlane.xlu0 %2167
      %v2169 = vsel %vm501, %v2125, -inf
      %2170 = vmax.xlane.f32.xlu0 %v2169
      %v2171 = vpop.xlane.xlu0 %2170
      %v2172 = vsel %vm501, %v2126, -inf
      %2173 = vmax.xlane.f32.xlu0 %v2172
      %v2174 = vpop.xlane.xlu0 %2173
      %v2175 = vsel %vm501, %v2127, -inf
      %2176 = vmax.xlane.f32.xlu0 %v2175
      %v2177 = vpop.xlane.xlu0 %2176
      %v2178 = vsel %vm501, %v2128, -inf
      %2179 = vmax.xlane.f32.xlu0 %v2178
      %v2180 = vpop.xlane.xlu0 %2179
      %v2181 = vsel %vm501, %v2129, -inf
      %2182 = vmax.xlane.f32.xlu0 %v2181
      %v2183 = vpop.xlane.xlu0 %2182
      %v2184 = vsel %vm501, %v2130, -inf
      %2185 = vmax.xlane.f32.xlu0 %v2184
      %v2186 = vpop.xlane.xlu0 %2185
      %v2187 = vsel %vm501, %v2131, -inf
      %2188 = vmax.xlane.f32.xlu0 %v2187
      %v2189 = vpop.xlane.xlu0 %2188
      %v2190 = vsel %vm501, %v2132, -inf
      %2191 = vmax.xlane.f32.xlu0 %v2190
      %v2192 = vpop.xlane.xlu0 %2191
      %v2193 = vsel %vm501, %v2133, -inf
      %2194 = vmax.xlane.f32.xlu0 %v2193
      %v2195 = vpop.xlane.xlu0 %2194
      %v2196 = vsel %vm501, %v2134, -inf
      %2197 = vmax.xlane.f32.xlu0 %v2196
      %v2198 = vpop.xlane.xlu0 %2197
      %v2199 = vsel %vm501, %v2135, -inf
      %2200 = vmax.xlane.f32.xlu0 %v2199
      %v2201 = vpop.xlane.xlu0 %2200
      %v2202 = vsel %vm501, %v2136, -inf
      %2203 = vmax.xlane.f32.xlu0 %v2202
      %v2204 = vpop.xlane.xlu0 %2203
      %v2205 = vsel %vm501, %v2137, -inf
      %2206 = vmax.xlane.f32.xlu0 %v2205
      %v2207 = vpop.xlane.xlu0 %2206
      %v2208 = vsel %vm501, %v2138, -inf
      %2209 = vmax.xlane.f32.xlu0 %v2208
      %v2210 = vpop.xlane.xlu0 %2209
      %v2211 = vsel %vm501, %v2139, -inf
      %2212 = vmax.xlane.f32.xlu0 %v2211
      %v2213 = vpop.xlane.xlu0 %2212
      %v2214 = vsel %vm501, %v2140, -inf
      %2215 = vmax.xlane.f32.xlu0 %v2214
      %v2216 = vpop.xlane.xlu0 %2215
      %v2217 = vsel %vm501, %v2141, -inf
      %2218 = vmax.xlane.f32.xlu0 %v2217
      %v2219 = vpop.xlane.xlu0 %2218
      %v2220 = vsel %vm501, %v2142, -inf
      %2221 = vmax.xlane.f32.xlu0 %v2220
      %v2222 = vpop.xlane.xlu0 %2221
      %v2223 = vsel %vm501, %v2143, -inf
      %2224 = vmax.xlane.f32.xlu0 %v2223
      %v2225 = vpop.xlane.xlu0 %2224
      %v2226 = vsel %vm501, %v2144, -inf
      %2227 = vmax.xlane.f32.xlu0 %v2226
      %v2228 = vpop.xlane.xlu0 %2227
      %v2229 = vsel %vm501, %v2145, -inf
      %2230 = vmax.xlane.f32.xlu0 %v2229
      %v2231 = vpop.xlane.xlu0 %2230
      %v2232 = vsel %vm501, %v2146, -inf
      %2233 = vmax.xlane.f32.xlu0 %v2232
      %v2234 = vpop.xlane.xlu0 %2233
      %v2235 = vsel %vm501, %v2147, -inf
      %2236 = vmax.xlane.f32.xlu0 %v2235
      %v2237 = vpop.xlane.xlu0 %2236
      %v2238 = vsel %vm501, %v2148, -inf
      %2239 = vmax.xlane.f32.xlu0 %v2238
      %v2240 = vpop.xlane.xlu0 %2239
      %v2241 = vsel %vm501, %v2149, -inf
      %2242 = vmax.xlane.f32.xlu0 %v2241
      %v2243 = vpop.xlane.xlu0 %2242
      %v2244 = vsel %vm501, %v2150, -inf
      %2245 = vmax.xlane.f32.xlu0 %v2244
      %v2246 = vpop.xlane.xlu0 %2245
      %v2247 = vsub.f32 %v2119, %v2153
      %v2248 = vsub.f32 %v2120, %v2156
      %v2249 = vsub.f32 %v2121, %v2159
      %v2250 = vsub.f32 %v2122, %v2162
      %v2251 = vsub.f32 %v2123, %v2165
      %v2252 = vsub.f32 %v2124, %v2168
      %v2253 = vsub.f32 %v2125, %v2171
      %v2254 = vsub.f32 %v2126, %v2174
      %v2255 = vsub.f32 %v2127, %v2177
      %v2256 = vsub.f32 %v2128, %v2180
      %v2257 = vsub.f32 %v2129, %v2183
      %v2258 = vsub.f32 %v2130, %v2186
      %v2259 = vsub.f32 %v2131, %v2189
      %v2260 = vsub.f32 %v2132, %v2192
      %v2261 = vsub.f32 %v2133, %v2195
      %v2262 = vsub.f32 %v2134, %v2198
      %v2263 = vsub.f32 %v2135, %v2201
      %v2264 = vsub.f32 %v2136, %v2204
      %v2265 = vsub.f32 %v2137, %v2207
      %v2266 = vsub.f32 %v2138, %v2210
      %v2267 = vsub.f32 %v2139, %v2213
      %v2268 = vsub.f32 %v2140, %v2216
      %v2269 = vsub.f32 %v2141, %v2219
      %v2270 = vsub.f32 %v2142, %v2222
      %v2271 = vsub.f32 %v2143, %v2225
      %v2272 = vsub.f32 %v2144, %v2228
      %v2273 = vsub.f32 %v2145, %v2231
      %v2274 = vsub.f32 %v2146, %v2234
      %v2275 = vsub.f32 %v2147, %v2237
      %v2276 = vsub.f32 %v2148, %v2240
      %v2277 = vsub.f32 %v2149, %v2243
      %v2278 = vsub.f32 %v2150, %v2246
      %v2279 = vmul.f32 %v2247, 1.442695
      %v2280 = vpow.pop %v2279
      %v2281 = vmul.f32 %v2248, 1.442695
      %v2282 = vpow.pop %v2281
      %v2283 = vmul.f32 %v2249, 1.442695
      %v2284 = vpow.pop %v2283
      %v2285 = vmul.f32 %v2250, 1.442695
      %v2286 = vpow.pop %v2285
      %v2287 = vmul.f32 %v2251, 1.442695
      %v2288 = vpow.pop %v2287
      %v2289 = vmul.f32 %v2252, 1.442695
      %v2290 = vpow.pop %v2289
      %v2291 = vmul.f32 %v2253, 1.442695
      %v2292 = vpow.pop %v2291
      %v2293 = vmul.f32 %v2254, 1.442695
      %v2294 = vpow.pop %v2293
      %v2295 = vmul.f32 %v2255, 1.442695
      %v2296 = vpow.pop %v2295
      %v2297 = vmul.f32 %v2256, 1.442695
      %v2298 = vpow.pop %v2297
      %v2299 = vmul.f32 %v2257, 1.442695
      %v2300 = vpow.pop %v2299
      %v2301 = vmul.f32 %v2258, 1.442695
      %v2302 = vpow.pop %v2301
      %v2303 = vmul.f32 %v2259, 1.442695
      %v2304 = vpow.pop %v2303
      %v2305 = vmul.f32 %v2260, 1.442695
      %v2306 = vpow.pop %v2305
      %v2307 = vmul.f32 %v2261, 1.442695
      %v2308 = vpow.pop %v2307
      %v2309 = vmul.f32 %v2262, 1.442695
      %v2310 = vpow.pop %v2309
      %v2311 = vmul.f32 %v2263, 1.442695
      %v2312 = vpow.pop %v2311
      %v2313 = vmul.f32 %v2264, 1.442695
      %v2314 = vpow.pop %v2313
      %v2315 = vmul.f32 %v2265, 1.442695
      %v2316 = vpow.pop %v2315
      %v2317 = vmul.f32 %v2266, 1.442695
      %v2318 = vpow.pop %v2317
      %v2319 = vmul.f32 %v2267, 1.442695
      %v2320 = vpow.pop %v2319
      %v2321 = vmul.f32 %v2268, 1.442695
      %v2322 = vpow.pop %v2321
      %v2323 = vmul.f32 %v2269, 1.442695
      %v2324 = vpow.pop %v2323
      %v2325 = vmul.f32 %v2270, 1.442695
      %v2326 = vpow.pop %v2325
      %v2327 = vmul.f32 %v2271, 1.442695
      %v2328 = vpow.pop %v2327
      %v2329 = vmul.f32 %v2272, 1.442695
      %v2330 = vpow.pop %v2329
      %v2331 = vmul.f32 %v2273, 1.442695
      %v2332 = vpow.pop %v2331
      %v2333 = vmul.f32 %v2274, 1.442695
      %v2334 = vpow.pop %v2333
      %v2335 = vmul.f32 %v2275, 1.442695
      %v2336 = vpow.pop %v2335
      %v2337 = vmul.f32 %v2276, 1.442695
      %v2338 = vpow.pop %v2337
      %v2339 = vmul.f32 %v2277, 1.442695
      %v2340 = vpow.pop %v2339
      %v2341 = vmul.f32 %v2278, 1.442695
      %v2342 = vpow.pop %v2341
      %v2343 = vsel %vm501, %v2280, 0.0
      %2344 = vadd.xlane.f32.xlu0 %v2343
      %v2345 = vpop.xlane.xlu0 %2344
      %v2346 = vsel %vm501, %v2282, 0.0
      %2347 = vadd.xlane.f32.xlu0 %v2346
      %v2348 = vpop.xlane.xlu0 %2347
      %v2349 = vsel %vm501, %v2284, 0.0
      %2350 = vadd.xlane.f32.xlu0 %v2349
      %v2351 = vpop.xlane.xlu0 %2350
      %v2352 = vsel %vm501, %v2286, 0.0
      %2353 = vadd.xlane.f32.xlu0 %v2352
      %v2354 = vpop.xlane.xlu0 %2353
      %v2355 = vsel %vm501, %v2288, 0.0
      %2356 = vadd.xlane.f32.xlu0 %v2355
      %v2357 = vpop.xlane.xlu0 %2356
      %v2358 = vsel %vm501, %v2290, 0.0
      %2359 = vadd.xlane.f32.xlu0 %v2358
      %v2360 = vpop.xlane.xlu0 %2359
      %v2361 = vsel %vm501, %v2292, 0.0
      %2362 = vadd.xlane.f32.xlu0 %v2361
      %v2363 = vpop.xlane.xlu0 %2362
      %v2364 = vsel %vm501, %v2294, 0.0
      %2365 = vadd.xlane.f32.xlu0 %v2364
      %v2366 = vpop.xlane.xlu0 %2365
      %v2367 = vsel %vm501, %v2296, 0.0
      %2368 = vadd.xlane.f32.xlu0 %v2367
      %v2369 = vpop.xlane.xlu0 %2368
      %v2370 = vsel %vm501, %v2298, 0.0
      %2371 = vadd.xlane.f32.xlu0 %v2370
      %v2372 = vpop.xlane.xlu0 %2371
      %v2373 = vsel %vm501, %v2300, 0.0
      %2374 = vadd.xlane.f32.xlu0 %v2373
      %v2375 = vpop.xlane.xlu0 %2374
      %v2376 = vsel %vm501, %v2302, 0.0
      %2377 = vadd.xlane.f32.xlu0 %v2376
      %v2378 = vpop.xlane.xlu0 %2377
      %v2379 = vsel %vm501, %v2304, 0.0
      %2380 = vadd.xlane.f32.xlu0 %v2379
      %v2381 = vpop.xlane.xlu0 %2380
      %v2382 = vsel %vm501, %v2306, 0.0
      %2383 = vadd.xlane.f32.xlu0 %v2382
      %v2384 = vpop.xlane.xlu0 %2383
      %v2385 = vsel %vm501, %v2308, 0.0
      %2386 = vadd.xlane.f32.xlu0 %v2385
      %v2387 = vpop.xlane.xlu0 %2386
      %v2388 = vsel %vm501, %v2310, 0.0
      %2389 = vadd.xlane.f32.xlu0 %v2388
      %v2390 = vpop.xlane.xlu0 %2389
      %v2391 = vsel %vm501, %v2312, 0.0
      %2392 = vadd.xlane.f32.xlu0 %v2391
      %v2393 = vpop.xlane.xlu0 %2392
      %v2394 = vsel %vm501, %v2314, 0.0
      %2395 = vadd.xlane.f32.xlu0 %v2394
      %v2396 = vpop.xlane.xlu0 %2395
      %v2397 = vsel %vm501, %v2316, 0.0
      %2398 = vadd.xlane.f32.xlu0 %v2397
      %v2399 = vpop.xlane.xlu0 %2398
      %v2400 = vsel %vm501, %v2318, 0.0
      %2401 = vadd.xlane.f32.xlu0 %v2400
      %v2402 = vpop.xlane.xlu0 %2401
      %v2403 = vsel %vm501, %v2320, 0.0
      %2404 = vadd.xlane.f32.xlu0 %v2403
      %v2405 = vpop.xlane.xlu0 %2404
      %v2406 = vsel %vm501, %v2322, 0.0
      %2407 = vadd.xlane.f32.xlu0 %v2406
      %v2408 = vpop.xlane.xlu0 %2407
      %v2409 = vsel %vm501, %v2324, 0.0
      %2410 = vadd.xlane.f32.xlu0 %v2409
      %v2411 = vpop.xlane.xlu0 %2410
      %v2412 = vsel %vm501, %v2326, 0.0
      %2413 = vadd.xlane.f32.xlu0 %v2412
      %v2414 = vpop.xlane.xlu0 %2413
      %v2415 = vsel %vm501, %v2328, 0.0
      %2416 = vadd.xlane.f32.xlu0 %v2415
      %v2417 = vpop.xlane.xlu0 %2416
      %v2418 = vsel %vm501, %v2330, 0.0
      %2419 = vadd.xlane.f32.xlu0 %v2418
      %v2420 = vpop.xlane.xlu0 %2419
      %v2421 = vsel %vm501, %v2332, 0.0
      %2422 = vadd.xlane.f32.xlu0 %v2421
      %v2423 = vpop.xlane.xlu0 %2422
      %v2424 = vsel %vm501, %v2334, 0.0
      %2425 = vadd.xlane.f32.xlu0 %v2424
      %v2426 = vpop.xlane.xlu0 %2425
      %v2427 = vsel %vm501, %v2336, 0.0
      %2428 = vadd.xlane.f32.xlu0 %v2427
      %v2429 = vpop.xlane.xlu0 %2428
      %v2430 = vsel %vm501, %v2338, 0.0
      %2431 = vadd.xlane.f32.xlu0 %v2430
      %v2432 = vpop.xlane.xlu0 %2431
      %v2433 = vsel %vm501, %v2340, 0.0
      %2434 = vadd.xlane.f32.xlu0 %v2433
      %v2435 = vpop.xlane.xlu0 %2434
      %v2436 = vsel %vm501, %v2342, 0.0
      %2437 = vadd.xlane.f32.xlu0 %v2436
      %v2438 = vpop.xlane.xlu0 %2437
      %v2439 = vrcp.pop %v2345
      %v2440 = vmul.f32 %v2280, %v2439
      %v2441 = vrcp.pop %v2348
      %v2442 = vmul.f32 %v2282, %v2441
      %v2443 = vrcp.pop %v2351
      %v2444 = vmul.f32 %v2284, %v2443
      %v2445 = vrcp.pop %v2354
      %v2446 = vmul.f32 %v2286, %v2445
      %v2447 = vrcp.pop %v2357
      %v2448 = vmul.f32 %v2288, %v2447
      %v2449 = vrcp.pop %v2360
      %v2450 = vmul.f32 %v2290, %v2449
      %v2451 = vrcp.pop %v2363
      %v2452 = vmul.f32 %v2292, %v2451
      %v2453 = vrcp.pop %v2366
      %v2454 = vmul.f32 %v2294, %v2453
      %v2455 = vrcp.pop %v2369
      %v2456 = vmul.f32 %v2296, %v2455
      %v2457 = vrcp.pop %v2372
      %v2458 = vmul.f32 %v2298, %v2457
      %v2459 = vrcp.pop %v2375
      %v2460 = vmul.f32 %v2300, %v2459
      %v2461 = vrcp.pop %v2378
      %v2462 = vmul.f32 %v2302, %v2461
      %v2463 = vrcp.pop %v2381
      %v2464 = vmul.f32 %v2304, %v2463
      %v2465 = vrcp.pop %v2384
      %v2466 = vmul.f32 %v2306, %v2465
      %v2467 = vrcp.pop %v2387
      %v2468 = vmul.f32 %v2308, %v2467
      %v2469 = vrcp.pop %v2390
      %v2470 = vmul.f32 %v2310, %v2469
      %v2471 = vrcp.pop %v2393
      %v2472 = vmul.f32 %v2312, %v2471
      %v2473 = vrcp.pop %v2396
      %v2474 = vmul.f32 %v2314, %v2473
      %v2475 = vrcp.pop %v2399
      %v2476 = vmul.f32 %v2316, %v2475
      %v2477 = vrcp.pop %v2402
      %v2478 = vmul.f32 %v2318, %v2477
      %v2479 = vrcp.pop %v2405
      %v2480 = vmul.f32 %v2320, %v2479
      %v2481 = vrcp.pop %v2408
      %v2482 = vmul.f32 %v2322, %v2481
      %v2483 = vrcp.pop %v2411
      %v2484 = vmul.f32 %v2324, %v2483
      %v2485 = vrcp.pop %v2414
      %v2486 = vmul.f32 %v2326, %v2485
      %v2487 = vrcp.pop %v2417
      %v2488 = vmul.f32 %v2328, %v2487
      %v2489 = vrcp.pop %v2420
      %v2490 = vmul.f32 %v2330, %v2489
      %v2491 = vrcp.pop %v2423
      %v2492 = vmul.f32 %v2332, %v2491
      %v2493 = vrcp.pop %v2426
      %v2494 = vmul.f32 %v2334, %v2493
      %v2495 = vrcp.pop %v2429
      %v2496 = vmul.f32 %v2336, %v2495
      %v2497 = vrcp.pop %v2432
      %v2498 = vmul.f32 %v2338, %v2497
      %v2499 = vrcp.pop %v2435
      %v2500 = vmul.f32 %v2340, %v2499
      %v2501 = vrcp.pop %v2438
      %v2502 = vmul.f32 %v2342, %v2501
      %v2503 = vpack.c.bf16 %v2440, %v2440
      %v2504 = vpack.c.bf16 %v2442, %v2442
      %v2505 = vpack.c.bf16 %v2444, %v2444
      %v2506 = vpack.c.bf16 %v2446, %v2446
      %v2507 = vpack.c.bf16 %v2448, %v2448
      %v2508 = vpack.c.bf16 %v2450, %v2450
      %v2509 = vpack.c.bf16 %v2452, %v2452
      %v2510 = vpack.c.bf16 %v2454, %v2454
      %v2511 = vpack.c.bf16 %v2456, %v2456
      %v2512 = vpack.c.bf16 %v2458, %v2458
      %v2513 = vpack.c.bf16 %v2460, %v2460
      %v2514 = vpack.c.bf16 %v2462, %v2462
      %v2515 = vpack.c.bf16 %v2464, %v2464
      %v2516 = vpack.c.bf16 %v2466, %v2466
      %v2517 = vpack.c.bf16 %v2468, %v2468
      %v2518 = vpack.c.bf16 %v2470, %v2470
      %v2519 = vpack.c.bf16 %v2472, %v2472
      %v2520 = vpack.c.bf16 %v2474, %v2474
      %v2521 = vpack.c.bf16 %v2476, %v2476
      %v2522 = vpack.c.bf16 %v2478, %v2478
      %v2523 = vpack.c.bf16 %v2480, %v2480
      %v2524 = vpack.c.bf16 %v2482, %v2482
      %v2525 = vpack.c.bf16 %v2484, %v2484
      %v2526 = vpack.c.bf16 %v2486, %v2486
      %v2527 = vpack.c.bf16 %v2488, %v2488
      %v2528 = vpack.c.bf16 %v2490, %v2490
      %v2529 = vpack.c.bf16 %v2492, %v2492
      %v2530 = vpack.c.bf16 %v2494, %v2494
      %v2531 = vpack.c.bf16 %v2496, %v2496
      %v2532 = vpack.c.bf16 %v2498, %v2498
      %v2533 = vpack.c.bf16 %v2500, %v2500
      %v2534 = vpack.c.bf16 %v2502, %v2502
      %2535 = vrot.lane.b32.xlu0 %v443, 64
      %v2536 = vpop.permute.xlu0 %2535
      %v2538 = vsel %vm501, %v2503, 0
      %vm2540 = vcmask 1043456
      %v2542 = vsel %vm2540, %v2536, 0
      %2544 = vmatprep.subr.bf16.mxu0 0
      %2545 = vmatpush1.bf16.msra.mxu0 %v2542
      %2546 = vmatprep.subr.bf16.mxu0 0
      %2547 = vmatpush1.bf16.msra.mxu0 0
      %2548 = vmatprep.subr.bf16.mxu0 0
      %2549 = vmatpush1.bf16.msra.mxu0 0
      %2550 = vmatprep.subr.bf16.mxu0 0
      %2551 = vmatpush1.bf16.msra.mxu0 0
      %2552 = vmatprep.subr.bf16.mxu0 0
      %2553 = vmatpush1.bf16.msra.mxu0 0
      %2554 = vmatprep.subr.bf16.mxu0 0
      %2555 = vmatpush1.bf16.msra.mxu0 0
      %2556 = vmatprep.subr.bf16.mxu0 0
      %2557 = vmatpush1.bf16.msra.mxu0 0
      %2558 = vmatprep.subr.bf16.mxu0 0
      %2559 = vmatpush1.bf16.msra.mxu0 0
      %2560 = vmatprep.subr.bf16.mxu0 0
      %2561 = vmatpush1.bf16.msra.mxu0 0
      %2562 = vmatprep.subr.bf16.mxu0 0
      %2563 = vmatpush1.bf16.msra.mxu0 0
      %2564 = vmatprep.subr.bf16.mxu0 0
      %2565 = vmatpush1.bf16.msra.mxu0 0
      %2566 = vmatprep.subr.bf16.mxu0 0
      %2567 = vmatpush1.bf16.msra.mxu0 0
      %2568 = vmatprep.subr.bf16.mxu0 0
      %2569 = vmatpush1.bf16.msra.mxu0 0
      %2570 = vmatprep.subr.bf16.mxu0 0
      %2571 = vmatpush1.bf16.msra.mxu0 0
      %2572 = vmatprep.subr.bf16.mxu0 0
      %2573 = vmatpush1.bf16.msra.mxu0 0
      %2574 = vmatprep.subr.bf16.mxu0 0
      %2575 = vmatpush1.bf16.msra.mxu0 0
      %2576 = vmatprep.mubr.bf16.mxu0 0
      %2577 = vmatmul.mubr.bf16.gmra.mrb[0].mxu0 %v2538
      %v2578 = vpop.f32.mrb[0].mxu0
      %v2579 = vadd.f32 0.0, %v2578
      %v2580 = vpop.f32.mrb[0].mxu0
      %v2581 = vpop.f32.mrb[0].mxu0
      %v2582 = vpop.f32.mrb[0].mxu0
      %2583 = vdwg.mxu0
      %2584 = vrot.lane.b32.xlu0 %v444, 64
      %v2585 = vpop.permute.xlu0 %2584
      %v2587 = vsel %vm501, %v2504, 0
      %v2590 = vsel %vm2540, %v2585, 0
      %2592 = vmatprep.subr.bf16.mxu0 0
      %2593 = vmatpush1.bf16.msra.mxu0 %v2590
      %2594 = vmatprep.subr.bf16.mxu0 0
      %2595 = vmatpush1.bf16.msra.mxu0 0
      %2596 = vmatprep.subr.bf16.mxu0 0
      %2597 = vmatpush1.bf16.msra.mxu0 0
      %2598 = vmatprep.subr.bf16.mxu0 0
      %2599 = vmatpush1.bf16.msra.mxu0 0
      %2600 = vmatprep.subr.bf16.mxu0 0
      %2601 = vmatpush1.bf16.msra.mxu0 0
      %2602 = vmatprep.subr.bf16.mxu0 0
      %2603 = vmatpush1.bf16.msra.mxu0 0
      %2604 = vmatprep.subr.bf16.mxu0 0
      %2605 = vmatpush1.bf16.msra.mxu0 0
      %2606 = vmatprep.subr.bf16.mxu0 0
      %2607 = vmatpush1.bf16.msra.mxu0 0
      %2608 = vmatprep.subr.bf16.mxu0 0
      %2609 = vmatpush1.bf16.msra.mxu0 0
      %2610 = vmatprep.subr.bf16.mxu0 0
      %2611 = vmatpush1.bf16.msra.mxu0 0
      %2612 = vmatprep.subr.bf16.mxu0 0
      %2613 = vmatpush1.bf16.msra.mxu0 0
      %2614 = vmatprep.subr.bf16.mxu0 0
      %2615 = vmatpush1.bf16.msra.mxu0 0
      %2616 = vmatprep.subr.bf16.mxu0 0
      %2617 = vmatpush1.bf16.msra.mxu0 0
      %2618 = vmatprep.subr.bf16.mxu0 0
      %2619 = vmatpush1.bf16.msra.mxu0 0
      %2620 = vmatprep.subr.bf16.mxu0 0
      %2621 = vmatpush1.bf16.msra.mxu0 0
      %2622 = vmatprep.subr.bf16.mxu0 0
      %2623 = vmatpush1.bf16.msra.mxu0 0
      %2624 = vmatprep.mubr.bf16.mxu0 0
      %2625 = vmatmul.mubr.bf16.gmra.mrb[0].mxu0 %v2587
      %v2626 = vpop.f32.mrb[0].mxu0
      %v2627 = vadd.f32 0.0, %v2626
      %v2628 = vpop.f32.mrb[0].mxu0
      %v2629 = vpop.f32.mrb[0].mxu0
      %v2630 = vpop.f32.mrb[0].mxu0
      %2631 = vdwg.mxu0
      %2632 = vrot.lane.b32.xlu0 %v445, 64
      %v2633 = vpop.permute.xlu0 %2632
      %v2635 = vsel %vm501, %v2505, 0
      %v2638 = vsel %vm2540, %v2633, 0
      %2640 = vmatprep.subr.bf16.mxu0 0
      %2641 = vmatpush1.bf16.msra.mxu0 %v2638
      %2642 = vmatprep.subr.bf16.mxu0 0
      %2643 = vmatpush1.bf16.msra.mxu0 0
      %2644 = vmatprep.subr.bf16.mxu0 0
      %2645 = vmatpush1.bf16.msra.mxu0 0
      %2646 = vmatprep.subr.bf16.mxu0 0
      %2647 = vmatpush1.bf16.msra.mxu0 0
      %2648 = vmatprep.subr.bf16.mxu0 0
      %2649 = vmatpush1.bf16.msra.mxu0 0
      %2650 = vmatprep.subr.bf16.mxu0 0
      %2651 = vmatpush1.bf16.msra.mxu0 0
      %2652 = vmatprep.subr.bf16.mxu0 0
      %2653 = vmatpush1.bf16.msra.mxu0 0
      %2654 = vmatprep.subr.bf16.mxu0 0
      %2655 = vmatpush1.bf16.msra.mxu0 0
      %2656 = vmatprep.subr.bf16.mxu0 0
      %2657 = vmatpush1.bf16.msra.mxu0 0
      %2658 = vmatprep.subr.bf16.mxu0 0
      %2659 = vmatpush1.bf16.msra.mxu0 0
      %2660 = vmatprep.subr.bf16.mxu0 0
      %2661 = vmatpush1.bf16.msra.mxu0 0
      %2662 = vmatprep.subr.bf16.mxu0 0
      %2663 = vmatpush1.bf16.msra.mxu0 0
      %2664 = vmatprep.subr.bf16.mxu0 0
      %2665 = vmatpush1.bf16.msra.mxu0 0
      %2666 = vmatprep.subr.bf16.mxu0 0
      %2667 = vmatpush1.bf16.msra.mxu0 0
      %2668 = vmatprep.subr.bf16.mxu0 0
      %2669 = vmatpush1.bf16.msra.mxu0 0
      %2670 = vmatprep.subr.bf16.mxu0 0
      %2671 = vmatpush1.bf16.msra.mxu0 0
      %2672 = vmatprep.mubr.bf16.mxu0 0
      %2673 = vmatmul.mubr.bf16.gmra.mrb[0].mxu0 %v2635
      %v2674 = vpop.f32.mrb[0].mxu0
      %v2675 = vadd.f32 0.0, %v2674
      %v2676 = vpop.f32.mrb[0].mxu0
      %v2677 = vpop.f32.mrb[0].mxu0
      %v2678 = vpop.f32.mrb[0].mxu0
      %2679 = vdwg.mxu0
      %2680 = vrot.lane.b32.xlu0 %v446, 64
      %v2681 = vpop.permute.xlu0 %2680
      %v2683 = vsel %vm501, %v2506, 0
      %v2686 = vsel %vm2540, %v2681, 0
      %2688 = vmatprep.subr.bf16.mxu0 0
      %2689 = vmatpush1.bf16.msra.mxu0 %v2686
      %2690 = vmatprep.subr.bf16.mxu0 0
      %2691 = vmatpush1.bf16.msra.mxu0 0
      %2692 = vmatprep.subr.bf16.mxu0 0
      %2693 = vmatpush1.bf16.msra.mxu0 0
      %2694 = vmatprep.subr.bf16.mxu0 0
      %2695 = vmatpush1.bf16.msra.mxu0 0
      %2696 = vmatprep.subr.bf16.mxu0 0
      %2697 = vmatpush1.bf16.msra.mxu0 0
      %2698 = vmatprep.subr.bf16.mxu0 0
      %2699 = vmatpush1.bf16.msra.mxu0 0
      %2700 = vmatprep.subr.bf16.mxu0 0
      %2701 = vmatpush1.bf16.msra.mxu0 0
      %2702 = vmatprep.subr.bf16.mxu0 0
      %2703 = vmatpush1.bf16.msra.mxu0 0
      %2704 = vmatprep.subr.bf16.mxu0 0
      %2705 = vmatpush1.bf16.msra.mxu0 0
      %2706 = vmatprep.subr.bf16.mxu0 0
      %2707 = vmatpush1.bf16.msra.mxu0 0
      %2708 = vmatprep.subr.bf16.mxu0 0
      %2709 = vmatpush1.bf16.msra.mxu0 0
      %2710 = vmatprep.subr.bf16.mxu0 0
      %2711 = vmatpush1.bf16.msra.mxu0 0
      %2712 = vmatprep.subr.bf16.mxu0 0
      %2713 = vmatpush1.bf16.msra.mxu0 0
      %2714 = vmatprep.subr.bf16.mxu0 0
      %2715 = vmatpush1.bf16.msra.mxu0 0
      %2716 = vmatprep.subr.bf16.mxu0 0
      %2717 = vmatpush1.bf16.msra.mxu0 0
      %2718 = vmatprep.subr.bf16.mxu0 0
      %2719 = vmatpush1.bf16.msra.mxu0 0
      %2720 = vmatprep.mubr.bf16.mxu0 0
      %2721 = vmatmul.mubr.bf16.gmra.mrb[0].mxu0 %v2683
      %v2722 = vpop.f32.mrb[0].mxu0
      %v2723 = vadd.f32 0.0, %v2722
      %v2724 = vpop.f32.mrb[0].mxu0
      %v2725 = vpop.f32.mrb[0].mxu0
      %v2726 = vpop.f32.mrb[0].mxu0
      %2727 = vdwg.mxu0
      %2728 = vrot.lane.b32.xlu0 %v447, 64
      %v2729 = vpop.permute.xlu0 %2728
      %v2731 = vsel %vm501, %v2507, 0
      %v2734 = vsel %vm2540, %v2729, 0
      %2736 = vmatprep.subr.bf16.mxu0 0
      %2737 = vmatpush1.bf16.msra.mxu0 %v2734
      %2738 = vmatprep.subr.bf16.mxu0 0
      %2739 = vmatpush1.bf16.msra.mxu0 0
      %2740 = vmatprep.subr.bf16.mxu0 0
      %2741 = vmatpush1.bf16.msra.mxu0 0
      %2742 = vmatprep.subr.bf16.mxu0 0
      %2743 = vmatpush1.bf16.msra.mxu0 0
      %2744 = vmatprep.subr.bf16.mxu0 0
      %2745 = vmatpush1.bf16.msra.mxu0 0
      %2746 = vmatprep.subr.bf16.mxu0 0
      %2747 = vmatpush1.bf16.msra.mxu0 0
      %2748 = vmatprep.subr.bf16.mxu0 0
      %2749 = vmatpush1.bf16.msra.mxu0 0
      %2750 = vmatprep.subr.bf16.mxu0 0
      %2751 = vmatpush1.bf16.msra.mxu0 0
      %2752 = vmatprep.subr.bf16.mxu0 0
      %2753 = vmatpush1.bf16.msra.mxu0 0
      %2754 = vmatprep.subr.bf16.mxu0 0
      %2755 = vmatpush1.bf16.msra.mxu0 0
      %2756 = vmatprep.subr.bf16.mxu0 0
      %2757 = vmatpush1.bf16.msra.mxu0 0
      %2758 = vmatprep.subr.bf16.mxu0 0
      %2759 = vmatpush1.bf16.msra.mxu0 0
      %2760 = vmatprep.subr.bf16.mxu0 0
      %2761 = vmatpush1.bf16.msra.mxu0 0
      %2762 = vmatprep.subr.bf16.mxu0 0
      %2763 = vmatpush1.bf16.msra.mxu0 0
      %2764 = vmatprep.subr.bf16.mxu0 0
      %2765 = vmatpush1.bf16.msra.mxu0 0
      %2766 = vmatprep.subr.bf16.mxu0 0
      %2767 = vmatpush1.bf16.msra.mxu0 0
      %2768 = vmatprep.mubr.bf16.mxu0 0
      %2769 = vmatmul.mubr.bf16.gmra.mrb[0].mxu0 %v2731
      %v2770 = vpop.f32.mrb[0].mxu0
      %v2771 = vadd.f32 0.0, %v2770
      %v2772 = vpop.f32.mrb[0].mxu0
      %v2773 = vpop.f32.mrb[0].mxu0
      %v2774 = vpop.f32.mrb[0].mxu0
      %2775 = vdwg.mxu0
      %2776 = vrot.lane.b32.xlu0 %v448, 64
      %v2777 = vpop.permute.xlu0 %2776
      %v2779 = vsel %vm501, %v2508, 0
      %v2782 = vsel %vm2540, %v2777, 0
      %2784 = vmatprep.subr.bf16.mxu0 0
      %2785 = vmatpush1.bf16.msra.mxu0 %v2782
      %2786 = vmatprep.subr.bf16.mxu0 0
      %2787 = vmatpush1.bf16.msra.mxu0 0
      %2788 = vmatprep.subr.bf16.mxu0 0
      %2789 = vmatpush1.bf16.msra.mxu0 0
      %2790 = vmatprep.subr.bf16.mxu0 0
      %2791 = vmatpush1.bf16.msra.mxu0 0
      %2792 = vmatprep.subr.bf16.mxu0 0
      %2793 = vmatpush1.bf16.msra.mxu0 0
      %2794 = vmatprep.subr.bf16.mxu0 0
      %2795 = vmatpush1.bf16.msra.mxu0 0
      %2796 = vmatprep.subr.bf16.mxu0 0
      %2797 = vmatpush1.bf16.msra.mxu0 0
      %2798 = vmatprep.subr.bf16.mxu0 0
      %2799 = vmatpush1.bf16.msra.mxu0 0
      %2800 = vmatprep.subr.bf16.mxu0 0
      %2801 = vmatpush1.bf16.msra.mxu0 0
      %2802 = vmatprep.subr.bf16.mxu0 0
      %2803 = vmatpush1.bf16.msra.mxu0 0
      %2804 = vmatprep.subr.bf16.mxu0 0
      %2805 = vmatpush1.bf16.msra.mxu0 0
      %2806 = vmatprep.subr.bf16.mxu0 0
      %2807 = vmatpush1.bf16.msra.mxu0 0
      %2808 = vmatprep.subr.bf16.mxu0 0
      %2809 = vmatpush1.bf16.msra.mxu0 0
      %2810 = vmatprep.subr.bf16.mxu0 0
      %2811 = vmatpush1.bf16.msra.mxu0 0
      %2812 = vmatprep.subr.bf16.mxu0 0
      %2813 = vmatpush1.bf16.msra.mxu0 0
      %2814 = vmatprep.subr.bf16.mxu0 0
      %2815 = vmatpush1.bf16.msra.mxu0 0
      %2816 = vmatprep.mubr.bf16.mxu0 0
      %2817 = vmatmul.mubr.bf16.gmra.mrb[0].mxu0 %v2779
      %v2818 = vpop.f32.mrb[0].mxu0
      %v2819 = vadd.f32 0.0, %v2818
      %v2820 = vpop.f32.mrb[0].mxu0
      %v2821 = vpop.f32.mrb[0].mxu0
      %v2822 = vpop.f32.mrb[0].mxu0
      %2823 = vdwg.mxu0
      %2824 = vrot.lane.b32.xlu0 %v449, 64
      %v2825 = vpop.permute.xlu0 %2824
      %v2827 = vsel %vm501, %v2509, 0
      %v2830 = vsel %vm2540, %v2825, 0
      %2832 = vmatprep.subr.bf16.mxu0 0
      %2833 = vmatpush1.bf16.msra.mxu0 %v2830
      %2834 = vmatprep.subr.bf16.mxu0 0
      %2835 = vmatpush1.bf16.msra.mxu0 0
      %2836 = vmatprep.subr.bf16.mxu0 0
      %2837 = vmatpush1.bf16.msra.mxu0 0
      %2838 = vmatprep.subr.bf16.mxu0 0
      %2839 = vmatpush1.bf16.msra.mxu0 0
      %2840 = vmatprep.subr.bf16.mxu0 0
      %2841 = vmatpush1.bf16.msra.mxu0 0
      %2842 = vmatprep.subr.bf16.mxu0 0
      %2843 = vmatpush1.bf16.msra.mxu0 0
      %2844 = vmatprep.subr.bf16.mxu0 0
      %2845 = vmatpush1.bf16.msra.mxu0 0
      %2846 = vmatprep.subr.bf16.mxu0 0
      %2847 = vmatpush1.bf16.msra.mxu0 0
      %2848 = vmatprep.subr.bf16.mxu0 0
      %2849 = vmatpush1.bf16.msra.mxu0 0
      %2850 = vmatprep.subr.bf16.mxu0 0
      %2851 = vmatpush1.bf16.msra.mxu0 0
      %2852 = vmatprep.subr.bf16.mxu0 0
      %2853 = vmatpush1.bf16.msra.mxu0 0
      %2854 = vmatprep.subr.bf16.mxu0 0
      %2855 = vmatpush1.bf16.msra.mxu0 0
      %2856 = vmatprep.subr.bf16.mxu0 0
      %2857 = vmatpush1.bf16.msra.mxu0 0
      %2858 = vmatprep.subr.bf16.mxu0 0
      %2859 = vmatpush1.bf16.msra.mxu0 0
      %2860 = vmatprep.subr.bf16.mxu0 0
      %2861 = vmatpush1.bf16.msra.mxu0 0
      %2862 = vmatprep.subr.bf16.mxu0 0
      %2863 = vmatpush1.bf16.msra.mxu0 0
      %2864 = vmatprep.mubr.bf16.mxu0 0
      %2865 = vmatmul.mubr.bf16.gmra.mrb[0].mxu0 %v2827
      %v2866 = vpop.f32.mrb[0].mxu0
      %v2867 = vadd.f32 0.0, %v2866
      %v2868 = vpop.f32.mrb[0].mxu0
      %v2869 = vpop.f32.mrb[0].mxu0
      %v2870 = vpop.f32.mrb[0].mxu0
      %2871 = vdwg.mxu0
      %2872 = vrot.lane.b32.xlu0 %v450, 64
      %v2873 = vpop.permute.xlu0 %2872
      %v2875 = vsel %vm501, %v2510, 0
      %v2878 = vsel %vm2540, %v2873, 0
      %2880 = vmatprep.subr.bf16.mxu0 0
      %2881 = vmatpush1.bf16.msra.mxu0 %v2878
      %2882 = vmatprep.subr.bf16.mxu0 0
      %2883 = vmatpush1.bf16.msra.mxu0 0
      %2884 = vmatprep.subr.bf16.mxu0 0
      %2885 = vmatpush1.bf16.msra.mxu0 0
      %2886 = vmatprep.subr.bf16.mxu0 0
      %2887 = vmatpush1.bf16.msra.mxu0 0
      %2888 = vmatprep.subr.bf16.mxu0 0
      %2889 = vmatpush1.bf16.msra.mxu0 0
      %2890 = vmatprep.subr.bf16.mxu0 0
      %2891 = vmatpush1.bf16.msra.mxu0 0
      %2892 = vmatprep.subr.bf16.mxu0 0
      %2893 = vmatpush1.bf16.msra.mxu0 0
      %2894 = vmatprep.subr.bf16.mxu0 0
      %2895 = vmatpush1.bf16.msra.mxu0 0
      %2896 = vmatprep.subr.bf16.mxu0 0
      %2897 = vmatpush1.bf16.msra.mxu0 0
      %2898 = vmatprep.subr.bf16.mxu0 0
      %2899 = vmatpush1.bf16.msra.mxu0 0
      %2900 = vmatprep.subr.bf16.mxu0 0
      %2901 = vmatpush1.bf16.msra.mxu0 0
      %2902 = vmatprep.subr.bf16.mxu0 0
      %2903 = vmatpush1.bf16.msra.mxu0 0
      %2904 = vmatprep.subr.bf16.mxu0 0
      %2905 = vmatpush1.bf16.msra.mxu0 0
      %2906 = vmatprep.subr.bf16.mxu0 0
      %2907 = vmatpush1.bf16.msra.mxu0 0
      %2908 = vmatprep.subr.bf16.mxu0 0
      %2909 = vmatpush1.bf16.msra.mxu0 0
      %2910 = vmatprep.subr.bf16.mxu0 0
      %2911 = vmatpush1.bf16.msra.mxu0 0
      %2912 = vmatprep.mubr.bf16.mxu0 0
      %2913 = vmatmul.mubr.bf16.gmra.mrb[0].mxu0 %v2875
      %v2914 = vpop.f32.mrb[0].mxu0
      %v2915 = vadd.f32 0.0, %v2914
      %v2916 = vpop.f32.mrb[0].mxu0
      %v2917 = vpop.f32.mrb[0].mxu0
      %v2918 = vpop.f32.mrb[0].mxu0
      %2919 = vdwg.mxu0
      %2920 = vrot.lane.b32.xlu0 %v885, 64
      %v2921 = vpop.permute.xlu0 %2920
      %v2923 = vsel %vm501, %v2511, 0
      %v2926 = vsel %vm2540, %v2921, 0
      %2928 = vmatprep.subr.bf16.mxu0 0
      %2929 = vmatpush1.bf16.msra.mxu0 %v2926
      %2930 = vmatprep.subr.bf16.mxu0 0
      %2931 = vmatpush1.bf16.msra.mxu0 0
      %2932 = vmatprep.subr.bf16.mxu0 0
      %2933 = vmatpush1.bf16.msra.mxu0 0
      %2934 = vmatprep.subr.bf16.mxu0 0
      %2935 = vmatpush1.bf16.msra.mxu0 0
      %2936 = vmatprep.subr.bf16.mxu0 0
      %2937 = vmatpush1.bf16.msra.mxu0 0
      %2938 = vmatprep.subr.bf16.mxu0 0
      %2939 = vmatpush1.bf16.msra.mxu0 0
      %2940 = vmatprep.subr.bf16.mxu0 0
      %2941 = vmatpush1.bf16.msra.mxu0 0
      %2942 = vmatprep.subr.bf16.mxu0 0
      %2943 = vmatpush1.bf16.msra.mxu0 0
      %2944 = vmatprep.subr.bf16.mxu0 0
      %2945 = vmatpush1.bf16.msra.mxu0 0
      %2946 = vmatprep.subr.bf16.mxu0 0
      %2947 = vmatpush1.bf16.msra.mxu0 0
      %2948 = vmatprep.subr.bf16.mxu0 0
      %2949 = vmatpush1.bf16.msra.mxu0 0
      %2950 = vmatprep.subr.bf16.mxu0 0
      %2951 = vmatpush1.bf16.msra.mxu0 0
      %2952 = vmatprep.subr.bf16.mxu0 0
      %2953 = vmatpush1.bf16.msra.mxu0 0
      %2954 = vmatprep.subr.bf16.mxu0 0
      %2955 = vmatpush1.bf16.msra.mxu0 0
      %2956 = vmatprep.subr.bf16.mxu0 0
      %2957 = vmatpush1.bf16.msra.mxu0 0
      %2958 = vmatprep.subr.bf16.mxu0 0
      %2959 = vmatpush1.bf16.msra.mxu0 0
      %2960 = vmatprep.mubr.bf16.mxu0 0
      %2961 = vmatmul.mubr.bf16.gmra.mrb[0].mxu0 %v2923
      %v2962 = vpop.f32.mrb[0].mxu0
      %v2963 = vadd.f32 0.0, %v2962
      %v2964 = vpop.f32.mrb[0].mxu0
      %v2965 = vpop.f32.mrb[0].mxu0
      %v2966 = vpop.f32.mrb[0].mxu0
      %2967 = vdwg.mxu0
      %2968 = vrot.lane.b32.xlu0 %v935, 64
      %v2969 = vpop.permute.xlu0 %2968
      %v2971 = vsel %vm501, %v2512, 0
      %v2974 = vsel %vm2540, %v2969, 0
      %2976 = vmatprep.subr.bf16.mxu0 0
      %2977 = vmatpush1.bf16.msra.mxu0 %v2974
      %2978 = vmatprep.subr.bf16.mxu0 0
      %2979 = vmatpush1.bf16.msra.mxu0 0
      %2980 = vmatprep.subr.bf16.mxu0 0
      %2981 = vmatpush1.bf16.msra.mxu0 0
      %2982 = vmatprep.subr.bf16.mxu0 0
      %2983 = vmatpush1.bf16.msra.mxu0 0
      %2984 = vmatprep.subr.bf16.mxu0 0
      %2985 = vmatpush1.bf16.msra.mxu0 0
      %2986 = vmatprep.subr.bf16.mxu0 0
      %2987 = vmatpush1.bf16.msra.mxu0 0
      %2988 = vmatprep.subr.bf16.mxu0 0
      %2989 = vmatpush1.bf16.msra.mxu0 0
      %2990 = vmatprep.subr.bf16.mxu0 0
      %2991 = vmatpush1.bf16.msra.mxu0 0
      %2992 = vmatprep.subr.bf16.mxu0 0
      %2993 = vmatpush1.bf16.msra.mxu0 0
      %2994 = vmatprep.subr.bf16.mxu0 0
      %2995 = vmatpush1.bf16.msra.mxu0 0
      %2996 = vmatprep.subr.bf16.mxu0 0
      %2997 = vmatpush1.bf16.msra.mxu0 0
      %2998 = vmatprep.subr.bf16.mxu0 0
      %2999 = vmatpush1.bf16.msra.mxu0 0
      %3000 = vmatprep.subr.bf16.mxu0 0
      %3001 = vmatpush1.bf16.msra.mxu0 0
      %3002 = vmatprep.subr.bf16.mxu0 0
      %3003 = vmatpush1.bf16.msra.mxu0 0
      %3004 = vmatprep.subr.bf16.mxu0 0
      %3005 = vmatpush1.bf16.msra.mxu0 0
      %3006 = vmatprep.subr.bf16.mxu0 0
      %3007 = vmatpush1.bf16.msra.mxu0 0
      %3008 = vmatprep.mubr.bf16.mxu0 0
      %3009 = vmatmul.mubr.bf16.gmra.mrb[0].mxu0 %v2971
      %v3010 = vpop.f32.mrb[0].mxu0
      %v3011 = vadd.f32 0.0, %v3010
      %v3012 = vpop.f32.mrb[0].mxu0
      %v3013 = vpop.f32.mrb[0].mxu0
      %v3014 = vpop.f32.mrb[0].mxu0
      %3015 = vdwg.mxu0
      %3016 = vrot.lane.b32.xlu0 %v985, 64
      %v3017 = vpop.permute.xlu0 %3016
      %v3019 = vsel %vm501, %v2513, 0
      %v3022 = vsel %vm2540, %v3017, 0
      %3024 = vmatprep.subr.bf16.mxu0 0
      %3025 = vmatpush1.bf16.msra.mxu0 %v3022
      %3026 = vmatprep.subr.bf16.mxu0 0
      %3027 = vmatpush1.bf16.msra.mxu0 0
      %3028 = vmatprep.subr.bf16.mxu0 0
      %3029 = vmatpush1.bf16.msra.mxu0 0
      %3030 = vmatprep.subr.bf16.mxu0 0
      %3031 = vmatpush1.bf16.msra.mxu0 0
      %3032 = vmatprep.subr.bf16.mxu0 0
      %3033 = vmatpush1.bf16.msra.mxu0 0
      %3034 = vmatprep.subr.bf16.mxu0 0
      %3035 = vmatpush1.bf16.msra.mxu0 0
      %3036 = vmatprep.subr.bf16.mxu0 0
      %3037 = vmatpush1.bf16.msra.mxu0 0
      %3038 = vmatprep.subr.bf16.mxu0 0
      %3039 = vmatpush1.bf16.msra.mxu0 0
      %3040 = vmatprep.subr.bf16.mxu0 0
      %3041 = vmatpush1.bf16.msra.mxu0 0
      %3042 = vmatprep.subr.bf16.mxu0 0
      %3043 = vmatpush1.bf16.msra.mxu0 0
      %3044 = vmatprep.subr.bf16.mxu0 0
      %3045 = vmatpush1.bf16.msra.mxu0 0
      %3046 = vmatprep.subr.bf16.mxu0 0
      %3047 = vmatpush1.bf16.msra.mxu0 0
      %3048 = vmatprep.subr.bf16.mxu0 0
      %3049 = vmatpush1.bf16.msra.mxu0 0
      %3050 = vmatprep.subr.bf16.mxu0 0
      %3051 = vmatpush1.bf16.msra.mxu0 0
      %3052 = vmatprep.subr.bf16.mxu0 0
      %3053 = vmatpush1.bf16.msra.mxu0 0
      %3054 = vmatprep.subr.bf16.mxu0 0
      %3055 = vmatpush1.bf16.msra.mxu0 0
      %3056 = vmatprep.mubr.bf16.mxu0 0
      %3057 = vmatmul.mubr.bf16.gmra.mrb[0].mxu0 %v3019
      %v3058 = vpop.f32.mrb[0].mxu0
      %v3059 = vadd.f32 0.0, %v3058
      %v3060 = vpop.f32.mrb[0].mxu0
      %v3061 = vpop.f32.mrb[0].mxu0
      %v3062 = vpop.f32.mrb[0].mxu0
      %3063 = vdwg.mxu0
      %3064 = vrot.lane.b32.xlu0 %v1035, 64
      %v3065 = vpop.permute.xlu0 %3064
      %v3067 = vsel %vm501, %v2514, 0
      %v3070 = vsel %vm2540, %v3065, 0
      %3072 = vmatprep.subr.bf16.mxu0 0
      %3073 = vmatpush1.bf16.msra.mxu0 %v3070
      %3074 = vmatprep.subr.bf16.mxu0 0
      %3075 = vmatpush1.bf16.msra.mxu0 0
      %3076 = vmatprep.subr.bf16.mxu0 0
      %3077 = vmatpush1.bf16.msra.mxu0 0
      %3078 = vmatprep.subr.bf16.mxu0 0
      %3079 = vmatpush1.bf16.msra.mxu0 0
      %3080 = vmatprep.subr.bf16.mxu0 0
      %3081 = vmatpush1.bf16.msra.mxu0 0
      %3082 = vmatprep.subr.bf16.mxu0 0
      %3083 = vmatpush1.bf16.msra.mxu0 0
      %3084 = vmatprep.subr.bf16.mxu0 0
      %3085 = vmatpush1.bf16.msra.mxu0 0
      %3086 = vmatprep.subr.bf16.mxu0 0
      %3087 = vmatpush1.bf16.msra.mxu0 0
      %3088 = vmatprep.subr.bf16.mxu0 0
      %3089 = vmatpush1.bf16.msra.mxu0 0
      %3090 = vmatprep.subr.bf16.mxu0 0
      %3091 = vmatpush1.bf16.msra.mxu0 0
      %3092 = vmatprep.subr.bf16.mxu0 0
      %3093 = vmatpush1.bf16.msra.mxu0 0
      %3094 = vmatprep.subr.bf16.mxu0 0
      %3095 = vmatpush1.bf16.msra.mxu0 0
      %3096 = vmatprep.subr.bf16.mxu0 0
      %3097 = vmatpush1.bf16.msra.mxu0 0
      %3098 = vmatprep.subr.bf16.mxu0 0
      %3099 = vmatpush1.bf16.msra.mxu0 0
      %3100 = vmatprep.subr.bf16.mxu0 0
      %3101 = vmatpush1.bf16.msra.mxu0 0
      %3102 = vmatprep.subr.bf16.mxu0 0
      %3103 = vmatpush1.bf16.msra.mxu0 0
      %3104 = vmatprep.mubr.bf16.mxu0 0
      %3105 = vmatmul.mubr.bf16.gmra.mrb[0].mxu0 %v3067
      %v3106 = vpop.f32.mrb[0].mxu0
      %v3107 = vadd.f32 0.0, %v3106
      %v3108 = vpop.f32.mrb[0].mxu0
      %v3109 = vpop.f32.mrb[0].mxu0
      %v3110 = vpop.f32.mrb[0].mxu0
      %3111 = vdwg.mxu0
      %3112 = vrot.lane.b32.xlu0 %v1085, 64
      %v3113 = vpop.permute.xlu0 %3112
      %v3115 = vsel %vm501, %v2515, 0
      %v3118 = vsel %vm2540, %v3113, 0
      %3120 = vmatprep.subr.bf16.mxu0 0
      %3121 = vmatpush1.bf16.msra.mxu0 %v3118
      %3122 = vmatprep.subr.bf16.mxu0 0
      %3123 = vmatpush1.bf16.msra.mxu0 0
      %3124 = vmatprep.subr.bf16.mxu0 0
      %3125 = vmatpush1.bf16.msra.mxu0 0
      %3126 = vmatprep.subr.bf16.mxu0 0
      %3127 = vmatpush1.bf16.msra.mxu0 0
      %3128 = vmatprep.subr.bf16.mxu0 0
      %3129 = vmatpush1.bf16.msra.mxu0 0
      %3130 = vmatprep.subr.bf16.mxu0 0
      %3131 = vmatpush1.bf16.msra.mxu0 0
      %3132 = vmatprep.subr.bf16.mxu0 0
      %3133 = vmatpush1.bf16.msra.mxu0 0
      %3134 = vmatprep.subr.bf16.mxu0 0
      %3135 = vmatpush1.bf16.msra.mxu0 0
      %3136 = vmatprep.subr.bf16.mxu0 0
      %3137 = vmatpush1.bf16.msra.mxu0 0
      %3138 = vmatprep.subr.bf16.mxu0 0
      %3139 = vmatpush1.bf16.msra.mxu0 0
      %3140 = vmatprep.subr.bf16.mxu0 0
      %3141 = vmatpush1.bf16.msra.mxu0 0
      %3142 = vmatprep.subr.bf16.mxu0 0
      %3143 = vmatpush1.bf16.msra.mxu0 0
      %3144 = vmatprep.subr.bf16.mxu0 0
      %3145 = vmatpush1.bf16.msra.mxu0 0
      %3146 = vmatprep.subr.bf16.mxu0 0
      %3147 = vmatpush1.bf16.msra.mxu0 0
      %3148 = vmatprep.subr.bf16.mxu0 0
      %3149 = vmatpush1.bf16.msra.mxu0 0
      %3150 = vmatprep.subr.bf16.mxu0 0
      %3151 = vmatpush1.bf16.msra.mxu0 0
      %3152 = vmatprep.mubr.bf16.mxu0 0
      %3153 = vmatmul.mubr.bf16.gmra.mrb[0].mxu0 %v3115
      %v3154 = vpop.f32.mrb[0].mxu0
      %v3155 = vadd.f32 0.0, %v3154
      %v3156 = vpop.f32.mrb[0].mxu0
      %v3157 = vpop.f32.mrb[0].mxu0
      %v3158 = vpop.f32.mrb[0].mxu0
      %3159 = vdwg.mxu0
      %3160 = vrot.lane.b32.xlu0 %v1135, 64
      %v3161 = vpop.permute.xlu0 %3160
      %v3163 = vsel %vm501, %v2516, 0
      %v3166 = vsel %vm2540, %v3161, 0
      %3168 = vmatprep.subr.bf16.mxu0 0
      %3169 = vmatpush1.bf16.msra.mxu0 %v3166
      %3170 = vmatprep.subr.bf16.mxu0 0
      %3171 = vmatpush1.bf16.msra.mxu0 0
      %3172 = vmatprep.subr.bf16.mxu0 0
      %3173 = vmatpush1.bf16.msra.mxu0 0
      %3174 = vmatprep.subr.bf16.mxu0 0
      %3175 = vmatpush1.bf16.msra.mxu0 0
      %3176 = vmatprep.subr.bf16.mxu0 0
      %3177 = vmatpush1.bf16.msra.mxu0 0
      %3178 = vmatprep.subr.bf16.mxu0 0
      %3179 = vmatpush1.bf16.msra.mxu0 0
      %3180 = vmatprep.subr.bf16.mxu0 0
      %3181 = vmatpush1.bf16.msra.mxu0 0
      %3182 = vmatprep.subr.bf16.mxu0 0
      %3183 = vmatpush1.bf16.msra.mxu0 0
      %3184 = vmatprep.subr.bf16.mxu0 0
      %3185 = vmatpush1.bf16.msra.mxu0 0
      %3186 = vmatprep.subr.bf16.mxu0 0
      %3187 = vmatpush1.bf16.msra.mxu0 0
      %3188 = vmatprep.subr.bf16.mxu0 0
      %3189 = vmatpush1.bf16.msra.mxu0 0
      %3190 = vmatprep.subr.bf16.mxu0 0
      %3191 = vmatpush1.bf16.msra.mxu0 0
      %3192 = vmatprep.subr.bf16.mxu0 0
      %3193 = vmatpush1.bf16.msra.mxu0 0
      %3194 = vmatprep.subr.bf16.mxu0 0
      %3195 = vmatpush1.bf16.msra.mxu0 0
      %3196 = vmatprep.subr.bf16.mxu0 0
      %3197 = vmatpush1.bf16.msra.mxu0 0
      %3198 = vmatprep.subr.bf16.mxu0 0
      %3199 = vmatpush1.bf16.msra.mxu0 0
      %3200 = vmatprep.mubr.bf16.mxu0 0
      %3201 = vmatmul.mubr.bf16.gmra.mrb[0].mxu0 %v3163
      %v3202 = vpop.f32.mrb[0].mxu0
      %v3203 = vadd.f32 0.0, %v3202
      %v3204 = vpop.f32.mrb[0].mxu0
      %v3205 = vpop.f32.mrb[0].mxu0
      %v3206 = vpop.f32.mrb[0].mxu0
      %3207 = vdwg.mxu0
      %3208 = vrot.lane.b32.xlu0 %v1185, 64
      %v3209 = vpop.permute.xlu0 %3208
      %v3211 = vsel %vm501, %v2517, 0
      %v3214 = vsel %vm2540, %v3209, 0
      %3216 = vmatprep.subr.bf16.mxu0 0
      %3217 = vmatpush1.bf16.msra.mxu0 %v3214
      %3218 = vmatprep.subr.bf16.mxu0 0
      %3219 = vmatpush1.bf16.msra.mxu0 0
      %3220 = vmatprep.subr.bf16.mxu0 0
      %3221 = vmatpush1.bf16.msra.mxu0 0
      %3222 = vmatprep.subr.bf16.mxu0 0
      %3223 = vmatpush1.bf16.msra.mxu0 0
      %3224 = vmatprep.subr.bf16.mxu0 0
      %3225 = vmatpush1.bf16.msra.mxu0 0
      %3226 = vmatprep.subr.bf16.mxu0 0
      %3227 = vmatpush1.bf16.msra.mxu0 0
      %3228 = vmatprep.subr.bf16.mxu0 0
      %3229 = vmatpush1.bf16.msra.mxu0 0
      %3230 = vmatprep.subr.bf16.mxu0 0
      %3231 = vmatpush1.bf16.msra.mxu0 0
      %3232 = vmatprep.subr.bf16.mxu0 0
      %3233 = vmatpush1.bf16.msra.mxu0 0
      %3234 = vmatprep.subr.bf16.mxu0 0
      %3235 = vmatpush1.bf16.msra.mxu0 0
      %3236 = vmatprep.subr.bf16.mxu0 0
      %3237 = vmatpush1.bf16.msra.mxu0 0
      %3238 = vmatprep.subr.bf16.mxu0 0
      %3239 = vmatpush1.bf16.msra.mxu0 0
      %3240 = vmatprep.subr.bf16.mxu0 0
      %3241 = vmatpush1.bf16.msra.mxu0 0
      %3242 = vmatprep.subr.bf16.mxu0 0
      %3243 = vmatpush1.bf16.msra.mxu0 0
      %3244 = vmatprep.subr.bf16.mxu0 0
      %3245 = vmatpush1.bf16.msra.mxu0 0
      %3246 = vmatprep.subr.bf16.mxu0 0
      %3247 = vmatpush1.bf16.msra.mxu0 0
      %3248 = vmatprep.mubr.bf16.mxu0 0
      %3249 = vmatmul.mubr.bf16.gmra.mrb[0].mxu0 %v3211
      %v3250 = vpop.f32.mrb[0].mxu0
      %v3251 = vadd.f32 0.0, %v3250
      %v3252 = vpop.f32.mrb[0].mxu0
      %v3253 = vpop.f32.mrb[0].mxu0
      %v3254 = vpop.f32.mrb[0].mxu0
      %3255 = vdwg.mxu0
      %3256 = vrot.lane.b32.xlu0 %v1235, 64
      %v3257 = vpop.permute.xlu0 %3256
      %v3259 = vsel %vm501, %v2518, 0
      %v3262 = vsel %vm2540, %v3257, 0
      %3264 = vmatprep.subr.bf16.mxu0 0
      %3265 = vmatpush1.bf16.msra.mxu0 %v3262
      %3266 = vmatprep.subr.bf16.mxu0 0
      %3267 = vmatpush1.bf16.msra.mxu0 0
      %3268 = vmatprep.subr.bf16.mxu0 0
      %3269 = vmatpush1.bf16.msra.mxu0 0
      %3270 = vmatprep.subr.bf16.mxu0 0
      %3271 = vmatpush1.bf16.msra.mxu0 0
      %3272 = vmatprep.subr.bf16.mxu0 0
      %3273 = vmatpush1.bf16.msra.mxu0 0
      %3274 = vmatprep.subr.bf16.mxu0 0
      %3275 = vmatpush1.bf16.msra.mxu0 0
      %3276 = vmatprep.subr.bf16.mxu0 0
      %3277 = vmatpush1.bf16.msra.mxu0 0
      %3278 = vmatprep.subr.bf16.mxu0 0
      %3279 = vmatpush1.bf16.msra.mxu0 0
      %3280 = vmatprep.subr.bf16.mxu0 0
      %3281 = vmatpush1.bf16.msra.mxu0 0
      %3282 = vmatprep.subr.bf16.mxu0 0
      %3283 = vmatpush1.bf16.msra.mxu0 0
      %3284 = vmatprep.subr.bf16.mxu0 0
      %3285 = vmatpush1.bf16.msra.mxu0 0
      %3286 = vmatprep.subr.bf16.mxu0 0
      %3287 = vmatpush1.bf16.msra.mxu0 0
      %3288 = vmatprep.subr.bf16.mxu0 0
      %3289 = vmatpush1.bf16.msra.mxu0 0
      %3290 = vmatprep.subr.bf16.mxu0 0
      %3291 = vmatpush1.bf16.msra.mxu0 0
      %3292 = vmatprep.subr.bf16.mxu0 0
      %3293 = vmatpush1.bf16.msra.mxu0 0
      %3294 = vmatprep.subr.bf16.mxu0 0
      %3295 = vmatpush1.bf16.msra.mxu0 0
      %3296 = vmatprep.mubr.bf16.mxu0 0
      %3297 = vmatmul.mubr.bf16.gmra.mrb[0].mxu0 %v3259
      %v3298 = vpop.f32.mrb[0].mxu0
      %v3299 = vadd.f32 0.0, %v3298
      %v3300 = vpop.f32.mrb[0].mxu0
      %v3301 = vpop.f32.mrb[0].mxu0
      %v3302 = vpop.f32.mrb[0].mxu0
      %3303 = vdwg.mxu0
      %3304 = vrot.lane.b32.xlu0 %v1285, 64
      %v3305 = vpop.permute.xlu0 %3304
      %v3307 = vsel %vm501, %v2519, 0
      %v3310 = vsel %vm2540, %v3305, 0
      %3312 = vmatprep.subr.bf16.mxu0 0
      %3313 = vmatpush1.bf16.msra.mxu0 %v3310
      %3314 = vmatprep.subr.bf16.mxu0 0
      %3315 = vmatpush1.bf16.msra.mxu0 0
      %3316 = vmatprep.subr.bf16.mxu0 0
      %3317 = vmatpush1.bf16.msra.mxu0 0
      %3318 = vmatprep.subr.bf16.mxu0 0
      %3319 = vmatpush1.bf16.msra.mxu0 0
      %3320 = vmatprep.subr.bf16.mxu0 0
      %3321 = vmatpush1.bf16.msra.mxu0 0
      %3322 = vmatprep.subr.bf16.mxu0 0
      %3323 = vmatpush1.bf16.msra.mxu0 0
      %3324 = vmatprep.subr.bf16.mxu0 0
      %3325 = vmatpush1.bf16.msra.mxu0 0
      %3326 = vmatprep.subr.bf16.mxu0 0
      %3327 = vmatpush1.bf16.msra.mxu0 0
      %3328 = vmatprep.subr.bf16.mxu0 0
      %3329 = vmatpush1.bf16.msra.mxu0 0
      %3330 = vmatprep.subr.bf16.mxu0 0
      %3331 = vmatpush1.bf16.msra.mxu0 0
      %3332 = vmatprep.subr.bf16.mxu0 0
      %3333 = vmatpush1.bf16.msra.mxu0 0
      %3334 = vmatprep.subr.bf16.mxu0 0
      %3335 = vmatpush1.bf16.msra.mxu0 0
      %3336 = vmatprep.subr.bf16.mxu0 0
      %3337 = vmatpush1.bf16.msra.mxu0 0
      %3338 = vmatprep.subr.bf16.mxu0 0
      %3339 = vmatpush1.bf16.msra.mxu0 0
      %3340 = vmatprep.subr.bf16.mxu0 0
      %3341 = vmatpush1.bf16.msra.mxu0 0
      %3342 = vmatprep.subr.bf16.mxu0 0
      %3343 = vmatpush1.bf16.msra.mxu0 0
      %3344 = vmatprep.mubr.bf16.mxu0 0
      %3345 = vmatmul.mubr.bf16.gmra.mrb[0].mxu0 %v3307
      %v3346 = vpop.f32.mrb[0].mxu0
      %v3347 = vadd.f32 0.0, %v3346
      %v3348 = vpop.f32.mrb[0].mxu0
      %v3349 = vpop.f32.mrb[0].mxu0
      %v3350 = vpop.f32.mrb[0].mxu0
      %3351 = vdwg.mxu0
      %3352 = vrot.lane.b32.xlu0 %v1335, 64
      %v3353 = vpop.permute.xlu0 %3352
      %v3355 = vsel %vm501, %v2520, 0
      %v3358 = vsel %vm2540, %v3353, 0
      %3360 = vmatprep.subr.bf16.mxu0 0
      %3361 = vmatpush1.bf16.msra.mxu0 %v3358
      %3362 = vmatprep.subr.bf16.mxu0 0
      %3363 = vmatpush1.bf16.msra.mxu0 0
      %3364 = vmatprep.subr.bf16.mxu0 0
      %3365 = vmatpush1.bf16.msra.mxu0 0
      %3366 = vmatprep.subr.bf16.mxu0 0
      %3367 = vmatpush1.bf16.msra.mxu0 0
      %3368 = vmatprep.subr.bf16.mxu0 0
      %3369 = vmatpush1.bf16.msra.mxu0 0
      %3370 = vmatprep.subr.bf16.mxu0 0
      %3371 = vmatpush1.bf16.msra.mxu0 0
      %3372 = vmatprep.subr.bf16.mxu0 0
      %3373 = vmatpush1.bf16.msra.mxu0 0
      %3374 = vmatprep.subr.bf16.mxu0 0
      %3375 = vmatpush1.bf16.msra.mxu0 0
      %3376 = vmatprep.subr.bf16.mxu0 0
      %3377 = vmatpush1.bf16.msra.mxu0 0
      %3378 = vmatprep.subr.bf16.mxu0 0
      %3379 = vmatpush1.bf16.msra.mxu0 0
      %3380 = vmatprep.subr.bf16.mxu0 0
      %3381 = vmatpush1.bf16.msra.mxu0 0
      %3382 = vmatprep.subr.bf16.mxu0 0
      %3383 = vmatpush1.bf16.msra.mxu0 0
      %3384 = vmatprep.subr.bf16.mxu0 0
      %3385 = vmatpush1.bf16.msra.mxu0 0
      %3386 = vmatprep.subr.bf16.mxu0 0
      %3387 = vmatpush1.bf16.msra.mxu0 0
      %3388 = vmatprep.subr.bf16.mxu0 0
      %3389 = vmatpush1.bf16.msra.mxu0 0
      %3390 = vmatprep.subr.bf16.mxu0 0
      %3391 = vmatpush1.bf16.msra.mxu0 0
      %3392 = vmatprep.mubr.bf16.mxu0 0
      %3393 = vmatmul.mubr.bf16.gmra.mrb[0].mxu0 %v3355
      %v3394 = vpop.f32.mrb[0].mxu0
      %v3395 = vadd.f32 0.0, %v3394
      %v3396 = vpop.f32.mrb[0].mxu0
      %v3397 = vpop.f32.mrb[0].mxu0
      %v3398 = vpop.f32.mrb[0].mxu0
      %3399 = vdwg.mxu0
      %3400 = vrot.lane.b32.xlu0 %v1385, 64
      %v3401 = vpop.permute.xlu0 %3400
      %v3403 = vsel %vm501, %v2521, 0
      %v3406 = vsel %vm2540, %v3401, 0
      %3408 = vmatprep.subr.bf16.mxu0 0
      %3409 = vmatpush1.bf16.msra.mxu0 %v3406
      %3410 = vmatprep.subr.bf16.mxu0 0
      %3411 = vmatpush1.bf16.msra.mxu0 0
      %3412 = vmatprep.subr.bf16.mxu0 0
      %3413 = vmatpush1.bf16.msra.mxu0 0
      %3414 = vmatprep.subr.bf16.mxu0 0
      %3415 = vmatpush1.bf16.msra.mxu0 0
      %3416 = vmatprep.subr.bf16.mxu0 0
      %3417 = vmatpush1.bf16.msra.mxu0 0
      %3418 = vmatprep.subr.bf16.mxu0 0
      %3419 = vmatpush1.bf16.msra.mxu0 0
      %3420 = vmatprep.subr.bf16.mxu0 0
      %3421 = vmatpush1.bf16.msra.mxu0 0
      %3422 = vmatprep.subr.bf16.mxu0 0
      %3423 = vmatpush1.bf16.msra.mxu0 0
      %3424 = vmatprep.subr.bf16.mxu0 0
      %3425 = vmatpush1.bf16.msra.mxu0 0
      %3426 = vmatprep.subr.bf16.mxu0 0
      %3427 = vmatpush1.bf16.msra.mxu0 0
      %3428 = vmatprep.subr.bf16.mxu0 0
      %3429 = vmatpush1.bf16.msra.mxu0 0
      %3430 = vmatprep.subr.bf16.mxu0 0
      %3431 = vmatpush1.bf16.msra.mxu0 0
      %3432 = vmatprep.subr.bf16.mxu0 0
      %3433 = vmatpush1.bf16.msra.mxu0 0
      %3434 = vmatprep.subr.bf16.mxu0 0
      %3435 = vmatpush1.bf16.msra.mxu0 0
      %3436 = vmatprep.subr.bf16.mxu0 0
      %3437 = vmatpush1.bf16.msra.mxu0 0
      %3438 = vmatprep.subr.bf16.mxu0 0
      %3439 = vmatpush1.bf16.msra.mxu0 0
      %3440 = vmatprep.mubr.bf16.mxu0 0
      %3441 = vmatmul.mubr.bf16.gmra.mrb[0].mxu0 %v3403
      %v3442 = vpop.f32.mrb[0].mxu0
      %v3443 = vadd.f32 0.0, %v3442
      %v3444 = vpop.f32.mrb[0].mxu0
      %v3445 = vpop.f32.mrb[0].mxu0
      %v3446 = vpop.f32.mrb[0].mxu0
      %3447 = vdwg.mxu0
      %3448 = vrot.lane.b32.xlu0 %v1435, 64
      %v3449 = vpop.permute.xlu0 %3448
      %v3451 = vsel %vm501, %v2522, 0
      %v3454 = vsel %vm2540, %v3449, 0
      %3456 = vmatprep.subr.bf16.mxu0 0
      %3457 = vmatpush1.bf16.msra.mxu0 %v3454
      %3458 = vmatprep.subr.bf16.mxu0 0
      %3459 = vmatpush1.bf16.msra.mxu0 0
      %3460 = vmatprep.subr.bf16.mxu0 0
      %3461 = vmatpush1.bf16.msra.mxu0 0
      %3462 = vmatprep.subr.bf16.mxu0 0
      %3463 = vmatpush1.bf16.msra.mxu0 0
      %3464 = vmatprep.subr.bf16.mxu0 0
      %3465 = vmatpush1.bf16.msra.mxu0 0
      %3466 = vmatprep.subr.bf16.mxu0 0
      %3467 = vmatpush1.bf16.msra.mxu0 0
      %3468 = vmatprep.subr.bf16.mxu0 0
      %3469 = vmatpush1.bf16.msra.mxu0 0
      %3470 = vmatprep.subr.bf16.mxu0 0
      %3471 = vmatpush1.bf16.msra.mxu0 0
      %3472 = vmatprep.subr.bf16.mxu0 0
      %3473 = vmatpush1.bf16.msra.mxu0 0
      %3474 = vmatprep.subr.bf16.mxu0 0
      %3475 = vmatpush1.bf16.msra.mxu0 0
      %3476 = vmatprep.subr.bf16.mxu0 0
      %3477 = vmatpush1.bf16.msra.mxu0 0
      %3478 = vmatprep.subr.bf16.mxu0 0
      %3479 = vmatpush1.bf16.msra.mxu0 0
      %3480 = vmatprep.subr.bf16.mxu0 0
      %3481 = vmatpush1.bf16.msra.mxu0 0
      %3482 = vmatprep.subr.bf16.mxu0 0
      %3483 = vmatpush1.bf16.msra.mxu0 0
      %3484 = vmatprep.subr.bf16.mxu0 0
      %3485 = vmatpush1.bf16.msra.mxu0 0
      %3486 = vmatprep.subr.bf16.mxu0 0
      %3487 = vmatpush1.bf16.msra.mxu0 0
      %3488 = vmatprep.mubr.bf16.mxu0 0
      %3489 = vmatmul.mubr.bf16.gmra.mrb[0].mxu0 %v3451
      %v3490 = vpop.f32.mrb[0].mxu0
      %v3491 = vadd.f32 0.0, %v3490
      %v3492 = vpop.f32.mrb[0].mxu0
      %v3493 = vpop.f32.mrb[0].mxu0
      %v3494 = vpop.f32.mrb[0].mxu0
      %3495 = vdwg.mxu0
      %3496 = vrot.lane.b32.xlu0 %v1485, 64
      %v3497 = vpop.permute.xlu0 %3496
      %v3499 = vsel %vm501, %v2523, 0
      %v3502 = vsel %vm2540, %v3497, 0
      %3504 = vmatprep.subr.bf16.mxu0 0
      %3505 = vmatpush1.bf16.msra.mxu0 %v3502
      %3506 = vmatprep.subr.bf16.mxu0 0
      %3507 = vmatpush1.bf16.msra.mxu0 0
      %3508 = vmatprep.subr.bf16.mxu0 0
      %3509 = vmatpush1.bf16.msra.mxu0 0
      %3510 = vmatprep.subr.bf16.mxu0 0
      %3511 = vmatpush1.bf16.msra.mxu0 0
      %3512 = vmatprep.subr.bf16.mxu0 0
      %3513 = vmatpush1.bf16.msra.mxu0 0
      %3514 = vmatprep.subr.bf16.mxu0 0
      %3515 = vmatpush1.bf16.msra.mxu0 0
      %3516 = vmatprep.subr.bf16.mxu0 0
      %3517 = vmatpush1.bf16.msra.mxu0 0
      %3518 = vmatprep.subr.bf16.mxu0 0
      %3519 = vmatpush1.bf16.msra.mxu0 0
      %3520 = vmatprep.subr.bf16.mxu0 0
      %3521 = vmatpush1.bf16.msra.mxu0 0
      %3522 = vmatprep.subr.bf16.mxu0 0
      %3523 = vmatpush1.bf16.msra.mxu0 0
      %3524 = vmatprep.subr.bf16.mxu0 0
      %3525 = vmatpush1.bf16.msra.mxu0 0
      %3526 = vmatprep.subr.bf16.mxu0 0
      %3527 = vmatpush1.bf16.msra.mxu0 0
      %3528 = vmatprep.subr.bf16.mxu0 0
      %3529 = vmatpush1.bf16.msra.mxu0 0
      %3530 = vmatprep.subr.bf16.mxu0 0
      %3531 = vmatpush1.bf16.msra.mxu0 0
      %3532 = vmatprep.subr.bf16.mxu0 0
      %3533 = vmatpush1.bf16.msra.mxu0 0
      %3534 = vmatprep.subr.bf16.mxu0 0
      %3535 = vmatpush1.bf16.msra.mxu0 0
      %3536 = vmatprep.mubr.bf16.mxu0 0
      %3537 = vmatmul.mubr.bf16.gmra.mrb[0].mxu0 %v3499
      %v3538 = vpop.f32.mrb[0].mxu0
      %v3539 = vadd.f32 0.0, %v3538
      %v3540 = vpop.f32.mrb[0].mxu0
      %v3541 = vpop.f32.mrb[0].mxu0
      %v3542 = vpop.f32.mrb[0].mxu0
      %3543 = vdwg.mxu0
      %3544 = vrot.lane.b32.xlu0 %v1535, 64
      %v3545 = vpop.permute.xlu0 %3544
      %v3547 = vsel %vm501, %v2524, 0
      %v3550 = vsel %vm2540, %v3545, 0
      %3552 = vmatprep.subr.bf16.mxu0 0
      %3553 = vmatpush1.bf16.msra.mxu0 %v3550
      %3554 = vmatprep.subr.bf16.mxu0 0
      %3555 = vmatpush1.bf16.msra.mxu0 0
      %3556 = vmatprep.subr.bf16.mxu0 0
      %3557 = vmatpush1.bf16.msra.mxu0 0
      %3558 = vmatprep.subr.bf16.mxu0 0
      %3559 = vmatpush1.bf16.msra.mxu0 0
      %3560 = vmatprep.subr.bf16.mxu0 0
      %3561 = vmatpush1.bf16.msra.mxu0 0
      %3562 = vmatprep.subr.bf16.mxu0 0
      %3563 = vmatpush1.bf16.msra.mxu0 0
      %3564 = vmatprep.subr.bf16.mxu0 0
      %3565 = vmatpush1.bf16.msra.mxu0 0
      %3566 = vmatprep.subr.bf16.mxu0 0
      %3567 = vmatpush1.bf16.msra.mxu0 0
      %3568 = vmatprep.subr.bf16.mxu0 0
      %3569 = vmatpush1.bf16.msra.mxu0 0
      %3570 = vmatprep.subr.bf16.mxu0 0
      %3571 = vmatpush1.bf16.msra.mxu0 0
      %3572 = vmatprep.subr.bf16.mxu0 0
      %3573 = vmatpush1.bf16.msra.mxu0 0
      %3574 = vmatprep.subr.bf16.mxu0 0
      %3575 = vmatpush1.bf16.msra.mxu0 0
      %3576 = vmatprep.subr.bf16.mxu0 0
      %3577 = vmatpush1.bf16.msra.mxu0 0
      %3578 = vmatprep.subr.bf16.mxu0 0
      %3579 = vmatpush1.bf16.msra.mxu0 0
      %3580 = vmatprep.subr.bf16.mxu0 0
      %3581 = vmatpush1.bf16.msra.mxu0 0
      %3582 = vmatprep.subr.bf16.mxu0 0
      %3583 = vmatpush1.bf16.msra.mxu0 0
      %3584 = vmatprep.mubr.bf16.mxu0 0
      %3585 = vmatmul.mubr.bf16.gmra.mrb[0].mxu0 %v3547
      %v3586 = vpop.f32.mrb[0].mxu0
      %v3587 = vadd.f32 0.0, %v3586
      %v3588 = vpop.f32.mrb[0].mxu0
      %v3589 = vpop.f32.mrb[0].mxu0
      %v3590 = vpop.f32.mrb[0].mxu0
      %3591 = vdwg.mxu0
      %3592 = vrot.lane.b32.xlu0 %v1585, 64
      %v3593 = vpop.permute.xlu0 %3592
      %v3595 = vsel %vm501, %v2525, 0
      %v3598 = vsel %vm2540, %v3593, 0
      %3600 = vmatprep.subr.bf16.mxu0 0
      %3601 = vmatpush1.bf16.msra.mxu0 %v3598
      %3602 = vmatprep.subr.bf16.mxu0 0
      %3603 = vmatpush1.bf16.msra.mxu0 0
      %3604 = vmatprep.subr.bf16.mxu0 0
      %3605 = vmatpush1.bf16.msra.mxu0 0
      %3606 = vmatprep.subr.bf16.mxu0 0
      %3607 = vmatpush1.bf16.msra.mxu0 0
      %3608 = vmatprep.subr.bf16.mxu0 0
      %3609 = vmatpush1.bf16.msra.mxu0 0
      %3610 = vmatprep.subr.bf16.mxu0 0
      %3611 = vmatpush1.bf16.msra.mxu0 0
      %3612 = vmatprep.subr.bf16.mxu0 0
      %3613 = vmatpush1.bf16.msra.mxu0 0
      %3614 = vmatprep.subr.bf16.mxu0 0
      %3615 = vmatpush1.bf16.msra.mxu0 0
      %3616 = vmatprep.subr.bf16.mxu0 0
      %3617 = vmatpush1.bf16.msra.mxu0 0
      %3618 = vmatprep.subr.bf16.mxu0 0
      %3619 = vmatpush1.bf16.msra.mxu0 0
      %3620 = vmatprep.subr.bf16.mxu0 0
      %3621 = vmatpush1.bf16.msra.mxu0 0
      %3622 = vmatprep.subr.bf16.mxu0 0
      %3623 = vmatpush1.bf16.msra.mxu0 0
      %3624 = vmatprep.subr.bf16.mxu0 0
      %3625 = vmatpush1.bf16.msra.mxu0 0
      %3626 = vmatprep.subr.bf16.mxu0 0
      %3627 = vmatpush1.bf16.msra.mxu0 0
      %3628 = vmatprep.subr.bf16.mxu0 0
      %3629 = vmatpush1.bf16.msra.mxu0 0
      %3630 = vmatprep.subr.bf16.mxu0 0
      %3631 = vmatpush1.bf16.msra.mxu0 0
      %3632 = vmatprep.mubr.bf16.mxu0 0
      %3633 = vmatmul.mubr.bf16.gmra.mrb[0].mxu0 %v3595
      %v3634 = vpop.f32.mrb[0].mxu0
      %v3635 = vadd.f32 0.0, %v3634
      %v3636 = vpop.f32.mrb[0].mxu0
      %v3637 = vpop.f32.mrb[0].mxu0
      %v3638 = vpop.f32.mrb[0].mxu0
      %3639 = vdwg.mxu0
      %3640 = vrot.lane.b32.xlu0 %v1635, 64
      %v3641 = vpop.permute.xlu0 %3640
      %v3643 = vsel %vm501, %v2526, 0
      %v3646 = vsel %vm2540, %v3641, 0
      %3648 = vmatprep.subr.bf16.mxu0 0
      %3649 = vmatpush1.bf16.msra.mxu0 %v3646
      %3650 = vmatprep.subr.bf16.mxu0 0
      %3651 = vmatpush1.bf16.msra.mxu0 0
      %3652 = vmatprep.subr.bf16.mxu0 0
      %3653 = vmatpush1.bf16.msra.mxu0 0
      %3654 = vmatprep.subr.bf16.mxu0 0
      %3655 = vmatpush1.bf16.msra.mxu0 0
      %3656 = vmatprep.subr.bf16.mxu0 0
      %3657 = vmatpush1.bf16.msra.mxu0 0
      %3658 = vmatprep.subr.bf16.mxu0 0
      %3659 = vmatpush1.bf16.msra.mxu0 0
      %3660 = vmatprep.subr.bf16.mxu0 0
      %3661 = vmatpush1.bf16.msra.mxu0 0
      %3662 = vmatprep.subr.bf16.mxu0 0
      %3663 = vmatpush1.bf16.msra.mxu0 0
      %3664 = vmatprep.subr.bf16.mxu0 0
      %3665 = vmatpush1.bf16.msra.mxu0 0
      %3666 = vmatprep.subr.bf16.mxu0 0
      %3667 = vmatpush1.bf16.msra.mxu0 0
      %3668 = vmatprep.subr.bf16.mxu0 0
      %3669 = vmatpush1.bf16.msra.mxu0 0
      %3670 = vmatprep.subr.bf16.mxu0 0
      %3671 = vmatpush1.bf16.msra.mxu0 0
      %3672 = vmatprep.subr.bf16.mxu0 0
      %3673 = vmatpush1.bf16.msra.mxu0 0
      %3674 = vmatprep.subr.bf16.mxu0 0
      %3675 = vmatpush1.bf16.msra.mxu0 0
      %3676 = vmatprep.subr.bf16.mxu0 0
      %3677 = vmatpush1.bf16.msra.mxu0 0
      %3678 = vmatprep.subr.bf16.mxu0 0
      %3679 = vmatpush1.bf16.msra.mxu0 0
      %3680 = vmatprep.mubr.bf16.mxu0 0
      %3681 = vmatmul.mubr.bf16.gmra.mrb[0].mxu0 %v3643
      %v3682 = vpop.f32.mrb[0].mxu0
      %v3683 = vadd.f32 0.0, %v3682
      %v3684 = vpop.f32.mrb[0].mxu0
      %v3685 = vpop.f32.mrb[0].mxu0
      %v3686 = vpop.f32.mrb[0].mxu0
      %3687 = vdwg.mxu0
      %3688 = vrot.lane.b32.xlu0 %v1685, 64
      %v3689 = vpop.permute.xlu0 %3688
      %v3691 = vsel %vm501, %v2527, 0
      %v3694 = vsel %vm2540, %v3689, 0
      %3696 = vmatprep.subr.bf16.mxu0 0
      %3697 = vmatpush1.bf16.msra.mxu0 %v3694
      %3698 = vmatprep.subr.bf16.mxu0 0
      %3699 = vmatpush1.bf16.msra.mxu0 0
      %3700 = vmatprep.subr.bf16.mxu0 0
      %3701 = vmatpush1.bf16.msra.mxu0 0
      %3702 = vmatprep.subr.bf16.mxu0 0
      %3703 = vmatpush1.bf16.msra.mxu0 0
      %3704 = vmatprep.subr.bf16.mxu0 0
      %3705 = vmatpush1.bf16.msra.mxu0 0
      %3706 = vmatprep.subr.bf16.mxu0 0
      %3707 = vmatpush1.bf16.msra.mxu0 0
      %3708 = vmatprep.subr.bf16.mxu0 0
      %3709 = vmatpush1.bf16.msra.mxu0 0
      %3710 = vmatprep.subr.bf16.mxu0 0
      %3711 = vmatpush1.bf16.msra.mxu0 0
      %3712 = vmatprep.subr.bf16.mxu0 0
      %3713 = vmatpush1.bf16.msra.mxu0 0
      %3714 = vmatprep.subr.bf16.mxu0 0
      %3715 = vmatpush1.bf16.msra.mxu0 0
      %3716 = vmatprep.subr.bf16.mxu0 0
      %3717 = vmatpush1.bf16.msra.mxu0 0
      %3718 = vmatprep.subr.bf16.mxu0 0
      %3719 = vmatpush1.bf16.msra.mxu0 0
      %3720 = vmatprep.subr.bf16.mxu0 0
      %3721 = vmatpush1.bf16.msra.mxu0 0
      %3722 = vmatprep.subr.bf16.mxu0 0
      %3723 = vmatpush1.bf16.msra.mxu0 0
      %3724 = vmatprep.subr.bf16.mxu0 0
      %3725 = vmatpush1.bf16.msra.mxu0 0
      %3726 = vmatprep.subr.bf16.mxu0 0
      %3727 = vmatpush1.bf16.msra.mxu0 0
      %3728 = vmatprep.mubr.bf16.mxu0 0
      %3729 = vmatmul.mubr.bf16.gmra.mrb[0].mxu0 %v3691
      %v3730 = vpop.f32.mrb[0].mxu0
      %v3731 = vadd.f32 0.0, %v3730
      %v3732 = vpop.f32.mrb[0].mxu0
      %v3733 = vpop.f32.mrb[0].mxu0
      %v3734 = vpop.f32.mrb[0].mxu0
      %3735 = vdwg.mxu0
      %3736 = vrot.lane.b32.xlu0 %v1735, 64
      %v3737 = vpop.permute.xlu0 %3736
      %v3739 = vsel %vm501, %v2528, 0
      %v3742 = vsel %vm2540, %v3737, 0
      %3744 = vmatprep.subr.bf16.mxu0 0
      %3745 = vmatpush1.bf16.msra.mxu0 %v3742
      %3746 = vmatprep.subr.bf16.mxu0 0
      %3747 = vmatpush1.bf16.msra.mxu0 0
      %3748 = vmatprep.subr.bf16.mxu0 0
      %3749 = vmatpush1.bf16.msra.mxu0 0
      %3750 = vmatprep.subr.bf16.mxu0 0
      %3751 = vmatpush1.bf16.msra.mxu0 0
      %3752 = vmatprep.subr.bf16.mxu0 0
      %3753 = vmatpush1.bf16.msra.mxu0 0
      %3754 = vmatprep.subr.bf16.mxu0 0
      %3755 = vmatpush1.bf16.msra.mxu0 0
      %3756 = vmatprep.subr.bf16.mxu0 0
      %3757 = vmatpush1.bf16.msra.mxu0 0
      %3758 = vmatprep.subr.bf16.mxu0 0
      %3759 = vmatpush1.bf16.msra.mxu0 0
      %3760 = vmatprep.subr.bf16.mxu0 0
      %3761 = vmatpush1.bf16.msra.mxu0 0
      %3762 = vmatprep.subr.bf16.mxu0 0
      %3763 = vmatpush1.bf16.msra.mxu0 0
      %3764 = vmatprep.subr.bf16.mxu0 0
      %3765 = vmatpush1.bf16.msra.mxu0 0
      %3766 = vmatprep.subr.bf16.mxu0 0
      %3767 = vmatpush1.bf16.msra.mxu0 0
      %3768 = vmatprep.subr.bf16.mxu0 0
      %3769 = vmatpush1.bf16.msra.mxu0 0
      %3770 = vmatprep.subr.bf16.mxu0 0
      %3771 = vmatpush1.bf16.msra.mxu0 0
      %3772 = vmatprep.subr.bf16.mxu0 0
      %3773 = vmatpush1.bf16.msra.mxu0 0
      %3774 = vmatprep.subr.bf16.mxu0 0
      %3775 = vmatpush1.bf16.msra.mxu0 0
      %3776 = vmatprep.mubr.bf16.mxu0 0
      %3777 = vmatmul.mubr.bf16.gmra.mrb[0].mxu0 %v3739
      %v3778 = vpop.f32.mrb[0].mxu0
      %v3779 = vadd.f32 0.0, %v3778
      %v3780 = vpop.f32.mrb[0].mxu0
      %v3781 = vpop.f32.mrb[0].mxu0
      %v3782 = vpop.f32.mrb[0].mxu0
      %3783 = vdwg.mxu0
      %3784 = vrot.lane.b32.xlu0 %v1785, 64
      %v3785 = vpop.permute.xlu0 %3784
      %v3787 = vsel %vm501, %v2529, 0
      %v3790 = vsel %vm2540, %v3785, 0
      %3792 = vmatprep.subr.bf16.mxu0 0
      %3793 = vmatpush1.bf16.msra.mxu0 %v3790
      %3794 = vmatprep.subr.bf16.mxu0 0
      %3795 = vmatpush1.bf16.msra.mxu0 0
      %3796 = vmatprep.subr.bf16.mxu0 0
      %3797 = vmatpush1.bf16.msra.mxu0 0
      %3798 = vmatprep.subr.bf16.mxu0 0
      %3799 = vmatpush1.bf16.msra.mxu0 0
      %3800 = vmatprep.subr.bf16.mxu0 0
      %3801 = vmatpush1.bf16.msra.mxu0 0
      %3802 = vmatprep.subr.bf16.mxu0 0
      %3803 = vmatpush1.bf16.msra.mxu0 0
      %3804 = vmatprep.subr.bf16.mxu0 0
      %3805 = vmatpush1.bf16.msra.mxu0 0
      %3806 = vmatprep.subr.bf16.mxu0 0
      %3807 = vmatpush1.bf16.msra.mxu0 0
      %3808 = vmatprep.subr.bf16.mxu0 0
      %3809 = vmatpush1.bf16.msra.mxu0 0
      %3810 = vmatprep.subr.bf16.mxu0 0
      %3811 = vmatpush1.bf16.msra.mxu0 0
      %3812 = vmatprep.subr.bf16.mxu0 0
      %3813 = vmatpush1.bf16.msra.mxu0 0
      %3814 = vmatprep.subr.bf16.mxu0 0
      %3815 = vmatpush1.bf16.msra.mxu0 0
      %3816 = vmatprep.subr.bf16.mxu0 0
      %3817 = vmatpush1.bf16.msra.mxu0 0
      %3818 = vmatprep.subr.bf16.mxu0 0
      %3819 = vmatpush1.bf16.msra.mxu0 0
      %3820 = vmatprep.subr.bf16.mxu0 0
      %3821 = vmatpush1.bf16.msra.mxu0 0
      %3822 = vmatprep.subr.bf16.mxu0 0
      %3823 = vmatpush1.bf16.msra.mxu0 0
      %3824 = vmatprep.mubr.bf16.mxu0 0
      %3825 = vmatmul.mubr.bf16.gmra.mrb[0].mxu0 %v3787
      %v3826 = vpop.f32.mrb[0].mxu0
      %v3827 = vadd.f32 0.0, %v3826
      %v3828 = vpop.f32.mrb[0].mxu0
      %v3829 = vpop.f32.mrb[0].mxu0
      %v3830 = vpop.f32.mrb[0].mxu0
      %3831 = vdwg.mxu0
      %3832 = vrot.lane.b32.xlu0 %v1835, 64
      %v3833 = vpop.permute.xlu0 %3832
      %v3835 = vsel %vm501, %v2530, 0
      %v3838 = vsel %vm2540, %v3833, 0
      %3840 = vmatprep.subr.bf16.mxu0 0
      %3841 = vmatpush1.bf16.msra.mxu0 %v3838
      %3842 = vmatprep.subr.bf16.mxu0 0
      %3843 = vmatpush1.bf16.msra.mxu0 0
      %3844 = vmatprep.subr.bf16.mxu0 0
      %3845 = vmatpush1.bf16.msra.mxu0 0
      %3846 = vmatprep.subr.bf16.mxu0 0
      %3847 = vmatpush1.bf16.msra.mxu0 0
      %3848 = vmatprep.subr.bf16.mxu0 0
      %3849 = vmatpush1.bf16.msra.mxu0 0
      %3850 = vmatprep.subr.bf16.mxu0 0
      %3851 = vmatpush1.bf16.msra.mxu0 0
      %3852 = vmatprep.subr.bf16.mxu0 0
      %3853 = vmatpush1.bf16.msra.mxu0 0
      %3854 = vmatprep.subr.bf16.mxu0 0
      %3855 = vmatpush1.bf16.msra.mxu0 0
      %3856 = vmatprep.subr.bf16.mxu0 0
      %3857 = vmatpush1.bf16.msra.mxu0 0
      %3858 = vmatprep.subr.bf16.mxu0 0
      %3859 = vmatpush1.bf16.msra.mxu0 0
      %3860 = vmatprep.subr.bf16.mxu0 0
      %3861 = vmatpush1.bf16.msra.mxu0 0
      %3862 = vmatprep.subr.bf16.mxu0 0
      %3863 = vmatpush1.bf16.msra.mxu0 0
      %3864 = vmatprep.subr.bf16.mxu0 0
      %3865 = vmatpush1.bf16.msra.mxu0 0
      %3866 = vmatprep.subr.bf16.mxu0 0
      %3867 = vmatpush1.bf16.msra.mxu0 0
      %3868 = vmatprep.subr.bf16.mxu0 0
      %3869 = vmatpush1.bf16.msra.mxu0 0
      %3870 = vmatprep.subr.bf16.mxu0 0
      %3871 = vmatpush1.bf16.msra.mxu0 0
      %3872 = vmatprep.mubr.bf16.mxu0 0
      %3873 = vmatmul.mubr.bf16.gmra.mrb[0].mxu0 %v3835
      %v3874 = vpop.f32.mrb[0].mxu0
      %v3875 = vadd.f32 0.0, %v3874
      %v3876 = vpop.f32.mrb[0].mxu0
      %v3877 = vpop.f32.mrb[0].mxu0
      %v3878 = vpop.f32.mrb[0].mxu0
      %3879 = vdwg.mxu0
      %3880 = vrot.lane.b32.xlu0 %v1885, 64
      %v3881 = vpop.permute.xlu0 %3880
      %v3883 = vsel %vm501, %v2531, 0
      %v3886 = vsel %vm2540, %v3881, 0
      %3888 = vmatprep.subr.bf16.mxu0 0
      %3889 = vmatpush1.bf16.msra.mxu0 %v3886
      %3890 = vmatprep.subr.bf16.mxu0 0
      %3891 = vmatpush1.bf16.msra.mxu0 0
      %3892 = vmatprep.subr.bf16.mxu0 0
      %3893 = vmatpush1.bf16.msra.mxu0 0
      %3894 = vmatprep.subr.bf16.mxu0 0
      %3895 = vmatpush1.bf16.msra.mxu0 0
      %3896 = vmatprep.subr.bf16.mxu0 0
      %3897 = vmatpush1.bf16.msra.mxu0 0
      %3898 = vmatprep.subr.bf16.mxu0 0
      %3899 = vmatpush1.bf16.msra.mxu0 0
      %3900 = vmatprep.subr.bf16.mxu0 0
      %3901 = vmatpush1.bf16.msra.mxu0 0
      %3902 = vmatprep.subr.bf16.mxu0 0
      %3903 = vmatpush1.bf16.msra.mxu0 0
      %3904 = vmatprep.subr.bf16.mxu0 0
      %3905 = vmatpush1.bf16.msra.mxu0 0
      %3906 = vmatprep.subr.bf16.mxu0 0
      %3907 = vmatpush1.bf16.msra.mxu0 0
      %3908 = vmatprep.subr.bf16.mxu0 0
      %3909 = vmatpush1.bf16.msra.mxu0 0
      %3910 = vmatprep.subr.bf16.mxu0 0
      %3911 = vmatpush1.bf16.msra.mxu0 0
      %3912 = vmatprep.subr.bf16.mxu0 0
      %3913 = vmatpush1.bf16.msra.mxu0 0
      %3914 = vmatprep.subr.bf16.mxu0 0
      %3915 = vmatpush1.bf16.msra.mxu0 0
      %3916 = vmatprep.subr.bf16.mxu0 0
      %3917 = vmatpush1.bf16.msra.mxu0 0
      %3918 = vmatprep.subr.bf16.mxu0 0
      %3919 = vmatpush1.bf16.msra.mxu0 0
      %3920 = vmatprep.mubr.bf16.mxu0 0
      %3921 = vmatmul.mubr.bf16.gmra.mrb[0].mxu0 %v3883
      %v3922 = vpop.f32.mrb[0].mxu0
      %v3923 = vadd.f32 0.0, %v3922
      %v3924 = vpop.f32.mrb[0].mxu0
      %v3925 = vpop.f32.mrb[0].mxu0
      %v3926 = vpop.f32.mrb[0].mxu0
      %3927 = vdwg.mxu0
      %3928 = vrot.lane.b32.xlu0 %v1935, 64
      %v3929 = vpop.permute.xlu0 %3928
      %v3931 = vsel %vm501, %v2532, 0
      %v3934 = vsel %vm2540, %v3929, 0
      %3936 = vmatprep.subr.bf16.mxu0 0
      %3937 = vmatpush1.bf16.msra.mxu0 %v3934
      %3938 = vmatprep.subr.bf16.mxu0 0
      %3939 = vmatpush1.bf16.msra.mxu0 0
      %3940 = vmatprep.subr.bf16.mxu0 0
      %3941 = vmatpush1.bf16.msra.mxu0 0
      %3942 = vmatprep.subr.bf16.mxu0 0
      %3943 = vmatpush1.bf16.msra.mxu0 0
      %3944 = vmatprep.subr.bf16.mxu0 0
      %3945 = vmatpush1.bf16.msra.mxu0 0
      %3946 = vmatprep.subr.bf16.mxu0 0
      %3947 = vmatpush1.bf16.msra.mxu0 0
      %3948 = vmatprep.subr.bf16.mxu0 0
      %3949 = vmatpush1.bf16.msra.mxu0 0
      %3950 = vmatprep.subr.bf16.mxu0 0
      %3951 = vmatpush1.bf16.msra.mxu0 0
      %3952 = vmatprep.subr.bf16.mxu0 0
      %3953 = vmatpush1.bf16.msra.mxu0 0
      %3954 = vmatprep.subr.bf16.mxu0 0
      %3955 = vmatpush1.bf16.msra.mxu0 0
      %3956 = vmatprep.subr.bf16.mxu0 0
      %3957 = vmatpush1.bf16.msra.mxu0 0
      %3958 = vmatprep.subr.bf16.mxu0 0
      %3959 = vmatpush1.bf16.msra.mxu0 0
      %3960 = vmatprep.subr.bf16.mxu0 0
      %3961 = vmatpush1.bf16.msra.mxu0 0
      %3962 = vmatprep.subr.bf16.mxu0 0
      %3963 = vmatpush1.bf16.msra.mxu0 0
      %3964 = vmatprep.subr.bf16.mxu0 0
      %3965 = vmatpush1.bf16.msra.mxu0 0
      %3966 = vmatprep.subr.bf16.mxu0 0
      %3967 = vmatpush1.bf16.msra.mxu0 0
      %3968 = vmatprep.mubr.bf16.mxu0 0
      %3969 = vmatmul.mubr.bf16.gmra.mrb[0].mxu0 %v3931
      %v3970 = vpop.f32.mrb[0].mxu0
      %v3971 = vadd.f32 0.0, %v3970
      %v3972 = vpop.f32.mrb[0].mxu0
      %v3973 = vpop.f32.mrb[0].mxu0
      %v3974 = vpop.f32.mrb[0].mxu0
      %3975 = vdwg.mxu0
      %3976 = vrot.lane.b32.xlu0 %v1985, 64
      %v3977 = vpop.permute.xlu0 %3976
      %v3979 = vsel %vm501, %v2533, 0
      %v3982 = vsel %vm2540, %v3977, 0
      %3984 = vmatprep.subr.bf16.mxu0 0
      %3985 = vmatpush1.bf16.msra.mxu0 %v3982
      %3986 = vmatprep.subr.bf16.mxu0 0
      %3987 = vmatpush1.bf16.msra.mxu0 0
      %3988 = vmatprep.subr.bf16.mxu0 0
      %3989 = vmatpush1.bf16.msra.mxu0 0
      %3990 = vmatprep.subr.bf16.mxu0 0
      %3991 = vmatpush1.bf16.msra.mxu0 0
      %3992 = vmatprep.subr.bf16.mxu0 0
      %3993 = vmatpush1.bf16.msra.mxu0 0
      %3994 = vmatprep.subr.bf16.mxu0 0
      %3995 = vmatpush1.bf16.msra.mxu0 0
      %3996 = vmatprep.subr.bf16.mxu0 0
      %3997 = vmatpush1.bf16.msra.mxu0 0
      %3998 = vmatprep.subr.bf16.mxu0 0
      %3999 = vmatpush1.bf16.msra.mxu0 0
      %4000 = vmatprep.subr.bf16.mxu0 0
      %4001 = vmatpush1.bf16.msra.mxu0 0
      %4002 = vmatprep.subr.bf16.mxu0 0
      %4003 = vmatpush1.bf16.msra.mxu0 0
      %4004 = vmatprep.subr.bf16.mxu0 0
      %4005 = vmatpush1.bf16.msra.mxu0 0
      %4006 = vmatprep.subr.bf16.mxu0 0
      %4007 = vmatpush1.bf16.msra.mxu0 0
      %4008 = vmatprep.subr.bf16.mxu0 0
      %4009 = vmatpush1.bf16.msra.mxu0 0
      %4010 = vmatprep.subr.bf16.mxu0 0
      %4011 = vmatpush1.bf16.msra.mxu0 0
      %4012 = vmatprep.subr.bf16.mxu0 0
      %4013 = vmatpush1.bf16.msra.mxu0 0
      %4014 = vmatprep.subr.bf16.mxu0 0
      %4015 = vmatpush1.bf16.msra.mxu0 0
      %4016 = vmatprep.mubr.bf16.mxu0 0
      %4017 = vmatmul.mubr.bf16.gmra.mrb[0].mxu0 %v3979
      %v4018 = vpop.f32.mrb[0].mxu0
      %v4019 = vadd.f32 0.0, %v4018
      %v4020 = vpop.f32.mrb[0].mxu0
      %v4021 = vpop.f32.mrb[0].mxu0
      %v4022 = vpop.f32.mrb[0].mxu0
      %4023 = vdwg.mxu0
      %4024 = vrot.lane.b32.xlu0 %v2035, 64
      %v4025 = vpop.permute.xlu0 %4024
      %v4027 = vsel %vm501, %v2534, 0
      %v4030 = vsel %vm2540, %v4025, 0
      %4032 = vmatprep.subr.bf16.mxu0 0
      %4033 = vmatpush1.bf16.msra.mxu0 %v4030
      %4034 = vmatprep.subr.bf16.mxu0 0
      %4035 = vmatpush1.bf16.msra.mxu0 0
      %4036 = vmatprep.subr.bf16.mxu0 0
      %4037 = vmatpush1.bf16.msra.mxu0 0
      %4038 = vmatprep.subr.bf16.mxu0 0
      %4039 = vmatpush1.bf16.msra.mxu0 0
      %4040 = vmatprep.subr.bf16.mxu0 0
      %4041 = vmatpush1.bf16.msra.mxu0 0
      %4042 = vmatprep.subr.bf16.mxu0 0
      %4043 = vmatpush1.bf16.msra.mxu0 0
      %4044 = vmatprep.subr.bf16.mxu0 0
      %4045 = vmatpush1.bf16.msra.mxu0 0
      %4046 = vmatprep.subr.bf16.mxu0 0
      %4047 = vmatpush1.bf16.msra.mxu0 0
      %4048 = vmatprep.subr.bf16.mxu0 0
      %4049 = vmatpush1.bf16.msra.mxu0 0
      %4050 = vmatprep.subr.bf16.mxu0 0
      %4051 = vmatpush1.bf16.msra.mxu0 0
      %4052 = vmatprep.subr.bf16.mxu0 0
      %4053 = vmatpush1.bf16.msra.mxu0 0
      %4054 = vmatprep.subr.bf16.mxu0 0
      %4055 = vmatpush1.bf16.msra.mxu0 0
      %4056 = vmatprep.subr.bf16.mxu0 0
      %4057 = vmatpush1.bf16.msra.mxu0 0
      %4058 = vmatprep.subr.bf16.mxu0 0
      %4059 = vmatpush1.bf16.msra.mxu0 0
      %4060 = vmatprep.subr.bf16.mxu0 0
      %4061 = vmatpush1.bf16.msra.mxu0 0
      %4062 = vmatprep.subr.bf16.mxu0 0
      %4063 = vmatpush1.bf16.msra.mxu0 0
      %4064 = vmatprep.mubr.bf16.mxu0 0
      %4065 = vmatmul.mubr.bf16.gmra.mrb[0].mxu0 %v4027
      %v4066 = vpop.f32.mrb[0].mxu0
      %v4067 = vadd.f32 0.0, %v4066
      %v4068 = vpop.f32.mrb[0].mxu0
      %v4069 = vpop.f32.mrb[0].mxu0
      %v4070 = vpop.f32.mrb[0].mxu0
      %4071 = vdwg.mxu0
      %4080 = vrot.lane.b32.xlu0 %v2963, 8
      %v4081 = vpop.permute.xlu0 %4080
      %4082 = vrot.lane.b32.xlu0 %v3011, 8
      %v4083 = vpop.permute.xlu0 %4082
      %4084 = vrot.lane.b32.xlu0 %v3059, 8
      %v4085 = vpop.permute.xlu0 %4084
      %4086 = vrot.lane.b32.xlu0 %v3107, 8
      %v4087 = vpop.permute.xlu0 %4086
      %4088 = vrot.lane.b32.xlu0 %v3155, 8
      %v4089 = vpop.permute.xlu0 %4088
      %4090 = vrot.lane.b32.xlu0 %v3203, 8
      %v4091 = vpop.permute.xlu0 %4090
      %4092 = vrot.lane.b32.xlu0 %v3251, 8
      %v4093 = vpop.permute.xlu0 %4092
      %4094 = vrot.lane.b32.xlu0 %v3299, 8
      %v4095 = vpop.permute.xlu0 %4094
      %4112 = vrot.lane.b32.xlu0 %v3347, 16
      %v4113 = vpop.permute.xlu0 %4112
      %4114 = vrot.lane.b32.xlu0 %v3395, 16
      %v4115 = vpop.permute.xlu0 %4114
      %4116 = vrot.lane.b32.xlu0 %v3443, 16
      %v4117 = vpop.permute.xlu0 %4116
      %4118 = vrot.lane.b32.xlu0 %v3491, 16
      %v4119 = vpop.permute.xlu0 %4118
      %4120 = vrot.lane.b32.xlu0 %v3539, 16
      %v4121 = vpop.permute.xlu0 %4120
      %4122 = vrot.lane.b32.xlu0 %v3587, 16
      %v4123 = vpop.permute.xlu0 %4122
      %4124 = vrot.lane.b32.xlu0 %v3635, 16
      %v4125 = vpop.permute.xlu0 %4124
      %4126 = vrot.lane.b32.xlu0 %v3683, 16
      %v4127 = vpop.permute.xlu0 %4126
      %4144 = vrot.lane.b32.xlu0 %v3731, 24
      %v4145 = vpop.permute.xlu0 %4144
      %4146 = vrot.lane.b32.xlu0 %v3779, 24
      %v4147 = vpop.permute.xlu0 %4146
      %4148 = vrot.lane.b32.xlu0 %v3827, 24
      %v4149 = vpop.permute.xlu0 %4148
      %4150 = vrot.lane.b32.xlu0 %v3875, 24
      %v4151 = vpop.permute.xlu0 %4150
      %4152 = vrot.lane.b32.xlu0 %v3923, 24
      %v4153 = vpop.permute.xlu0 %4152
      %4154 = vrot.lane.b32.xlu0 %v3971, 24
      %v4155 = vpop.permute.xlu0 %4154
      %4156 = vrot.lane.b32.xlu0 %v4019, 24
      %v4157 = vpop.permute.xlu0 %4156
      %4158 = vrot.lane.b32.xlu0 %v4067, 24
      %v4159 = vpop.permute.xlu0 %4158
      %v4168 = vsel %vm501, %v2579, %v4081
      %v4169 = vsel %vm501, %v2627, %v4083
      %v4170 = vsel %vm501, %v2675, %v4085
      %v4171 = vsel %vm501, %v2723, %v4087
      %v4172 = vsel %vm501, %v2771, %v4089
      %v4173 = vsel %vm501, %v2819, %v4091
      %v4174 = vsel %vm501, %v2867, %v4093
      %v4175 = vsel %vm501, %v2915, %v4095
      %vm4176 = vcmask 130048
      %v4177 = vsel %vm4176, %v4168, %v4113
      %v4178 = vsel %vm4176, %v4169, %v4115
      %v4179 = vsel %vm4176, %v4170, %v4117
      %v4180 = vsel %vm4176, %v4171, %v4119
      %v4181 = vsel %vm4176, %v4172, %v4121
      %v4182 = vsel %vm4176, %v4173, %v4123
      %v4183 = vsel %vm4176, %v4174, %v4125
      %v4184 = vsel %vm4176, %v4175, %v4127
      %vm4185 = vcmask 195584
      %v4186 = vsel %vm4185, %v4177, %v4145
      %v4187 = vsel %vm4185, %v4178, %v4147
      %v4188 = vsel %vm4185, %v4179, %v4149
      %v4189 = vsel %vm4185, %v4180, %v4151
      %v4190 = vsel %vm4185, %v4181, %v4153
      %v4191 = vsel %vm4185, %v4182, %v4155
      %v4192 = vsel %vm4185, %v4183, %v4157
      %v4193 = vsel %vm4185, %v4184, %v4159
      %v4194 = vpack.c.bf16 %v4187, %v4186
      %v4195 = vpack.c.bf16 %v4189, %v4188
      %v4196 = vpack.c.bf16 %v4191, %v4190
      %v4197 = vpack.c.bf16 %v4193, %v4192
      %v4198 = vlaneseq
      %v4199 = vshrl.u32 %v4198, 7
      %v4200 = vsub.s32 2, %v4199
      %v4201 = vrot.slane %v328, %v4200
      %v4206 = vunpack.c.l.b16 %v306
      %v4207 = vunpack.c.l.b16 %v307
      %v4208 = vunpack.c.l.b16 %v308
      %v4209 = vunpack.c.l.b16 %v309
      %v4210 = vpack.c.b16 %v4207, %v4206
      %v4211 = vpack.c.b16 %v4209, %v4208
      %v4215 = vsel %vm349, %v4194, 0
      %v4218 = vsel %vm349, %v4195, 0
      %v4221 = vsel %vm349, %v4196, 0
      %v4224 = vsel %vm349, %v4197, 0
      %4226 = vmatprep.subr.bf16.mxu0 0
      %4227 = vmatpush1.bf16.msra.mxu0 %v4210
      %4228 = vmatprep.subr.bf16.mxu0 0
      %4229 = vmatpush1.bf16.msra.mxu0 %v4211
      %4230 = vmatprep.subr.bf16.mxu0 0
      %4231 = vmatpush1.bf16.msra.mxu0 0
      %4232 = vmatprep.subr.bf16.mxu0 0
      %4233 = vmatpush1.bf16.msra.mxu0 0
      %4234 = vmatprep.subr.bf16.mxu0 0
      %4235 = vmatpush1.bf16.msra.mxu0 0
      %4236 = vmatprep.subr.bf16.mxu0 0
      %4237 = vmatpush1.bf16.msra.mxu0 0
      %4238 = vmatprep.subr.bf16.mxu0 0
      %4239 = vmatpush1.bf16.msra.mxu0 0
      %4240 = vmatprep.subr.bf16.mxu0 0
      %4241 = vmatpush1.bf16.msra.mxu0 0
      %4242 = vmatprep.subr.bf16.mxu0 0
      %4243 = vmatpush1.bf16.msra.mxu0 0
      %4244 = vmatprep.subr.bf16.mxu0 0
      %4245 = vmatpush1.bf16.msra.mxu0 0
      %4246 = vmatprep.subr.bf16.mxu0 0
      %4247 = vmatpush1.bf16.msra.mxu0 0
      %4248 = vmatprep.subr.bf16.mxu0 0
      %4249 = vmatpush1.bf16.msra.mxu0 0
      %4250 = vmatprep.subr.bf16.mxu0 0
      %4251 = vmatpush1.bf16.msra.mxu0 0
      %4252 = vmatprep.subr.bf16.mxu0 0
      %4253 = vmatpush1.bf16.msra.mxu0 0
      %4254 = vmatprep.subr.bf16.mxu0 0
      %4255 = vmatpush1.bf16.msra.mxu0 0
      %4256 = vmatprep.subr.bf16.mxu0 0
      %4257 = vmatpush1.bf16.msra.mxu0 0
      %4258 = vmatprep.mubr.bf16.mxu0 0
      %4259 = vmatmul.mubr.bf16.gmra.mrb[0].mxu0 %v4215
      %v4260 = vpop.f32.mrb[0].mxu0
      %v4261 = vadd.f32 %v4201, %v4260
      %v4262 = vpop.f32.mrb[0].mxu0
      %v4263 = vpop.f32.mrb[0].mxu0
      %v4264 = vadd.f32 %v4201, %v4263
      %v4265 = vpop.f32.mrb[0].mxu0
      %4266 = vmatprep.mubr.bf16.mxu0 0
      %4267 = vmatmul.mubr.bf16.gmra.mrb[0].mxu0 %v4218
      %v4268 = vpop.f32.mrb[0].mxu0
      %v4269 = vadd.f32 %v4201, %v4268
      %v4270 = vpop.f32.mrb[0].mxu0
      %v4271 = vpop.f32.mrb[0].mxu0
      %v4272 = vadd.f32 %v4201, %v4271
      %v4273 = vpop.f32.mrb[0].mxu0
      %4274 = vmatprep.mubr.bf16.mxu0 0
      %4275 = vmatmul.mubr.bf16.gmra.mrb[0].mxu0 %v4221
      %v4276 = vpop.f32.mrb[0].mxu0
      %v4277 = vadd.f32 %v4201, %v4276
      %v4278 = vpop.f32.mrb[0].mxu0
      %v4279 = vpop.f32.mrb[0].mxu0
      %v4280 = vadd.f32 %v4201, %v4279
      %v4281 = vpop.f32.mrb[0].mxu0
      %4282 = vmatprep.mubr.bf16.mxu0 0
      %4283 = vmatmul.mubr.bf16.gmra.mrb[0].mxu0 %v4224
      %v4284 = vpop.f32.mrb[0].mxu0
      %v4285 = vadd.f32 %v4201, %v4284
      %v4286 = vpop.f32.mrb[0].mxu0
      %v4287 = vpop.f32.mrb[0].mxu0
      %v4288 = vadd.f32 %v4201, %v4287
      %v4289 = vpop.f32.mrb[0].mxu0
      %4290 = vdwg.mxu0
      %v4291 = vadd.f32 %v289, %v4261
      %v4292 = vadd.f32 %v290, %v4264
      %v4293 = vadd.f32 %v291, %v4269
      %v4294 = vadd.f32 %v292, %v4272
      %v4295 = vadd.f32 %v293, %v4277
      %v4296 = vadd.f32 %v294, %v4280
      %v4297 = vadd.f32 %v295, %v4285
      %v4298 = vadd.f32 %v296, %v4288
      %v4299 = vsel %vm349, %v4291, 0.0
      %4300 = vadd.xlane.f32.xlu0 %v4299
      %v4301 = vpop.xlane.xlu0 %4300
      %v4302 = vsel %vm349, %v4292, 0.0
      %4303 = vadd.xlane.f32.xlu0 %v4302
      %v4304 = vpop.xlane.xlu0 %4303
      %v4305 = vsel %vm349, %v4293, 0.0
      %4306 = vadd.xlane.f32.xlu0 %v4305
      %v4307 = vpop.xlane.xlu0 %4306
      %v4308 = vsel %vm349, %v4294, 0.0
      %4309 = vadd.xlane.f32.xlu0 %v4308
      %v4310 = vpop.xlane.xlu0 %4309
      %v4311 = vsel %vm349, %v4295, 0.0
      %4312 = vadd.xlane.f32.xlu0 %v4311
      %v4313 = vpop.xlane.xlu0 %4312
      %v4314 = vsel %vm349, %v4296, 0.0
      %4315 = vadd.xlane.f32.xlu0 %v4314
      %v4316 = vpop.xlane.xlu0 %4315
      %v4317 = vsel %vm349, %v4297, 0.0
      %4318 = vadd.xlane.f32.xlu0 %v4317
      %v4319 = vpop.xlane.xlu0 %4318
      %v4320 = vsel %vm349, %v4298, 0.0
      %4321 = vadd.xlane.f32.xlu0 %v4320
      %v4322 = vpop.xlane.xlu0 %4321
      %v4323 = vrcp.pop 32.0
      %v4324 = vmul.f32 %v4301, %v4323
      %v4325 = vmul.f32 %v4304, %v4323
      %v4326 = vmul.f32 %v4307, %v4323
      %v4327 = vmul.f32 %v4310, %v4323
      %v4328 = vmul.f32 %v4313, %v4323
      %v4329 = vmul.f32 %v4316, %v4323
      %v4330 = vmul.f32 %v4319, %v4323
      %v4331 = vmul.f32 %v4322, %v4323
      %v4332 = vsub.f32 %v4291, %v4324
      %v4333 = vsub.f32 %v4292, %v4325
      %v4334 = vsub.f32 %v4293, %v4326
      %v4335 = vsub.f32 %v4294, %v4327
      %v4336 = vsub.f32 %v4295, %v4328
      %v4337 = vsub.f32 %v4296, %v4329
      %v4338 = vsub.f32 %v4297, %v4330
      %v4339 = vsub.f32 %v4298, %v4331
      %v4340 = vmul.f32 %v4332, %v4332
      %v4341 = vmul.f32 %v4333, %v4333
      %v4342 = vmul.f32 %v4334, %v4334
      %v4343 = vmul.f32 %v4335, %v4335
      %v4344 = vmul.f32 %v4336, %v4336
      %v4345 = vmul.f32 %v4337, %v4337
      %v4346 = vmul.f32 %v4338, %v4338
      %v4347 = vmul.f32 %v4339, %v4339
      %v4348 = vsel %vm349, %v4340, 0.0
      %4349 = vadd.xlane.f32.xlu0 %v4348
      %v4350 = vpop.xlane.xlu0 %4349
      %v4351 = vsel %vm349, %v4341, 0.0
      %4352 = vadd.xlane.f32.xlu0 %v4351
      %v4353 = vpop.xlane.xlu0 %4352
      %v4354 = vsel %vm349, %v4342, 0.0
      %4355 = vadd.xlane.f32.xlu0 %v4354
      %v4356 = vpop.xlane.xlu0 %4355
      %v4357 = vsel %vm349, %v4343, 0.0
      %4358 = vadd.xlane.f32.xlu0 %v4357
      %v4359 = vpop.xlane.xlu0 %4358
      %v4360 = vsel %vm349, %v4344, 0.0
      %4361 = vadd.xlane.f32.xlu0 %v4360
      %v4362 = vpop.xlane.xlu0 %4361
      %v4363 = vsel %vm349, %v4345, 0.0
      %4364 = vadd.xlane.f32.xlu0 %v4363
      %v4365 = vpop.xlane.xlu0 %4364
      %v4366 = vsel %vm349, %v4346, 0.0
      %4367 = vadd.xlane.f32.xlu0 %v4366
      %v4368 = vpop.xlane.xlu0 %4367
      %v4369 = vsel %vm349, %v4347, 0.0
      %4370 = vadd.xlane.f32.xlu0 %v4369
      %v4371 = vpop.xlane.xlu0 %4370
      %v4372 = vmul.f32 %v4350, %v4323
      %v4373 = vmul.f32 %v4353, %v4323
      %v4374 = vmul.f32 %v4356, %v4323
      %v4375 = vmul.f32 %v4359, %v4323
      %v4376 = vmul.f32 %v4362, %v4323
      %v4377 = vmul.f32 %v4365, %v4323
      %v4378 = vmul.f32 %v4368, %v4323
      %v4379 = vmul.f32 %v4371, %v4323
      %v4380 = vadd.f32 %v4372, 1e-05
      %v4381 = vadd.f32 %v4373, 1e-05
      %v4382 = vadd.f32 %v4374, 1e-05
      %v4383 = vadd.f32 %v4375, 1e-05
      %v4384 = vadd.f32 %v4376, 1e-05
      %v4385 = vadd.f32 %v4377, 1e-05
      %v4386 = vadd.f32 %v4378, 1e-05
      %v4387 = vadd.f32 %v4379, 1e-05
      %v4388 = vrsqrt.pop %v4380
      %v4389 = vrsqrt.pop %v4381
      %v4390 = vrsqrt.pop %v4382
      %v4391 = vrsqrt.pop %v4383
      %v4392 = vrsqrt.pop %v4384
      %v4393 = vrsqrt.pop %v4385
      %v4394 = vrsqrt.pop %v4386
      %v4395 = vrsqrt.pop %v4387
      %v4396 = vmul.f32 %v4332, %v4388
      %v4397 = vmul.f32 %v4333, %v4389
      %v4398 = vmul.f32 %v4334, %v4390
      %v4399 = vmul.f32 %v4335, %v4391
      %v4400 = vmul.f32 %v4336, %v4392
      %v4401 = vmul.f32 %v4337, %v4393
      %v4402 = vmul.f32 %v4338, %v4394
      %v4403 = vmul.f32 %v4339, %v4395
      %v4404 = vlaneseq
      %v4405 = vshrl.u32 %v4404, 7
      %v4406 = vsub.s32 3, %v4405
      %v4407 = vrot.slane %v328, %v4406
      %v4408 = vmul.f32 %v4396, %v4407
      %v4409 = vmul.f32 %v4397, %v4407
      %v4410 = vmul.f32 %v4398, %v4407
      %v4411 = vmul.f32 %v4399, %v4407
      %v4412 = vmul.f32 %v4400, %v4407
      %v4413 = vmul.f32 %v4401, %v4407
      %v4414 = vmul.f32 %v4402, %v4407
      %v4415 = vmul.f32 %v4403, %v4407
      %v4416 = vlaneseq
      %v4417 = vshrl.u32 %v4416, 7
      %v4418 = vsub.s32 4, %v4417
      %v4419 = vrot.slane %v328, %v4418
      %v4420 = vadd.f32 %v4408, %v4419
      %v4421 = vadd.f32 %v4409, %v4419
      %v4422 = vadd.f32 %v4410, %v4419
      %v4423 = vadd.f32 %v4411, %v4419
      %v4424 = vadd.f32 %v4412, %v4419
      %v4425 = vadd.f32 %v4413, %v4419
      %v4426 = vadd.f32 %v4414, %v4419
      %v4427 = vadd.f32 %v4415, %v4419
      %v4428 = vpack.c.bf16 %v4421, %v4420
      %v4429 = vpack.c.bf16 %v4423, %v4422
      %v4430 = vpack.c.bf16 %v4425, %v4424
      %v4431 = vpack.c.bf16 %v4427, %v4426
      %v4432 = vlaneseq
      %v4433 = vshrl.u32 %v4432, 7
      %v4434 = vsub.s32 1, %v4433
      %v4435 = vrot.slane %v328, %v4434
      %v4440 = vunpack.c.l.b16 %v312
      %v4441 = vunpack.c.l.b16 %v313
      %v4442 = vunpack.c.l.b16 %v314
      %v4443 = vunpack.c.l.b16 %v315
      %v4444 = vpack.c.b16 %v4441, %v4440
      %v4445 = vpack.c.b16 %v4443, %v4442
      %v4449 = vsel %vm349, %v4428, 0
      %v4452 = vsel %vm349, %v4429, 0
      %v4455 = vsel %vm349, %v4430, 0
      %v4458 = vsel %vm349, %v4431, 0
      %4460 = vmatprep.subr.bf16.mxu0 0
      %4461 = vmatpush1.bf16.msra.mxu0 %v4444
      %4462 = vmatprep.subr.bf16.mxu0 0
      %4463 = vmatpush1.bf16.msra.mxu0 %v4445
      %4464 = vmatprep.subr.bf16.mxu0 0
      %4465 = vmatpush1.bf16.msra.mxu0 0
      %4466 = vmatprep.subr.bf16.mxu0 0
      %4467 = vmatpush1.bf16.msra.mxu0 0
      %4468 = vmatprep.subr.bf16.mxu0 0
      %4469 = vmatpush1.bf16.msra.mxu0 0
      %4470 = vmatprep.subr.bf16.mxu0 0
      %4471 = vmatpush1.bf16.msra.mxu0 0
      %4472 = vmatprep.subr.bf16.mxu0 0
      %4473 = vmatpush1.bf16.msra.mxu0 0
      %4474 = vmatprep.subr.bf16.mxu0 0
      %4475 = vmatpush1.bf16.msra.mxu0 0
      %4476 = vmatprep.subr.bf16.mxu0 0
      %4477 = vmatpush1.bf16.msra.mxu0 0
      %4478 = vmatprep.subr.bf16.mxu0 0
      %4479 = vmatpush1.bf16.msra.mxu0 0
      %4480 = vmatprep.subr.bf16.mxu0 0
      %4481 = vmatpush1.bf16.msra.mxu0 0
      %4482 = vmatprep.subr.bf16.mxu0 0
      %4483 = vmatpush1.bf16.msra.mxu0 0
      %4484 = vmatprep.subr.bf16.mxu0 0
      %4485 = vmatpush1.bf16.msra.mxu0 0
      %4486 = vmatprep.subr.bf16.mxu0 0
      %4487 = vmatpush1.bf16.msra.mxu0 0
      %4488 = vmatprep.subr.bf16.mxu0 0
      %4489 = vmatpush1.bf16.msra.mxu0 0
      %4490 = vmatprep.subr.bf16.mxu0 0
      %4491 = vmatpush1.bf16.msra.mxu0 0
      %4492 = vmatprep.mubr.bf16.mxu0 0
      %4493 = vmatmul.mubr.bf16.gmra.mrb[0].mxu0 %v4449
      %v4494 = vpop.f32.mrb[0].mxu0
      %v4495 = vadd.f32 %v4435, %v4494
      %v4496 = vpop.f32.mrb[0].mxu0
      %v4497 = vpop.f32.mrb[0].mxu0
      %v4498 = vadd.f32 %v4435, %v4497
      %v4499 = vpop.f32.mrb[0].mxu0
      %4500 = vmatprep.mubr.bf16.mxu0 0
      %4501 = vmatmul.mubr.bf16.gmra.mrb[0].mxu0 %v4452
      %v4502 = vpop.f32.mrb[0].mxu0
      %v4503 = vadd.f32 %v4435, %v4502
      %v4504 = vpop.f32.mrb[0].mxu0
      %v4505 = vpop.f32.mrb[0].mxu0
      %v4506 = vadd.f32 %v4435, %v4505
      %v4507 = vpop.f32.mrb[0].mxu0
      %4508 = vmatprep.mubr.bf16.mxu0 0
      %4509 = vmatmul.mubr.bf16.gmra.mrb[0].mxu0 %v4455
      %v4510 = vpop.f32.mrb[0].mxu0
      %v4511 = vadd.f32 %v4435, %v4510
      %v4512 = vpop.f32.mrb[0].mxu0
      %v4513 = vpop.f32.mrb[0].mxu0
      %v4514 = vadd.f32 %v4435, %v4513
      %v4515 = vpop.f32.mrb[0].mxu0
      %4516 = vmatprep.mubr.bf16.mxu0 0
      %4517 = vmatmul.mubr.bf16.gmra.mrb[0].mxu0 %v4458
      %v4518 = vpop.f32.mrb[0].mxu0
      %v4519 = vadd.f32 %v4435, %v4518
      %v4520 = vpop.f32.mrb[0].mxu0
      %v4521 = vpop.f32.mrb[0].mxu0
      %v4522 = vadd.f32 %v4435, %v4521
      %v4523 = vpop.f32.mrb[0].mxu0
      %4524 = vdwg.mxu0
      %v4525 = vmax.f32 %v4495, 0.0
      %v4526 = vmax.f32 %v4498, 0.0
      %v4527 = vmax.f32 %v4503, 0.0
      %v4528 = vmax.f32 %v4506, 0.0
      %v4529 = vmax.f32 %v4511, 0.0
      %v4530 = vmax.f32 %v4514, 0.0
      %v4531 = vmax.f32 %v4519, 0.0
      %v4532 = vmax.f32 %v4522, 0.0
      %v4533 = vpack.c.bf16 %v4526, %v4525
      %v4534 = vpack.c.bf16 %v4528, %v4527
      %v4535 = vpack.c.bf16 %v4530, %v4529
      %v4536 = vpack.c.bf16 %v4532, %v4531
      %v4537 = vlaneseq
      %v4538 = vshrl.u32 %v4537, 7
      %v4539 = vsub.s32 5, %v4538
      %v4540 = vrot.slane %v328, %v4539
      %v4549 = vunpack.c.l.b16 %v319
      %v4550 = vunpack.c.l.b16 %v320
      %v4551 = vunpack.c.l.b16 %v321
      %v4552 = vunpack.c.l.b16 %v322
      %v4553 = vunpack.c.l.b16 %v323
      %v4554 = vunpack.c.l.b16 %v324
      %v4555 = vunpack.c.l.b16 %v325
      %v4556 = vunpack.c.l.b16 %v326
      %v4557 = vpack.c.b16 %v4550, %v4549
      %v4558 = vpack.c.b16 %v4552, %v4551
      %v4559 = vpack.c.b16 %v4554, %v4553
      %v4560 = vpack.c.b16 %v4556, %v4555
      %vm4565 = vcmask 523264
      %v4567 = vsel %vm4565, %v4533, 0
      %v4570 = vsel %vm4565, %v4534, 0
      %v4573 = vsel %vm4565, %v4535, 0
      %v4576 = vsel %vm4565, %v4536, 0
      %4578 = vmatprep.subr.bf16.mxu0 0
      %4579 = vmatpush1.bf16.msra.mxu0 %v4557
      %4580 = vmatprep.subr.bf16.mxu0 0
      %4581 = vmatpush1.bf16.msra.mxu0 %v4558
      %4582 = vmatprep.subr.bf16.mxu0 0
      %4583 = vmatpush1.bf16.msra.mxu0 %v4559
      %4584 = vmatprep.subr.bf16.mxu0 0
      %4585 = vmatpush1.bf16.msra.mxu0 %v4560
      %4586 = vmatprep.subr.bf16.mxu0 0
      %4587 = vmatpush1.bf16.msra.mxu0 0
      %4588 = vmatprep.subr.bf16.mxu0 0
      %4589 = vmatpush1.bf16.msra.mxu0 0
      %4590 = vmatprep.subr.bf16.mxu0 0
      %4591 = vmatpush1.bf16.msra.mxu0 0
      %4592 = vmatprep.subr.bf16.mxu0 0
      %4593 = vmatpush1.bf16.msra.mxu0 0
      %4594 = vmatprep.subr.bf16.mxu0 0
      %4595 = vmatpush1.bf16.msra.mxu0 0
      %4596 = vmatprep.subr.bf16.mxu0 0
      %4597 = vmatpush1.bf16.msra.mxu0 0
      %4598 = vmatprep.subr.bf16.mxu0 0
      %4599 = vmatpush1.bf16.msra.mxu0 0
      %4600 = vmatprep.subr.bf16.mxu0 0
      %4601 = vmatpush1.bf16.msra.mxu0 0
      %4602 = vmatprep.subr.bf16.mxu0 0
      %4603 = vmatpush1.bf16.msra.mxu0 0
      %4604 = vmatprep.subr.bf16.mxu0 0
      %4605 = vmatpush1.bf16.msra.mxu0 0
      %4606 = vmatprep.subr.bf16.mxu0 0
      %4607 = vmatpush1.bf16.msra.mxu0 0
      %4608 = vmatprep.subr.bf16.mxu0 0
      %4609 = vmatpush1.bf16.msra.mxu0 0
      %4610 = vmatprep.mubr.bf16.mxu0 0
      %4611 = vmatmul.mubr.bf16.gmra.mrb[0].mxu0 %v4567
      %v4612 = vpop.f32.mrb[0].mxu0
      %v4613 = vadd.f32 %v4540, %v4612
      %v4614 = vpop.f32.mrb[0].mxu0
      %v4615 = vpop.f32.mrb[0].mxu0
      %v4616 = vadd.f32 %v4540, %v4615
      %v4617 = vpop.f32.mrb[0].mxu0
      %4618 = vmatprep.mubr.bf16.mxu0 0
      %4619 = vmatmul.mubr.bf16.gmra.mrb[0].mxu0 %v4570
      %v4620 = vpop.f32.mrb[0].mxu0
      %v4621 = vadd.f32 %v4540, %v4620
      %v4622 = vpop.f32.mrb[0].mxu0
      %v4623 = vpop.f32.mrb[0].mxu0
      %v4624 = vadd.f32 %v4540, %v4623
      %v4625 = vpop.f32.mrb[0].mxu0
      %4626 = vmatprep.mubr.bf16.mxu0 0
      %4627 = vmatmul.mubr.bf16.gmra.mrb[0].mxu0 %v4573
      %v4628 = vpop.f32.mrb[0].mxu0
      %v4629 = vadd.f32 %v4540, %v4628
      %v4630 = vpop.f32.mrb[0].mxu0
      %v4631 = vpop.f32.mrb[0].mxu0
      %v4632 = vadd.f32 %v4540, %v4631
      %v4633 = vpop.f32.mrb[0].mxu0
      %4634 = vmatprep.mubr.bf16.mxu0 0
      %4635 = vmatmul.mubr.bf16.gmra.mrb[0].mxu0 %v4576
      %v4636 = vpop.f32.mrb[0].mxu0
      %v4637 = vadd.f32 %v4540, %v4636
      %v4638 = vpop.f32.mrb[0].mxu0
      %v4639 = vpop.f32.mrb[0].mxu0
      %v4640 = vadd.f32 %v4540, %v4639
      %v4641 = vpop.f32.mrb[0].mxu0
      %4642 = vdwg.mxu0
      %v4643 = vadd.f32 %v4420, %v4613
      %v4644 = vadd.f32 %v4421, %v4616
      %v4645 = vadd.f32 %v4422, %v4621
      %v4646 = vadd.f32 %v4423, %v4624
      %v4647 = vadd.f32 %v4424, %v4629
      %v4648 = vadd.f32 %v4425, %v4632
      %v4649 = vadd.f32 %v4426, %v4637
      %v4650 = vadd.f32 %v4427, %v4640
      %v4651 = vsel %vm349, %v4643, 0.0
      %4652 = vadd.xlane.f32.xlu0 %v4651
      %v4653 = vpop.xlane.xlu0 %4652
      %v4654 = vsel %vm349, %v4644, 0.0
      %4655 = vadd.xlane.f32.xlu0 %v4654
      %v4656 = vpop.xlane.xlu0 %4655
      %v4657 = vsel %vm349, %v4645, 0.0
      %4658 = vadd.xlane.f32.xlu0 %v4657
      %v4659 = vpop.xlane.xlu0 %4658
      %v4660 = vsel %vm349, %v4646, 0.0
      %4661 = vadd.xlane.f32.xlu0 %v4660
      %v4662 = vpop.xlane.xlu0 %4661
      %v4663 = vsel %vm349, %v4647, 0.0
      %4664 = vadd.xlane.f32.xlu0 %v4663
      %v4665 = vpop.xlane.xlu0 %4664
      %v4666 = vsel %vm349, %v4648, 0.0
      %4667 = vadd.xlane.f32.xlu0 %v4666
      %v4668 = vpop.xlane.xlu0 %4667
      %v4669 = vsel %vm349, %v4649, 0.0
      %4670 = vadd.xlane.f32.xlu0 %v4669
      %v4671 = vpop.xlane.xlu0 %4670
      %v4672 = vsel %vm349, %v4650, 0.0
      %4673 = vadd.xlane.f32.xlu0 %v4672
      %v4674 = vpop.xlane.xlu0 %4673
      %v4675 = vmul.f32 %v4653, %v4323
      %v4676 = vmul.f32 %v4656, %v4323
      %v4677 = vmul.f32 %v4659, %v4323
      %v4678 = vmul.f32 %v4662, %v4323
      %v4679 = vmul.f32 %v4665, %v4323
      %v4680 = vmul.f32 %v4668, %v4323
      %v4681 = vmul.f32 %v4671, %v4323
      %v4682 = vmul.f32 %v4674, %v4323
      %v4683 = vsub.f32 %v4643, %v4675
      %v4684 = vsub.f32 %v4644, %v4676
      %v4685 = vsub.f32 %v4645, %v4677
      %v4686 = vsub.f32 %v4646, %v4678
      %v4687 = vsub.f32 %v4647, %v4679
      %v4688 = vsub.f32 %v4648, %v4680
      %v4689 = vsub.f32 %v4649, %v4681
      %v4690 = vsub.f32 %v4650, %v4682
      %v4691 = vmul.f32 %v4683, %v4683
      %v4692 = vmul.f32 %v4684, %v4684
      %v4693 = vmul.f32 %v4685, %v4685
      %v4694 = vmul.f32 %v4686, %v4686
      %v4695 = vmul.f32 %v4687, %v4687
      %v4696 = vmul.f32 %v4688, %v4688
      %v4697 = vmul.f32 %v4689, %v4689
      %v4698 = vmul.f32 %v4690, %v4690
      %v4699 = vsel %vm349, %v4691, 0.0
      %4700 = vadd.xlane.f32.xlu0 %v4699
      %v4701 = vpop.xlane.xlu0 %4700
      %v4702 = vsel %vm349, %v4692, 0.0
      %4703 = vadd.xlane.f32.xlu0 %v4702
      %v4704 = vpop.xlane.xlu0 %4703
      %v4705 = vsel %vm349, %v4693, 0.0
      %4706 = vadd.xlane.f32.xlu0 %v4705
      %v4707 = vpop.xlane.xlu0 %4706
      %v4708 = vsel %vm349, %v4694, 0.0
      %4709 = vadd.xlane.f32.xlu0 %v4708
      %v4710 = vpop.xlane.xlu0 %4709
      %v4711 = vsel %vm349, %v4695, 0.0
      %4712 = vadd.xlane.f32.xlu0 %v4711
      %v4713 = vpop.xlane.xlu0 %4712
      %v4714 = vsel %vm349, %v4696, 0.0
      %4715 = vadd.xlane.f32.xlu0 %v4714
      %v4716 = vpop.xlane.xlu0 %4715
      %v4717 = vsel %vm349, %v4697, 0.0
      %4718 = vadd.xlane.f32.xlu0 %v4717
      %v4719 = vpop.xlane.xlu0 %4718
      %v4720 = vsel %vm349, %v4698, 0.0
      %4721 = vadd.xlane.f32.xlu0 %v4720
      %v4722 = vpop.xlane.xlu0 %4721
      %v4723 = vmul.f32 %v4701, %v4323
      %v4724 = vmul.f32 %v4704, %v4323
      %v4725 = vmul.f32 %v4707, %v4323
      %v4726 = vmul.f32 %v4710, %v4323
      %v4727 = vmul.f32 %v4713, %v4323
      %v4728 = vmul.f32 %v4716, %v4323
      %v4729 = vmul.f32 %v4719, %v4323
      %v4730 = vmul.f32 %v4722, %v4323
      %v4731 = vadd.f32 %v4723, 1e-05
      %v4732 = vadd.f32 %v4724, 1e-05
      %v4733 = vadd.f32 %v4725, 1e-05
      %v4734 = vadd.f32 %v4726, 1e-05
      %v4735 = vadd.f32 %v4727, 1e-05
      %v4736 = vadd.f32 %v4728, 1e-05
      %v4737 = vadd.f32 %v4729, 1e-05
      %v4738 = vadd.f32 %v4730, 1e-05
      %v4739 = vrsqrt.pop %v4731
      %v4740 = vrsqrt.pop %v4732
      %v4741 = vrsqrt.pop %v4733
      %v4742 = vrsqrt.pop %v4734
      %v4743 = vrsqrt.pop %v4735
      %v4744 = vrsqrt.pop %v4736
      %v4745 = vrsqrt.pop %v4737
      %v4746 = vrsqrt.pop %v4738
      %v4747 = vmul.f32 %v4683, %v4739
      %v4748 = vmul.f32 %v4684, %v4740
      %v4749 = vmul.f32 %v4685, %v4741
      %v4750 = vmul.f32 %v4686, %v4742
      %v4751 = vmul.f32 %v4687, %v4743
      %v4752 = vmul.f32 %v4688, %v4744
      %v4753 = vmul.f32 %v4689, %v4745
      %v4754 = vmul.f32 %v4690, %v4746
      %v4755 = vlaneseq
      %v4756 = vshrl.u32 %v4755, 7
      %v4757 = vsub.s32 6, %v4756
      %v4758 = vrot.slane %v328, %v4757
      %v4759 = vmul.f32 %v4747, %v4758
      %v4760 = vmul.f32 %v4748, %v4758
      %v4761 = vmul.f32 %v4749, %v4758
      %v4762 = vmul.f32 %v4750, %v4758
      %v4763 = vmul.f32 %v4751, %v4758
      %v4764 = vmul.f32 %v4752, %v4758
      %v4765 = vmul.f32 %v4753, %v4758
      %v4766 = vmul.f32 %v4754, %v4758
      %v4767 = vlaneseq
      %v4768 = vshrl.u32 %v4767, 7
      %v4769 = vsub.s32 7, %v4768
      %v4770 = vrot.slane %v328, %v4769
      %v4771 = vadd.f32 %v4759, %v4770
      %v4772 = vadd.f32 %v4760, %v4770
      %v4773 = vadd.f32 %v4761, %v4770
      %v4774 = vadd.f32 %v4762, %v4770
      %v4775 = vadd.f32 %v4763, %v4770
      %v4776 = vadd.f32 %v4764, %v4770
      %v4777 = vadd.f32 %v4765, %v4770
      %v4778 = vadd.f32 %v4766, %v4770
      %4779 = vst.msk [vmem:[%s265] sm:$0xff] %vm349, %v4771
      %4780 = vst.msk [vmem:[%s265 + $0x8] sm:$0xff] %vm349, %v4772
      %4781 = vst.msk [vmem:[%s265 + $0x10] sm:$0xff] %vm349, %v4773
      %4782 = vst.msk [vmem:[%s265 + $0x18] sm:$0xff] %vm349, %v4774
      %4783 = vst.msk [vmem:[%s265 + $0x20] sm:$0xff] %vm349, %v4775
      %4784 = vst.msk [vmem:[%s265 + $0x28] sm:$0xff] %vm349, %v4776
      %4785 = vst.msk [vmem:[%s265 + $0x30] sm:$0xff] %vm349, %v4777
      %4786 = vst.msk [vmem:[%s265 + $0x38] sm:$0xff] %vm349, %v4778
      %s4787 = smul.u32 8, %s21
      %p4788 = scmp.lt.s32.totalorder %s4787, 7
      %s4789 = scalar_select %p4788, %s4787, 7
      %s4790 = smul.addr %s4789, 8
      %s4791 = scalar_lea.vmem %s6, %s4790
      // Predicated region
      $region49: #{tab_transformer_forward.1} parent=43 // pred_check
        %p4792 = pneg %p178
      $region50: #{tab_transformer_forward.1} parent=43 // pred_check_branch
        %4794 = sbr.rel (%p4792) target = $region52
      $region51: #{tab_transformer_forward.1} parent=43 // pred_region
        %s4795 = smul.u32 8, %s21
      $region52: #{tab_transformer_forward.1} parent=43 // pred_fallthru
        _
      // Predicated region
      $region53: #{tab_transformer_forward.1} parent=43 // pred_check
        %p4796 = pneg %p178
      $region54: #{tab_transformer_forward.1} parent=43 // pred_check_branch
        %4798 = sbr.rel (%p4796) target = $region56
      $region55: #{tab_transformer_forward.1} parent=43 // pred_region
        %s4799 = smul.u32 8, %s21
        %p4800 = scmp.lt.s32.totalorder %s4799, 7
        %s4801 = scalar_select %p4800, %s4799, 7
        %s4802 = smul.addr %s4801, 8
        %s4803 = scalar_lea.vmem %s6, %s4802
      $region56: #{tab_transformer_forward.1} parent=43 // pred_fallthru
        _
    $region44: #{tab_transformer_forward.1} parent=5 // pred_fallthru
      _
    %p4804 = scmp.le.s32.totalorder 2, %s12
    // Predicated region
    $region57: #{tab_transformer_forward.1} parent=5 // pred_check
      %p4805 = pneg %p4804
    $region58: #{tab_transformer_forward.1} parent=5 // pred_check_branch
      %4807 = sbr.rel (%p4805) target = $region60
    $region59: #{tab_transformer_forward.1} parent=5 // pred_region
      %s4808 = ssub.s32 %s12, 2
    $region60: #{tab_transformer_forward.1} parent=5 // pred_fallthru
      _
  $region6: #{tab_transformer_forward.1} parent=0 // loop_footer
    %s16 = sadd.s32 1, %s12
  $region7: #{tab_transformer_forward.1} parent=0 // loop_footer_branch
    %11 = sbr.rel target = $region3
  $region8: #{tab_transformer_forward.1} parent=0 // loop_exit
    _

</llo_original>
